<compile_context>
chip_gen: v7x
topology: tpu7x:2x2x1
jax: 0.10.0
libtpu: 0.0.40
codegen_flags: <defaults>
</compile_context>

<pallas_src>
import jax
import jax.numpy as jnp
from jax import lax
from jax.experimental import pallas as pl
from jax.experimental.pallas import tpu as pltpu


def _round_up(x: int, m: int) -> int:
    return ((x + m - 1) // m) * m


def _cdiv(a: int, b: int) -> int:
    return (a + b - 1) // b


def _balanced_tile(n: int, cap: int, gran: int, min_blocks: int = 1):
    """Choose (tile, num_blocks) with tile a multiple of `gran`, tile <= ~cap,
    num_blocks * tile >= n with minimal padding, num_blocks >= min_blocks when
    the problem is big enough to keep every block at least `gran` wide."""
    blocks = _cdiv(n, cap)
    if blocks < min_blocks and n >= min_blocks * gran:
        blocks = min_blocks
    tile = _round_up(_cdiv(n, blocks), gran)
    return tile, blocks


def _rbf_gram_kernel(params_ref, x1_ref, x2t_ref, sq1_ref, sq2_ref, out_ref):
    """Compute one (tm, tn) tile of the RBF Gram matrix.

    params_ref : SMEM (2,) f32 -- [output_scale^2, -0.5 / length_scale^2]
    x1_ref     : VMEM (tm, D)  f32
    x2t_ref    : VMEM (D, tn)  f32   (pre-transposed x_2; lane-dense RHS)
    sq1_ref    : VMEM (tm, 1)  f32   (precomputed ||x1_i||^2)
    sq2_ref    : VMEM (1, tn)  f32   (precomputed ||x2_j||^2)
    out_ref    : VMEM (tm, tn) f32
    """
    s2 = params_ref[0]          # output_scale^2
    neg_gamma = params_ref[1]   # -0.5 / length_scale^2

    # Cross term on the MXU. HIGHEST precision: K=D matmul is nowhere near the
    # bottleneck, and full-f32 passes protect small distances (Gram diagonal)
    # in the cancellation-prone expansion below.
    cross = jnp.dot(x1_ref[...], x2t_ref[...],
                    preferred_element_type=jnp.float32,
                    precision=lax.Precision.HIGHEST)              # (tm, tn)

    # ||a - b||^2 = ||a||^2 + ||b||^2 - 2 a.b
    dist2 = sq1_ref[...] + sq2_ref[...] - 2.0 * cross
    dist2 = jnp.maximum(dist2, 0.0)   # guard tiny negatives from cancellation

    out_ref[...] = s2 * jnp.exp(dist2 * neg_gamma)


def rbf_kernel_gram(x_1: jax.Array, x_2: jax.Array, parameters: jax.Array,
                    *, tm_cap: int = 512, tn_cap: int = 2048) -> jax.Array:
    """Gram matrix K(x_1, x_2) for the RBF kernel via a Pallas TPU kernel."""
    x_1 = jnp.asarray(x_1, dtype=jnp.float32)
    x_2 = jnp.asarray(x_2, dtype=jnp.float32)
    n1, d = x_1.shape
    n2, d2 = x_2.shape
    assert d == d2, "feature dims must match"

    # Derived scalars (computed once in the wrapper, prefetched into SMEM).
    output_scale = parameters[0].astype(jnp.float32)
    length_scale = parameters[1].astype(jnp.float32)
    derived = jnp.stack(
        [output_scale * output_scale,
         -0.5 / (length_scale * length_scale)]).astype(jnp.float32)

    # Balanced tiles: pick the block count first, then round the tile up to the
    # TPU (8, 128) granularity -> padding bounded to <8 rows / <128 cols/block.
    # v7x megacore: force >=2 row blocks when n1 is big enough (each >=256 rows)
    # so both TensorCores are fed; otherwise try to split along columns.
    min_blocks_i = 2 if n1 >= 512 else 1
    tm, grid_i = _balanced_tile(n1, tm_cap, 8, min_blocks_i)
    min_blocks_j = 2 if (grid_i == 1 and n2 >= 512) else 1
    tn, grid_j = _balanced_tile(n2, tn_cap, 128, min_blocks_j)

    n1p = grid_i * tm
    n2p = grid_j * tn

    # Zero-pad inputs to exact block multiples (output is NOT padded; Pallas
    # clips boundary output blocks, so no post-kernel slice copy is needed).
    x1p = x_1 if n1p == n1 else jnp.pad(x_1, ((0, n1p - n1), (0, 0)))
    x2p = x_2 if n2p == n2 else jnp.pad(x_2, ((0, n2p - n2), (0, 0)))

    # Wrapper-side precompute: transpose + squared norms (O(N*D), trivial).
    x2t = x2p.T                                                # (D, N2p)
    sq1 = jnp.sum(x1p * x1p, axis=-1, keepdims=True)           # (N1p, 1)
    sq2 = jnp.sum(x2p * x2p, axis=-1, keepdims=True).T         # (1, N2p)

    grid = (grid_i, grid_j)

    cost = pl.CostEstimate(
        flops=2 * n1p * n2p * d,
        transcendentals=n1p * n2p,
        bytes_accessed=4 * (n1p * d + grid_i * n2p * d + n1p + grid_i * n2p
                            + n1 * n2),
    )

    out = pl.pallas_call(
        _rbf_gram_kernel,
        out_shape=jax.ShapeDtypeStruct((n1, n2), jnp.float32),
        grid_spec=pltpu.PrefetchScalarGridSpec(
            num_scalar_prefetch=1,          # `derived` lands in SMEM
            grid=grid,
            # NOTE: keep this grid ordering (j innermost) and these index_maps:
            # x1/sq1 return (i, 0) so their DMA is skipped while j sweeps.
            in_specs=[
                pl.BlockSpec((tm, d), lambda i, j, p: (i, 0)),   # x1 tile
                pl.BlockSpec((d, tn), lambda i, j, p: (0, j)),   # x2^T tile
                pl.BlockSpec((tm, 1), lambda i, j, p: (i, 0)),   # ||x1||^2
                pl.BlockSpec((1, tn), lambda i, j, p: (0, j)),   # ||x2||^2
            ],
            out_specs=pl.BlockSpec((tm, tn), lambda i, j, p: (i, j)),
        ),
        compiler_params=pltpu.CompilerParams(
            dimension_semantics=("parallel", "parallel"),
            # ~9-10 MiB live at tm=512/tn=2048 (8 MiB double-buffered output
            # + ~1.5 MiB inputs). 32 MiB gives headroom on v5e (16 MiB default)
            # and stays within v7x's 64 MiB physical VMEM per TC.
            vmem_limit_bytes=32 * 1024 * 1024,
        ),
        cost_estimate=cost,
    )(derived, x1p, x2t, sq1, sq2)

    return out


class RBFKernel:
    """Concrete stand-in for the abstract `Kernel` nn.Module (forward / set_parameters)."""

    def __init__(self) -> None:
        self.num_hyperparameters = 2
        # Deterministic parameter init (set_parameters equivalent).
        self._parameters = jnp.array([1.5, 0.8], dtype=jnp.float32)  # [output_scale, length_scale]

    def set_parameters(self, parameters: jax.Array) -> None:
        self._parameters = jnp.asarray(parameters, dtype=jnp.float32)

    def get_named_parameters(self) -> dict:
        return {"output_scale": self._parameters[0], "length_scale": self._parameters[1]}

    def forward(self, x_1: jax.Array, x_2: jax.Array) -> jax.Array:
        return rbf_kernel_gram(x_1, x_2, self._parameters)

    __call__ = forward


if __name__ == "__main__":
    key = jax.random.PRNGKey(0)
    k1, k2 = jax.random.split(key)

    # Non-multiple-of-tile shapes to exercise balanced tiles + clipped output.
    N1, N2, D = 300, 200, 8
    x_1 = jax.random.normal(k1, (N1, D), dtype=jnp.float32)
    x_2 = jax.random.normal(k2, (N2, D), dtype=jnp.float32)

    kernel = RBFKernel()
    gram = kernel(x_1, x_2)
    gram = jax.block_until_ready(gram)

    # Reference check against plain JAX.
    s, l = 1.5, 0.8
    d2 = jnp.sum((x_1[:, None, :] - x_2[None, :, :]) ** 2, axis=-1)
    ref = (s ** 2) * jnp.exp(-d2 / (2.0 * l ** 2))
    assert gram.shape == (N1, N2) and gram.dtype == jnp.float32
    assert jnp.allclose(gram, ref, atol=1e-5, rtol=1e-5)

    # Second check: shapes large enough to trigger the >=2-block (megacore) path.
    N1b, N2b = 700, 600
    xb1 = jax.random.normal(k1, (N1b, D), dtype=jnp.float32)
    xb2 = jax.random.normal(k2, (N2b, D), dtype=jnp.float32)
    gram_b = jax.block_until_ready(kernel(xb1, xb2))
    d2b = jnp.sum((xb1[:, None, :] - xb2[None, :, :]) ** 2, axis=-1)
    refb = (s ** 2) * jnp.exp(-d2b / (2.0 * l ** 2))
    assert gram_b.shape == (N1b, N2b)
    assert jnp.allclose(gram_b, refb, atol=1e-5, rtol=1e-5)

    print("KERNEL_OK")
</pallas_src>

<mosaic_0001>
module attributes {stable_mosaic.version = 11 : i64} {
  func.func @_rbf_gram_kernel(%arg0: i32, %arg1: i32, %arg2: memref<2xf32, #tpu.memory_space<smem>>, %arg3: memref<304x8xf32, #tpu.memory_space<vmem>>, %arg4: memref<8x256xf32, #tpu.memory_space<vmem>>, %arg5: memref<304x1xf32, #tpu.memory_space<vmem>>, %arg6: memref<1x256xf32, #tpu.memory_space<vmem>>, %arg7: memref<304x256xf32, #tpu.memory_space<vmem>>) attributes {dimension_semantics = [#tpu.dimension_semantics<parallel>, #tpu.dimension_semantics<parallel>], iteration_bounds = array<i64: 1, 1>, scalar_prefetch = 1 : i64, scratch_operands = 0 : i64, tpu.core_type = #tpu.core_type<tc>, window_params = [{transform_indices = @transform_0, window_bounds = array<i64: 304, 8>}, {transform_indices = @transform_1, window_bounds = array<i64: 8, 256>}, {transform_indices = @transform_2, window_bounds = array<i64: 304, 1>}, {transform_indices = @transform_3, window_bounds = array<i64: 1, 256>}, {transform_indices = @transform_4, window_bounds = array<i64: 304, 256>}]} {
    %c0 = arith.constant 0 : index
    %0 = memref.load %arg2[%c0] : memref<2xf32, #tpu.memory_space<smem>>
    %c1 = arith.constant 1 : index
    %1 = memref.load %arg2[%c1] : memref<2xf32, #tpu.memory_space<smem>>
    %c0_0 = arith.constant 0 : index
    %c0_1 = arith.constant 0 : index
    %2 = vector.load %arg3[%c0_0, %c0_1] : memref<304x8xf32, #tpu.memory_space<vmem>>, vector<304x8xf32>
    %c0_2 = arith.constant 0 : index
    %c0_3 = arith.constant 0 : index
    %3 = vector.load %arg4[%c0_2, %c0_3] : memref<8x256xf32, #tpu.memory_space<vmem>>, vector<8x256xf32>
    %cst = arith.constant dense<0.000000e+00> : vector<304x256xf32>
    %4 = tpu.matmul %2, %3, %cst {dimension_numbers = #tpu.dot_dimension_numbers<[1], [0], [0], [1], [0, 0, 1, 1], [], []>, precision = #tpu.contract_precision<fp32>} : vector<304x8xf32>, vector<8x256xf32>, vector<304x256xf32> -> vector<304x256xf32>
    %c0_4 = arith.constant 0 : index
    %c0_5 = arith.constant 0 : index
    %5 = vector.load %arg5[%c0_4, %c0_5] : memref<304x1xf32, #tpu.memory_space<vmem>>, vector<304x1xf32>
    %c0_6 = arith.constant 0 : index
    %c0_7 = arith.constant 0 : index
    %6 = vector.load %arg6[%c0_6, %c0_7] : memref<1x256xf32, #tpu.memory_space<vmem>>, vector<1x256xf32>
    %7 = vector.broadcast %5 : vector<304x1xf32> to vector<304x256xf32>
    %8 = vector.broadcast %6 : vector<1x256xf32> to vector<304x256xf32>
    %9 = arith.addf %7, %8 : vector<304x256xf32>
    %cst_8 = arith.constant 2.000000e+00 : f32
    %10 = vector.broadcast %cst_8 : f32 to vector<304x256xf32>
    %11 = arith.mulf %10, %4 : vector<304x256xf32>
    %12 = arith.subf %9, %11 : vector<304x256xf32>
    %cst_9 = arith.constant 0.000000e+00 : f32
    %13 = vector.broadcast %cst_9 : f32 to vector<304x256xf32>
    %14 = arith.maximumf %12, %13 : vector<304x256xf32>
    %15 = vector.broadcast %1 : f32 to vector<304x256xf32>
    %16 = arith.mulf %14, %15 : vector<304x256xf32>
    %17 = math.exp %16 : vector<304x256xf32>
    %18 = vector.broadcast %0 : f32 to vector<304x256xf32>
    %19 = arith.mulf %18, %17 : vector<304x256xf32>
    %c0_10 = arith.constant 0 : index
    %c0_11 = arith.constant 0 : index
    %20 = vector.load %arg7[%c0_10, %c0_11] : memref<304x256xf32, #tpu.memory_space<vmem>>, vector<304x256xf32>
    tpu.vector_store %arg7[%c0_10, %c0_11], %19 {strides = array<i32>} : memref<304x256xf32, #tpu.memory_space<vmem>>, vector<304x256xf32>,
    return
  }
  func.func @transform_0(%arg0: i32, %arg1: i32, %arg2: memref<2xf32, #tpu.memory_space<smem>>) -> (i32, i32) {
    %c0_i32 = arith.constant 0 : i32
    %c0_i32_0 = arith.constant 0 : i32
    return %arg0, %c0_i32 : i32, i32
  }
  func.func @transform_1(%arg0: i32, %arg1: i32, %arg2: memref<2xf32, #tpu.memory_space<smem>>) -> (i32, i32) {
    %c0_i32 = arith.constant 0 : i32
    %c0_i32_0 = arith.constant 0 : i32
    return %c0_i32, %arg1 : i32, i32
  }
  func.func @transform_2(%arg0: i32, %arg1: i32, %arg2: memref<2xf32, #tpu.memory_space<smem>>) -> (i32, i32) {
    %c0_i32 = arith.constant 0 : i32
    %c0_i32_0 = arith.constant 0 : i32
    return %arg0, %c0_i32 : i32, i32
  }
  func.func @transform_3(%arg0: i32, %arg1: i32, %arg2: memref<2xf32, #tpu.memory_space<smem>>) -> (i32, i32) {
    %c0_i32 = arith.constant 0 : i32
    %c0_i32_0 = arith.constant 0 : i32
    return %c0_i32, %arg1 : i32, i32
  }
  func.func @transform_4(%arg0: i32, %arg1: i32, %arg2: memref<2xf32, #tpu.memory_space<smem>>) -> (i32, i32) {
    %c0_i32 = arith.constant 0 : i32
    return %arg0, %arg1 : i32, i32
  }
}

</mosaic_0001>

<llo_original>
// kernel: tpu_custom_call.1
$region0: #{tpu_custom_call.1}
  #allocation0 [shape = 'u32[]', space=smem, size = 0x4, offset = 0x4, fixed_abs, tag = 'smem constant byte address 0x4 - core index']
  #allocation1 [shape = 'u32[144,128]{1,0:T(1,128)}', space=vmem, size = 0x12000, scoped, tag = 'internal scratch']
  #allocation2 [shape = 's32[1]{0}', space=sflag, size = 0x4, scoped, tag = 'scoped memory for tpu_custom_call.1']
  #allocation3 [shape = 'u8[512]{0}', space=smem, size = 0x200, scoped, tag = 'prefetched SMEM operand 0']
  %s0 = inlined_call_operand.vmem [shape: f32[2], index: 0, kind: input, shape index: {}]
  %s1 = inlined_call_operand.vmem [shape: f32[304,8], index: 1, kind: input, shape index: {}]
  %s2 = inlined_call_operand.vmem [shape: f32[8,256], index: 2, kind: input, shape index: {}]
  %s3 = inlined_call_operand.vmem [shape: f32[304,1], index: 3, kind: input, shape index: {}]
  %s4 = inlined_call_operand.vmem [shape: f32[1,256], index: 4, kind: input, shape index: {}]
  %s5 = inlined_call_operand.vmem [shape: f32[300,200], index: 5, kind: output, shape index: {}]
  %s6 = sld [smem:[#allocation0]]
  $region26: #{tpu_custom_call.1} parent=0
    _
  %s8 = ssub.s32 1, %s6
  %s9 = scalar_select 0, %s8, %s6
  %s10 = sshll.u32 %s0, 4
  %s11 = int_to_ptr.vmem [resolvable:$true] %s10
  %13 = dma.vmem_to_smem %s11, 16, [#allocation3], [#allocation2]
  %14 = dma.done [#allocation2], 16
  %15 = sfence
  // Predicated region
  $region2: #{tpu_custom_call.1} parent=0 // pred_check
    _
  $region3: #{tpu_custom_call.1} parent=0 // pred_check_branch
    %17 = sbr.rel (0) target = $region5
  $region4: #{tpu_custom_call.1} parent=0 // pred_region
    _
  $region5: #{tpu_custom_call.1} parent=0 // pred_fallthru
    _
  // Predicated region
  $region6: #{tpu_custom_call.1} parent=0 // pred_check
    _
  $region7: #{tpu_custom_call.1} parent=0 // pred_check_branch
    %19 = sbr.rel (0) target = $region9
  $region8: #{tpu_custom_call.1} parent=0 // pred_region
    _
  $region9: #{tpu_custom_call.1} parent=0 // pred_fallthru
    _
  // Predicated region
  $region10: #{tpu_custom_call.1} parent=0 // pred_check
    _
  $region11: #{tpu_custom_call.1} parent=0 // pred_check_branch
    %21 = sbr.rel (0) target = $region13
  $region12: #{tpu_custom_call.1} parent=0 // pred_region
    _
  $region13: #{tpu_custom_call.1} parent=0 // pred_fallthru
    _
  // Predicated region
  $region14: #{tpu_custom_call.1} parent=0 // pred_check
    _
  $region15: #{tpu_custom_call.1} parent=0 // pred_check_branch
    %23 = sbr.rel (0) target = $region17
  $region16: #{tpu_custom_call.1} parent=0 // pred_region
    _
  $region17: #{tpu_custom_call.1} parent=0 // pred_fallthru
    _
  %s24 = sld [smem:[#allocation3]]
  %s25 = sld [smem:[#allocation3 + $0x1]]
  %v26 = vld [vmem:[%s1] sm:$0xff]
  %v27 = vld [vmem:[%s1 + $0x8] sm:$0xff]
  %v28 = vld [vmem:[%s1 + $0x10] sm:$0xff]
  %v29 = vld [vmem:[%s1 + $0x18] sm:$0xff]
  %v30 = vld [vmem:[%s1 + $0x20] sm:$0xff]
  %v31 = vld [vmem:[%s1 + $0x28] sm:$0xff]
  %v32 = vld [vmem:[%s1 + $0x30] sm:$0xff]
  %v33 = vld [vmem:[%s1 + $0x38] sm:$0xff]
  %v34 = vld [vmem:[%s1 + $0x40] sm:$0xff]
  %v35 = vld [vmem:[%s1 + $0x48] sm:$0xff]
  %v36 = vld [vmem:[%s1 + $0x50] sm:$0xff]
  %v37 = vld [vmem:[%s1 + $0x58] sm:$0xff]
  %v38 = vld [vmem:[%s1 + $0x60] sm:$0xff]
  %v39 = vld [vmem:[%s1 + $0x68] sm:$0xff]
  %v40 = vld [vmem:[%s1 + $0x70] sm:$0xff]
  %v41 = vld [vmem:[%s1 + $0x78] sm:$0xff]
  %v42 = vld [vmem:[%s1 + $0x80] sm:$0xff]
  %v43 = vld [vmem:[%s1 + $0x88] sm:$0xff]
  %v44 = vld [vmem:[%s1 + $0x90] sm:$0xff]
  %v45 = vld [vmem:[%s1 + $0x98] sm:$0xff]
  %v46 = vld [vmem:[%s1 + $0xa0] sm:$0xff]
  %v47 = vld [vmem:[%s1 + $0xa8] sm:$0xff]
  %v48 = vld [vmem:[%s1 + $0xb0] sm:$0xff]
  %v49 = vld [vmem:[%s1 + $0xb8] sm:$0xff]
  %v50 = vld [vmem:[%s1 + $0xc0] sm:$0xff]
  %v51 = vld [vmem:[%s1 + $0xc8] sm:$0xff]
  %v52 = vld [vmem:[%s1 + $0xd0] sm:$0xff]
  %v53 = vld [vmem:[%s1 + $0xd8] sm:$0xff]
  %v54 = vld [vmem:[%s1 + $0xe0] sm:$0xff]
  %v55 = vld [vmem:[%s1 + $0xe8] sm:$0xff]
  %v56 = vld [vmem:[%s1 + $0xf0] sm:$0xff]
  %v57 = vld [vmem:[%s1 + $0xf8] sm:$0xff]
  %v58 = vld [vmem:[%s1 + $0x100] sm:$0xff]
  %v59 = vld [vmem:[%s1 + $0x108] sm:$0xff]
  %v60 = vld [vmem:[%s1 + $0x110] sm:$0xff]
  %v61 = vld [vmem:[%s1 + $0x118] sm:$0xff]
  %v62 = vld [vmem:[%s1 + $0x120] sm:$0xff]
  %v63 = vld [vmem:[%s1 + $0x128] sm:$0xff]
  %v64 = vld [vmem:[%s2] sm:$0xff]
  %v65 = vld [vmem:[%s2 + $0x8] sm:$0xff]
  %vm66 = vcmask 64512
  %v68 = vsel %vm66, %v26, 0
  %v71 = vsel %vm66, %v27, 0
  %v74 = vsel %vm66, %v28, 0
  %v77 = vsel %vm66, %v29, 0
  %v80 = vsel %vm66, %v30, 0
  %v83 = vsel %vm66, %v31, 0
  %v86 = vsel %vm66, %v32, 0
  %v89 = vsel %vm66, %v33, 0
  %v92 = vsel %vm66, %v34, 0
  %v95 = vsel %vm66, %v35, 0
  %v98 = vsel %vm66, %v36, 0
  %v101 = vsel %vm66, %v37, 0
  %v104 = vsel %vm66, %v38, 0
  %v107 = vsel %vm66, %v39, 0
  %v110 = vsel %vm66, %v40, 0
  %v113 = vsel %vm66, %v41, 0
  %v116 = vsel %vm66, %v42, 0
  %v119 = vsel %vm66, %v43, 0
  %v122 = vsel %vm66, %v44, 0
  %v125 = vsel %vm66, %v45, 0
  %v128 = vsel %vm66, %v46, 0
  %v131 = vsel %vm66, %v47, 0
  %v134 = vsel %vm66, %v48, 0
  %v137 = vsel %vm66, %v49, 0
  %v140 = vsel %vm66, %v50, 0
  %v143 = vsel %vm66, %v51, 0
  %v146 = vsel %vm66, %v52, 0
  %v149 = vsel %vm66, %v53, 0
  %v152 = vsel %vm66, %v54, 0
  %v155 = vsel %vm66, %v55, 0
  %v158 = vsel %vm66, %v56, 0
  %v161 = vsel %vm66, %v57, 0
  %v164 = vsel %vm66, %v58, 0
  %v167 = vsel %vm66, %v59, 0
  %v170 = vsel %vm66, %v60, 0
  %v173 = vsel %vm66, %v61, 0
  %v176 = vsel %vm66, %v62, 0
  %v179 = vsel %vm66, %v63, 0
  %v181 = vand.u32 %v65, 4294901760
  %182 = vmatprep.subr.mxu0 %v181
  %v183 = vand.u32 %v64, 4294901760
  %184 = vmatpush1.msra.mxu0 %v183
  %185 = vmatprep.subr.mxu0 0.0
  %186 = vmatpush1.msra.mxu0 0.0
  %187 = vmatprep.subr.mxu0 0.0
  %188 = vmatpush1.msra.mxu0 0.0
  %189 = vmatprep.subr.mxu0 0.0
  %190 = vmatpush1.msra.mxu0 0.0
  %191 = vmatprep.subr.mxu0 0.0
  %192 = vmatpush1.msra.mxu0 0.0
  %193 = vmatprep.subr.mxu0 0.0
  %194 = vmatpush1.msra.mxu0 0.0
  %195 = vmatprep.subr.mxu0 0.0
  %196 = vmatpush1.msra.mxu0 0.0
  %197 = vmatprep.subr.mxu0 0.0
  %198 = vmatpush1.msra.mxu0 0.0
  %199 = vmatprep.subr.mxu0 0.0
  %200 = vmatpush1.msra.mxu0 0.0
  %201 = vmatprep.subr.mxu0 0.0
  %202 = vmatpush1.msra.mxu0 0.0
  %203 = vmatprep.subr.mxu0 0.0
  %204 = vmatpush1.msra.mxu0 0.0
  %205 = vmatprep.subr.mxu0 0.0
  %206 = vmatpush1.msra.mxu0 0.0
  %207 = vmatprep.subr.mxu0 0.0
  %208 = vmatpush1.msra.mxu0 0.0
  %209 = vmatprep.subr.mxu0 0.0
  %210 = vmatpush1.msra.mxu0 0.0
  %211 = vmatprep.subr.mxu0 0.0
  %212 = vmatpush1.msra.mxu0 0.0
  %213 = vmatprep.subr.mxu0 0.0
  %214 = vmatpush1.msra.mxu0 0.0
  %215 = vmatprep.subr.mxu0 0.0
  %216 = vmatpush1.msra.mxu0 0.0
  %217 = vmatprep.subr.mxu0 0.0
  %218 = vmatpush1.msra.mxu0 0.0
  %219 = vmatprep.subr.mxu0 0.0
  %220 = vmatpush1.msra.mxu0 0.0
  %221 = vmatprep.subr.mxu0 0.0
  %222 = vmatpush1.msra.mxu0 0.0
  %223 = vmatprep.subr.mxu0 0.0
  %224 = vmatpush1.msra.mxu0 0.0
  %225 = vmatprep.subr.mxu0 0.0
  %226 = vmatpush1.msra.mxu0 0.0
  %227 = vmatprep.subr.mxu0 0.0
  %228 = vmatpush1.msra.mxu0 0.0
  %229 = vmatprep.subr.mxu0 0.0
  %230 = vmatpush1.msra.mxu0 0.0
  %231 = vmatprep.subr.mxu0 0.0
  %232 = vmatpush1.msra.mxu0 0.0
  %233 = vmatprep.subr.mxu0 0.0
  %234 = vmatpush1.msra.mxu0 0.0
  %235 = vmatprep.subr.mxu0 0.0
  %236 = vmatpush1.msra.mxu0 0.0
  %237 = vmatprep.subr.mxu0 0.0
  %238 = vmatpush1.msra.mxu0 0.0
  %239 = vmatprep.subr.mxu0 0.0
  %240 = vmatpush1.msra.mxu0 0.0
  %241 = vmatprep.subr.mxu0 0.0
  %242 = vmatpush1.msra.mxu0 0.0
  %243 = vmatprep.subr.mxu0 0.0
  %244 = vmatpush1.msra.mxu0 0.0
  %245 = vmatprep.subr.mxu0 0.0
  %246 = vmatpush1.msra.mxu0 0.0
  %247 = vmatprep.mubr.f32.mxu0 0.0
  %v248 = vand.u32 %v68, 4294901760
  %v249 = vsub.f32 %v68, %v248
  %v250 = vand.u32 %v249, 4294901760
  %v251 = vsub.f32 %v249, %v250
  %v252 = vand.u32 %v251, 4294901760
  %253 = vmatmul.mubr.f32.gmra.mrb[0].mxu0 %v252
  %v254 = vpop.f32.mrb[0].mxu0
  %v255 = vadd.f32 0.0, %v254
  %v256 = vpop.f32.mrb[0].mxu0
  %v257 = vadd.f32 0.0, %v256
  %258 = vmatprep.mubr.f32.mxu0 0.0
  %v259 = vand.u32 %v71, 4294901760
  %v260 = vsub.f32 %v71, %v259
  %v261 = vand.u32 %v260, 4294901760
  %v262 = vsub.f32 %v260, %v261
  %v263 = vand.u32 %v262, 4294901760
  %264 = vmatmul.mubr.f32.gmra.mrb[0].mxu0 %v263
  %v265 = vpop.f32.mrb[0].mxu0
  %v266 = vadd.f32 0.0, %v265
  %v267 = vpop.f32.mrb[0].mxu0
  %v268 = vadd.f32 0.0, %v267
  %269 = vmatprep.mubr.f32.mxu0 0.0
  %v270 = vand.u32 %v74, 4294901760
  %v271 = vsub.f32 %v74, %v270
  %v272 = vand.u32 %v271, 4294901760
  %v273 = vsub.f32 %v271, %v272
  %v274 = vand.u32 %v273, 4294901760
  %275 = vmatmul.mubr.f32.gmra.mrb[0].mxu0 %v274
  %v276 = vpop.f32.mrb[0].mxu0
  %v277 = vadd.f32 0.0, %v276
  %v278 = vpop.f32.mrb[0].mxu0
  %v279 = vadd.f32 0.0, %v278
  %280 = vmatprep.mubr.f32.mxu0 0.0
  %v281 = vand.u32 %v77, 4294901760
  %v282 = vsub.f32 %v77, %v281
  %v283 = vand.u32 %v282, 4294901760
  %v284 = vsub.f32 %v282, %v283
  %v285 = vand.u32 %v284, 4294901760
  %286 = vmatmul.mubr.f32.gmra.mrb[0].mxu0 %v285
  %v287 = vpop.f32.mrb[0].mxu0
  %v288 = vadd.f32 0.0, %v287
  %v289 = vpop.f32.mrb[0].mxu0
  %v290 = vadd.f32 0.0, %v289
  %291 = vmatprep.mubr.f32.mxu0 0.0
  %v292 = vand.u32 %v80, 4294901760
  %v293 = vsub.f32 %v80, %v292
  %v294 = vand.u32 %v293, 4294901760
  %v295 = vsub.f32 %v293, %v294
  %v296 = vand.u32 %v295, 4294901760
  %297 = vmatmul.mubr.f32.gmra.mrb[0].mxu0 %v296
  %v298 = vpop.f32.mrb[0].mxu0
  %v299 = vadd.f32 0.0, %v298
  %v300 = vpop.f32.mrb[0].mxu0
  %v301 = vadd.f32 0.0, %v300
  %302 = vmatprep.mubr.f32.mxu0 0.0
  %v303 = vand.u32 %v83, 4294901760
  %v304 = vsub.f32 %v83, %v303
  %v305 = vand.u32 %v304, 4294901760
  %v306 = vsub.f32 %v304, %v305
  %v307 = vand.u32 %v306, 4294901760
  %308 = vmatmul.mubr.f32.gmra.mrb[0].mxu0 %v307
  %v309 = vpop.f32.mrb[0].mxu0
  %v310 = vadd.f32 0.0, %v309
  %v311 = vpop.f32.mrb[0].mxu0
  %v312 = vadd.f32 0.0, %v311
  %313 = vmatprep.mubr.f32.mxu0 0.0
  %v314 = vand.u32 %v86, 4294901760
  %v315 = vsub.f32 %v86, %v314
  %v316 = vand.u32 %v315, 4294901760
  %v317 = vsub.f32 %v315, %v316
  %v318 = vand.u32 %v317, 4294901760
  %319 = vmatmul.mubr.f32.gmra.mrb[0].mxu0 %v318
  %v320 = vpop.f32.mrb[0].mxu0
  %v321 = vadd.f32 0.0, %v320
  %v322 = vpop.f32.mrb[0].mxu0
  %v323 = vadd.f32 0.0, %v322
  %324 = vmatprep.mubr.f32.mxu0 0.0
  %v325 = vand.u32 %v89, 4294901760
  %v326 = vsub.f32 %v89, %v325
  %v327 = vand.u32 %v326, 4294901760
  %v328 = vsub.f32 %v326, %v327
  %v329 = vand.u32 %v328, 4294901760
  %330 = vmatmul.mubr.f32.gmra.mrb[0].mxu0 %v329
  %v331 = vpop.f32.mrb[0].mxu0
  %v332 = vadd.f32 0.0, %v331
  %v333 = vpop.f32.mrb[0].mxu0
  %v334 = vadd.f32 0.0, %v333
  %335 = vmatprep.mubr.f32.mxu0 0.0
  %v336 = vand.u32 %v92, 4294901760
  %v337 = vsub.f32 %v92, %v336
  %v338 = vand.u32 %v337, 4294901760
  %v339 = vsub.f32 %v337, %v338
  %v340 = vand.u32 %v339, 4294901760
  %341 = vmatmul.mubr.f32.gmra.mrb[0].mxu0 %v340
  %v342 = vpop.f32.mrb[0].mxu0
  %v343 = vadd.f32 0.0, %v342
  %v344 = vpop.f32.mrb[0].mxu0
  %v345 = vadd.f32 0.0, %v344
  %346 = vmatprep.mubr.f32.mxu0 0.0
  %v347 = vand.u32 %v95, 4294901760
  %v348 = vsub.f32 %v95, %v347
  %v349 = vand.u32 %v348, 4294901760
  %v350 = vsub.f32 %v348, %v349
  %v351 = vand.u32 %v350, 4294901760
  %352 = vmatmul.mubr.f32.gmra.mrb[0].mxu0 %v351
  %v353 = vpop.f32.mrb[0].mxu0
  %v354 = vadd.f32 0.0, %v353
  %v355 = vpop.f32.mrb[0].mxu0
  %v356 = vadd.f32 0.0, %v355
  %357 = vmatprep.mubr.f32.mxu0 0.0
  %v358 = vand.u32 %v98, 4294901760
  %v359 = vsub.f32 %v98, %v358
  %v360 = vand.u32 %v359, 4294901760
  %v361 = vsub.f32 %v359, %v360
  %v362 = vand.u32 %v361, 4294901760
  %363 = vmatmul.mubr.f32.gmra.mrb[0].mxu0 %v362
  %v364 = vpop.f32.mrb[0].mxu0
  %v365 = vadd.f32 0.0, %v364
  %v366 = vpop.f32.mrb[0].mxu0
  %v367 = vadd.f32 0.0, %v366
  %368 = vmatprep.mubr.f32.mxu0 0.0
  %v369 = vand.u32 %v101, 4294901760
  %v370 = vsub.f32 %v101, %v369
  %v371 = vand.u32 %v370, 4294901760
  %v372 = vsub.f32 %v370, %v371
  %v373 = vand.u32 %v372, 4294901760
  %374 = vmatmul.mubr.f32.gmra.mrb[0].mxu0 %v373
  %v375 = vpop.f32.mrb[0].mxu0
  %v376 = vadd.f32 0.0, %v375
  %v377 = vpop.f32.mrb[0].mxu0
  %v378 = vadd.f32 0.0, %v377
  %379 = vmatprep.mubr.f32.mxu0 0.0
  %v380 = vand.u32 %v104, 4294901760
  %v381 = vsub.f32 %v104, %v380
  %v382 = vand.u32 %v381, 4294901760
  %v383 = vsub.f32 %v381, %v382
  %v384 = vand.u32 %v383, 4294901760
  %385 = vmatmul.mubr.f32.gmra.mrb[0].mxu0 %v384
  %v386 = vpop.f32.mrb[0].mxu0
  %v387 = vadd.f32 0.0, %v386
  %v388 = vpop.f32.mrb[0].mxu0
  %v389 = vadd.f32 0.0, %v388
  %390 = vmatprep.mubr.f32.mxu0 0.0
  %v391 = vand.u32 %v107, 4294901760
  %v392 = vsub.f32 %v107, %v391
  %v393 = vand.u32 %v392, 4294901760
  %v394 = vsub.f32 %v392, %v393
  %v395 = vand.u32 %v394, 4294901760
  %396 = vmatmul.mubr.f32.gmra.mrb[0].mxu0 %v395
  %v397 = vpop.f32.mrb[0].mxu0
  %v398 = vadd.f32 0.0, %v397
  %v399 = vpop.f32.mrb[0].mxu0
  %v400 = vadd.f32 0.0, %v399
  %401 = vmatprep.mubr.f32.mxu0 0.0
  %v402 = vand.u32 %v110, 4294901760
  %v403 = vsub.f32 %v110, %v402
  %v404 = vand.u32 %v403, 4294901760
  %v405 = vsub.f32 %v403, %v404
  %v406 = vand.u32 %v405, 4294901760
  %407 = vmatmul.mubr.f32.gmra.mrb[0].mxu0 %v406
  %v408 = vpop.f32.mrb[0].mxu0
  %v409 = vadd.f32 0.0, %v408
  %v410 = vpop.f32.mrb[0].mxu0
  %v411 = vadd.f32 0.0, %v410
  %412 = vmatprep.mubr.f32.mxu0 0.0
  %v413 = vand.u32 %v113, 4294901760
  %v414 = vsub.f32 %v113, %v413
  %v415 = vand.u32 %v414, 4294901760
  %v416 = vsub.f32 %v414, %v415
  %v417 = vand.u32 %v416, 4294901760
  %418 = vmatmul.mubr.f32.gmra.mrb[0].mxu0 %v417
  %v419 = vpop.f32.mrb[0].mxu0
  %v420 = vadd.f32 0.0, %v419
  %v421 = vpop.f32.mrb[0].mxu0
  %v422 = vadd.f32 0.0, %v421
  %423 = vmatprep.mubr.f32.mxu0 0.0
  %v424 = vand.u32 %v116, 4294901760
  %v425 = vsub.f32 %v116, %v424
  %v426 = vand.u32 %v425, 4294901760
  %v427 = vsub.f32 %v425, %v426
  %v428 = vand.u32 %v427, 4294901760
  %429 = vmatmul.mubr.f32.gmra.mrb[0].mxu0 %v428
  %v430 = vpop.f32.mrb[0].mxu0
  %v431 = vadd.f32 0.0, %v430
  %v432 = vpop.f32.mrb[0].mxu0
  %v433 = vadd.f32 0.0, %v432
  %434 = vmatprep.mubr.f32.mxu0 0.0
  %v435 = vand.u32 %v119, 4294901760
  %v436 = vsub.f32 %v119, %v435
  %v437 = vand.u32 %v436, 4294901760
  %v438 = vsub.f32 %v436, %v437
  %v439 = vand.u32 %v438, 4294901760
  %440 = vmatmul.mubr.f32.gmra.mrb[0].mxu0 %v439
  %v441 = vpop.f32.mrb[0].mxu0
  %v442 = vadd.f32 0.0, %v441
  %v443 = vpop.f32.mrb[0].mxu0
  %v444 = vadd.f32 0.0, %v443
  %445 = vmatprep.mubr.f32.mxu0 0.0
  %v446 = vand.u32 %v122, 4294901760
  %v447 = vsub.f32 %v122, %v446
  %v448 = vand.u32 %v447, 4294901760
  %v449 = vsub.f32 %v447, %v448
  %v450 = vand.u32 %v449, 4294901760
  %451 = vmatmul.mubr.f32.gmra.mrb[0].mxu0 %v450
  %v452 = vpop.f32.mrb[0].mxu0
  %v453 = vadd.f32 0.0, %v452
  %v454 = vpop.f32.mrb[0].mxu0
  %v455 = vadd.f32 0.0, %v454
  %456 = vmatprep.mubr.f32.mxu0 0.0
  %v457 = vand.u32 %v125, 4294901760
  %v458 = vsub.f32 %v125, %v457
  %v459 = vand.u32 %v458, 4294901760
  %v460 = vsub.f32 %v458, %v459
  %v461 = vand.u32 %v460, 4294901760
  %462 = vmatmul.mubr.f32.gmra.mrb[0].mxu0 %v461
  %v463 = vpop.f32.mrb[0].mxu0
  %v464 = vadd.f32 0.0, %v463
  %v465 = vpop.f32.mrb[0].mxu0
  %v466 = vadd.f32 0.0, %v465
  %467 = vmatprep.mubr.f32.mxu0 0.0
  %v468 = vand.u32 %v128, 4294901760
  %v469 = vsub.f32 %v128, %v468
  %v470 = vand.u32 %v469, 4294901760
  %v471 = vsub.f32 %v469, %v470
  %v472 = vand.u32 %v471, 4294901760
  %473 = vmatmul.mubr.f32.gmra.mrb[0].mxu0 %v472
  %v474 = vpop.f32.mrb[0].mxu0
  %v475 = vadd.f32 0.0, %v474
  %v476 = vpop.f32.mrb[0].mxu0
  %v477 = vadd.f32 0.0, %v476
  %478 = vmatprep.mubr.f32.mxu0 0.0
  %v479 = vand.u32 %v131, 4294901760
  %v480 = vsub.f32 %v131, %v479
  %v481 = vand.u32 %v480, 4294901760
  %v482 = vsub.f32 %v480, %v481
  %v483 = vand.u32 %v482, 4294901760
  %484 = vmatmul.mubr.f32.gmra.mrb[0].mxu0 %v483
  %v485 = vpop.f32.mrb[0].mxu0
  %v486 = vadd.f32 0.0, %v485
  %v487 = vpop.f32.mrb[0].mxu0
  %v488 = vadd.f32 0.0, %v487
  %489 = vmatprep.mubr.f32.mxu0 0.0
  %v490 = vand.u32 %v134, 4294901760
  %v491 = vsub.f32 %v134, %v490
  %v492 = vand.u32 %v491, 4294901760
  %v493 = vsub.f32 %v491, %v492
  %v494 = vand.u32 %v493, 4294901760
  %495 = vmatmul.mubr.f32.gmra.mrb[0].mxu0 %v494
  %v496 = vpop.f32.mrb[0].mxu0
  %v497 = vadd.f32 0.0, %v496
  %v498 = vpop.f32.mrb[0].mxu0
  %v499 = vadd.f32 0.0, %v498
  %500 = vmatprep.mubr.f32.mxu0 0.0
  %v501 = vand.u32 %v137, 4294901760
  %v502 = vsub.f32 %v137, %v501
  %v503 = vand.u32 %v502, 4294901760
  %v504 = vsub.f32 %v502, %v503
  %v505 = vand.u32 %v504, 4294901760
  %506 = vmatmul.mubr.f32.gmra.mrb[0].mxu0 %v505
  %v507 = vpop.f32.mrb[0].mxu0
  %v508 = vadd.f32 0.0, %v507
  %v509 = vpop.f32.mrb[0].mxu0
  %v510 = vadd.f32 0.0, %v509
  %511 = vmatprep.mubr.f32.mxu0 0.0
  %v512 = vand.u32 %v140, 4294901760
  %v513 = vsub.f32 %v140, %v512
  %v514 = vand.u32 %v513, 4294901760
  %v515 = vsub.f32 %v513, %v514
  %v516 = vand.u32 %v515, 4294901760
  %517 = vmatmul.mubr.f32.gmra.mrb[0].mxu0 %v516
  %v518 = vpop.f32.mrb[0].mxu0
  %v519 = vadd.f32 0.0, %v518
  %v520 = vpop.f32.mrb[0].mxu0
  %v521 = vadd.f32 0.0, %v520
  %522 = vmatprep.mubr.f32.mxu0 0.0
  %v523 = vand.u32 %v143, 4294901760
  %v524 = vsub.f32 %v143, %v523
  %v525 = vand.u32 %v524, 4294901760
  %v526 = vsub.f32 %v524, %v525
  %v527 = vand.u32 %v526, 4294901760
  %528 = vmatmul.mubr.f32.gmra.mrb[0].mxu0 %v527
  %v529 = vpop.f32.mrb[0].mxu0
  %v530 = vadd.f32 0.0, %v529
  %v531 = vpop.f32.mrb[0].mxu0
  %v532 = vadd.f32 0.0, %v531
  %533 = vmatprep.mubr.f32.mxu0 0.0
  %v534 = vand.u32 %v146, 4294901760
  %v535 = vsub.f32 %v146, %v534
  %v536 = vand.u32 %v535, 4294901760
  %v537 = vsub.f32 %v535, %v536
  %v538 = vand.u32 %v537, 4294901760
  %539 = vmatmul.mubr.f32.gmra.mrb[0].mxu0 %v538
  %v540 = vpop.f32.mrb[0].mxu0
  %v541 = vadd.f32 0.0, %v540
  %v542 = vpop.f32.mrb[0].mxu0
  %v543 = vadd.f32 0.0, %v542
  %544 = vmatprep.mubr.f32.mxu0 0.0
  %v545 = vand.u32 %v149, 4294901760
  %v546 = vsub.f32 %v149, %v545
  %v547 = vand.u32 %v546, 4294901760
  %v548 = vsub.f32 %v546, %v547
  %v549 = vand.u32 %v548, 4294901760
  %550 = vmatmul.mubr.f32.gmra.mrb[0].mxu0 %v549
  %v551 = vpop.f32.mrb[0].mxu0
  %v552 = vadd.f32 0.0, %v551
  %v553 = vpop.f32.mrb[0].mxu0
  %v554 = vadd.f32 0.0, %v553
  %555 = vmatprep.mubr.f32.mxu0 0.0
  %v556 = vand.u32 %v152, 4294901760
  %v557 = vsub.f32 %v152, %v556
  %v558 = vand.u32 %v557, 4294901760
  %v559 = vsub.f32 %v557, %v558
  %v560 = vand.u32 %v559, 4294901760
  %561 = vmatmul.mubr.f32.gmra.mrb[0].mxu0 %v560
  %v562 = vpop.f32.mrb[0].mxu0
  %v563 = vadd.f32 0.0, %v562
  %v564 = vpop.f32.mrb[0].mxu0
  %v565 = vadd.f32 0.0, %v564
  %566 = vmatprep.mubr.f32.mxu0 0.0
  %v567 = vand.u32 %v155, 4294901760
  %v568 = vsub.f32 %v155, %v567
  %v569 = vand.u32 %v568, 4294901760
  %v570 = vsub.f32 %v568, %v569
  %v571 = vand.u32 %v570, 4294901760
  %572 = vmatmul.mubr.f32.gmra.mrb[0].mxu0 %v571
  %v573 = vpop.f32.mrb[0].mxu0
  %v574 = vadd.f32 0.0, %v573
  %v575 = vpop.f32.mrb[0].mxu0
  %v576 = vadd.f32 0.0, %v575
  %577 = vmatprep.mubr.f32.mxu0 0.0
  %v578 = vand.u32 %v158, 4294901760
  %v579 = vsub.f32 %v158, %v578
  %v580 = vand.u32 %v579, 4294901760
  %v581 = vsub.f32 %v579, %v580
  %v582 = vand.u32 %v581, 4294901760
  %583 = vmatmul.mubr.f32.gmra.mrb[0].mxu0 %v582
  %v584 = vpop.f32.mrb[0].mxu0
  %v585 = vadd.f32 0.0, %v584
  %v586 = vpop.f32.mrb[0].mxu0
  %v587 = vadd.f32 0.0, %v586
  %588 = vmatprep.mubr.f32.mxu0 0.0
  %v589 = vand.u32 %v161, 4294901760
  %v590 = vsub.f32 %v161, %v589
  %v591 = vand.u32 %v590, 4294901760
  %v592 = vsub.f32 %v590, %v591
  %v593 = vand.u32 %v592, 4294901760
  %594 = vmatmul.mubr.f32.gmra.mrb[0].mxu0 %v593
  %v595 = vpop.f32.mrb[0].mxu0
  %v596 = vadd.f32 0.0, %v595
  %v597 = vpop.f32.mrb[0].mxu0
  %v598 = vadd.f32 0.0, %v597
  %599 = vmatprep.mubr.f32.mxu0 0.0
  %v600 = vand.u32 %v164, 4294901760
  %v601 = vsub.f32 %v164, %v600
  %v602 = vand.u32 %v601, 4294901760
  %v603 = vsub.f32 %v601, %v602
  %v604 = vand.u32 %v603, 4294901760
  %605 = vmatmul.mubr.f32.gmra.mrb[0].mxu0 %v604
  %v606 = vpop.f32.mrb[0].mxu0
  %v607 = vadd.f32 0.0, %v606
  %v608 = vpop.f32.mrb[0].mxu0
  %v609 = vadd.f32 0.0, %v608
  %610 = vmatprep.mubr.f32.mxu0 0.0
  %v611 = vand.u32 %v167, 4294901760
  %v612 = vsub.f32 %v167, %v611
  %v613 = vand.u32 %v612, 4294901760
  %v614 = vsub.f32 %v612, %v613
  %v615 = vand.u32 %v614, 4294901760
  %616 = vmatmul.mubr.f32.gmra.mrb[0].mxu0 %v615
  %v617 = vpop.f32.mrb[0].mxu0
  %v618 = vadd.f32 0.0, %v617
  %v619 = vpop.f32.mrb[0].mxu0
  %v620 = vadd.f32 0.0, %v619
  %621 = vmatprep.mubr.f32.mxu0 0.0
  %v622 = vand.u32 %v170, 4294901760
  %v623 = vsub.f32 %v170, %v622
  %v624 = vand.u32 %v623, 4294901760
  %v625 = vsub.f32 %v623, %v624
  %v626 = vand.u32 %v625, 4294901760
  %627 = vmatmul.mubr.f32.gmra.mrb[0].mxu0 %v626
  %v628 = vpop.f32.mrb[0].mxu0
  %v629 = vadd.f32 0.0, %v628
  %v630 = vpop.f32.mrb[0].mxu0
  %v631 = vadd.f32 0.0, %v630
  %632 = vmatprep.mubr.f32.mxu0 0.0
  %v633 = vand.u32 %v173, 4294901760
  %v634 = vsub.f32 %v173, %v633
  %v635 = vand.u32 %v634, 4294901760
  %v636 = vsub.f32 %v634, %v635
  %v637 = vand.u32 %v636, 4294901760
  %638 = vmatmul.mubr.f32.gmra.mrb[0].mxu0 %v637
  %v639 = vpop.f32.mrb[0].mxu0
  %v640 = vadd.f32 0.0, %v639
  %v641 = vpop.f32.mrb[0].mxu0
  %v642 = vadd.f32 0.0, %v641
  %643 = vmatprep.mubr.f32.mxu0 0.0
  %v644 = vand.u32 %v176, 4294901760
  %v645 = vsub.f32 %v176, %v644
  %v646 = vand.u32 %v645, 4294901760
  %v647 = vsub.f32 %v645, %v646
  %v648 = vand.u32 %v647, 4294901760
  %649 = vmatmul.mubr.f32.gmra.mrb[0].mxu0 %v648
  %v650 = vpop.f32.mrb[0].mxu0
  %v651 = vadd.f32 0.0, %v650
  %v652 = vpop.f32.mrb[0].mxu0
  %v653 = vadd.f32 0.0, %v652
  %654 = vmatprep.mubr.f32.mxu0 0.0
  %v655 = vand.u32 %v179, 4294901760
  %v656 = vsub.f32 %v179, %v655
  %v657 = vand.u32 %v656, 4294901760
  %v658 = vsub.f32 %v656, %v657
  %v659 = vand.u32 %v658, 4294901760
  %660 = vmatmul.mubr.f32.gmra.mrb[0].mxu0 %v659
  %v661 = vpop.f32.mrb[0].mxu0
  %v662 = vadd.f32 0.0, %v661
  %v663 = vpop.f32.mrb[0].mxu0
  %v664 = vadd.f32 0.0, %v663
  %665 = vdwg.mxu0
  %v666 = vand.u32 %v65, 4294901760
  %v667 = vsub.f32 %v65, %v666
  %v668 = vand.u32 %v667, 4294901760
  %v669 = vsub.f32 %v667, %v668
  %v670 = vand.u32 %v669, 4294901760
  %671 = vmatprep.subr.mxu0 %v670
  %v672 = vand.u32 %v64, 4294901760
  %v673 = vsub.f32 %v64, %v672
  %v674 = vand.u32 %v673, 4294901760
  %v675 = vsub.f32 %v673, %v674
  %v676 = vand.u32 %v675, 4294901760
  %677 = vmatpush1.msra.mxu0 %v676
  %678 = vmatprep.subr.mxu0 0.0
  %679 = vmatpush1.msra.mxu0 0.0
  %680 = vmatprep.subr.mxu0 0.0
  %681 = vmatpush1.msra.mxu0 0.0
  %682 = vmatprep.subr.mxu0 0.0
  %683 = vmatpush1.msra.mxu0 0.0
  %684 = vmatprep.subr.mxu0 0.0
  %685 = vmatpush1.msra.mxu0 0.0
  %686 = vmatprep.subr.mxu0 0.0
  %687 = vmatpush1.msra.mxu0 0.0
  %688 = vmatprep.subr.mxu0 0.0
  %689 = vmatpush1.msra.mxu0 0.0
  %690 = vmatprep.subr.mxu0 0.0
  %691 = vmatpush1.msra.mxu0 0.0
  %692 = vmatprep.subr.mxu0 0.0
  %693 = vmatpush1.msra.mxu0 0.0
  %694 = vmatprep.subr.mxu0 0.0
  %695 = vmatpush1.msra.mxu0 0.0
  %696 = vmatprep.subr.mxu0 0.0
  %697 = vmatpush1.msra.mxu0 0.0
  %698 = vmatprep.subr.mxu0 0.0
  %699 = vmatpush1.msra.mxu0 0.0
  %700 = vmatprep.subr.mxu0 0.0
  %701 = vmatpush1.msra.mxu0 0.0
  %702 = vmatprep.subr.mxu0 0.0
  %703 = vmatpush1.msra.mxu0 0.0
  %704 = vmatprep.subr.mxu0 0.0
  %705 = vmatpush1.msra.mxu0 0.0
  %706 = vmatprep.subr.mxu0 0.0
  %707 = vmatpush1.msra.mxu0 0.0
  %708 = vmatprep.subr.mxu0 0.0
  %709 = vmatpush1.msra.mxu0 0.0
  %710 = vmatprep.subr.mxu0 0.0
  %711 = vmatpush1.msra.mxu0 0.0
  %712 = vmatprep.subr.mxu0 0.0
  %713 = vmatpush1.msra.mxu0 0.0
  %714 = vmatprep.subr.mxu0 0.0
  %715 = vmatpush1.msra.mxu0 0.0
  %716 = vmatprep.subr.mxu0 0.0
  %717 = vmatpush1.msra.mxu0 0.0
  %718 = vmatprep.subr.mxu0 0.0
  %719 = vmatpush1.msra.mxu0 0.0
  %720 = vmatprep.subr.mxu0 0.0
  %721 = vmatpush1.msra.mxu0 0.0
  %722 = vmatprep.subr.mxu0 0.0
  %723 = vmatpush1.msra.mxu0 0.0
  %724 = vmatprep.subr.mxu0 0.0
  %725 = vmatpush1.msra.mxu0 0.0
  %726 = vmatprep.subr.mxu0 0.0
  %727 = vmatpush1.msra.mxu0 0.0
  %728 = vmatprep.subr.mxu0 0.0
  %729 = vmatpush1.msra.mxu0 0.0
  %730 = vmatprep.subr.mxu0 0.0
  %731 = vmatpush1.msra.mxu0 0.0
  %732 = vmatprep.subr.mxu0 0.0
  %733 = vmatpush1.msra.mxu0 0.0
  %734 = vmatprep.subr.mxu0 0.0
  %735 = vmatpush1.msra.mxu0 0.0
  %736 = vmatprep.subr.mxu0 0.0
  %737 = vmatpush1.msra.mxu0 0.0
  %738 = vmatprep.subr.mxu0 0.0
  %739 = vmatpush1.msra.mxu0 0.0
  %740 = vmatprep.mubr.f32.mxu0 0.0
  %v741 = vand.u32 %v68, 4294901760
  %742 = vmatmul.mubr.f32.gmra.mrb[0].mxu0 %v741
  %v743 = vpop.f32.mrb[0].mxu0
  %v744 = vadd.f32 %v255, %v743
  %v745 = vpop.f32.mrb[0].mxu0
  %v746 = vadd.f32 %v257, %v745
  %747 = vmatprep.mubr.f32.mxu0 0.0
  %v748 = vand.u32 %v71, 4294901760
  %749 = vmatmul.mubr.f32.gmra.mrb[0].mxu0 %v748
  %v750 = vpop.f32.mrb[0].mxu0
  %v751 = vadd.f32 %v266, %v750
  %v752 = vpop.f32.mrb[0].mxu0
  %v753 = vadd.f32 %v268, %v752
  %754 = vmatprep.mubr.f32.mxu0 0.0
  %v755 = vand.u32 %v74, 4294901760
  %756 = vmatmul.mubr.f32.gmra.mrb[0].mxu0 %v755
  %v757 = vpop.f32.mrb[0].mxu0
  %v758 = vadd.f32 %v277, %v757
  %v759 = vpop.f32.mrb[0].mxu0
  %v760 = vadd.f32 %v279, %v759
  %761 = vmatprep.mubr.f32.mxu0 0.0
  %v762 = vand.u32 %v77, 4294901760
  %763 = vmatmul.mubr.f32.gmra.mrb[0].mxu0 %v762
  %v764 = vpop.f32.mrb[0].mxu0
  %v765 = vadd.f32 %v288, %v764
  %v766 = vpop.f32.mrb[0].mxu0
  %v767 = vadd.f32 %v290, %v766
  %768 = vmatprep.mubr.f32.mxu0 0.0
  %v769 = vand.u32 %v80, 4294901760
  %770 = vmatmul.mubr.f32.gmra.mrb[0].mxu0 %v769
  %v771 = vpop.f32.mrb[0].mxu0
  %v772 = vadd.f32 %v299, %v771
  %v773 = vpop.f32.mrb[0].mxu0
  %v774 = vadd.f32 %v301, %v773
  %775 = vmatprep.mubr.f32.mxu0 0.0
  %v776 = vand.u32 %v83, 4294901760
  %777 = vmatmul.mubr.f32.gmra.mrb[0].mxu0 %v776
  %v778 = vpop.f32.mrb[0].mxu0
  %v779 = vadd.f32 %v310, %v778
  %v780 = vpop.f32.mrb[0].mxu0
  %v781 = vadd.f32 %v312, %v780
  %782 = vmatprep.mubr.f32.mxu0 0.0
  %v783 = vand.u32 %v86, 4294901760
  %784 = vmatmul.mubr.f32.gmra.mrb[0].mxu0 %v783
  %v785 = vpop.f32.mrb[0].mxu0
  %v786 = vadd.f32 %v321, %v785
  %v787 = vpop.f32.mrb[0].mxu0
  %v788 = vadd.f32 %v323, %v787
  %789 = vmatprep.mubr.f32.mxu0 0.0
  %v790 = vand.u32 %v89, 4294901760
  %791 = vmatmul.mubr.f32.gmra.mrb[0].mxu0 %v790
  %v792 = vpop.f32.mrb[0].mxu0
  %v793 = vadd.f32 %v332, %v792
  %v794 = vpop.f32.mrb[0].mxu0
  %v795 = vadd.f32 %v334, %v794
  %796 = vmatprep.mubr.f32.mxu0 0.0
  %v797 = vand.u32 %v92, 4294901760
  %798 = vmatmul.mubr.f32.gmra.mrb[0].mxu0 %v797
  %v799 = vpop.f32.mrb[0].mxu0
  %v800 = vadd.f32 %v343, %v799
  %v801 = vpop.f32.mrb[0].mxu0
  %v802 = vadd.f32 %v345, %v801
  %803 = vmatprep.mubr.f32.mxu0 0.0
  %v804 = vand.u32 %v95, 4294901760
  %805 = vmatmul.mubr.f32.gmra.mrb[0].mxu0 %v804
  %v806 = vpop.f32.mrb[0].mxu0
  %v807 = vadd.f32 %v354, %v806
  %v808 = vpop.f32.mrb[0].mxu0
  %v809 = vadd.f32 %v356, %v808
  %810 = vmatprep.mubr.f32.mxu0 0.0
  %v811 = vand.u32 %v98, 4294901760
  %812 = vmatmul.mubr.f32.gmra.mrb[0].mxu0 %v811
  %v813 = vpop.f32.mrb[0].mxu0
  %v814 = vadd.f32 %v365, %v813
  %v815 = vpop.f32.mrb[0].mxu0
  %v816 = vadd.f32 %v367, %v815
  %817 = vmatprep.mubr.f32.mxu0 0.0
  %v818 = vand.u32 %v101, 4294901760
  %819 = vmatmul.mubr.f32.gmra.mrb[0].mxu0 %v818
  %v820 = vpop.f32.mrb[0].mxu0
  %v821 = vadd.f32 %v376, %v820
  %v822 = vpop.f32.mrb[0].mxu0
  %v823 = vadd.f32 %v378, %v822
  %824 = vmatprep.mubr.f32.mxu0 0.0
  %v825 = vand.u32 %v104, 4294901760
  %826 = vmatmul.mubr.f32.gmra.mrb[0].mxu0 %v825
  %v827 = vpop.f32.mrb[0].mxu0
  %v828 = vadd.f32 %v387, %v827
  %v829 = vpop.f32.mrb[0].mxu0
  %v830 = vadd.f32 %v389, %v829
  %831 = vmatprep.mubr.f32.mxu0 0.0
  %v832 = vand.u32 %v107, 4294901760
  %833 = vmatmul.mubr.f32.gmra.mrb[0].mxu0 %v832
  %v834 = vpop.f32.mrb[0].mxu0
  %v835 = vadd.f32 %v398, %v834
  %v836 = vpop.f32.mrb[0].mxu0
  %v837 = vadd.f32 %v400, %v836
  %838 = vmatprep.mubr.f32.mxu0 0.0
  %v839 = vand.u32 %v110, 4294901760
  %840 = vmatmul.mubr.f32.gmra.mrb[0].mxu0 %v839
  %v841 = vpop.f32.mrb[0].mxu0
  %v842 = vadd.f32 %v409, %v841
  %v843 = vpop.f32.mrb[0].mxu0
  %v844 = vadd.f32 %v411, %v843
  %845 = vmatprep.mubr.f32.mxu0 0.0
  %v846 = vand.u32 %v113, 4294901760
  %847 = vmatmul.mubr.f32.gmra.mrb[0].mxu0 %v846
  %v848 = vpop.f32.mrb[0].mxu0
  %v849 = vadd.f32 %v420, %v848
  %v850 = vpop.f32.mrb[0].mxu0
  %v851 = vadd.f32 %v422, %v850
  %852 = vmatprep.mubr.f32.mxu0 0.0
  %v853 = vand.u32 %v116, 4294901760
  %854 = vmatmul.mubr.f32.gmra.mrb[0].mxu0 %v853
  %v855 = vpop.f32.mrb[0].mxu0
  %v856 = vadd.f32 %v431, %v855
  %v857 = vpop.f32.mrb[0].mxu0
  %v858 = vadd.f32 %v433, %v857
  %859 = vmatprep.mubr.f32.mxu0 0.0
  %v860 = vand.u32 %v119, 4294901760
  %861 = vmatmul.mubr.f32.gmra.mrb[0].mxu0 %v860
  %v862 = vpop.f32.mrb[0].mxu0
  %v863 = vadd.f32 %v442, %v862
  %v864 = vpop.f32.mrb[0].mxu0
  %v865 = vadd.f32 %v444, %v864
  %866 = vmatprep.mubr.f32.mxu0 0.0
  %v867 = vand.u32 %v122, 4294901760
  %868 = vmatmul.mubr.f32.gmra.mrb[0].mxu0 %v867
  %v869 = vpop.f32.mrb[0].mxu0
  %v870 = vadd.f32 %v453, %v869
  %v871 = vpop.f32.mrb[0].mxu0
  %v872 = vadd.f32 %v455, %v871
  %873 = vmatprep.mubr.f32.mxu0 0.0
  %v874 = vand.u32 %v125, 4294901760
  %875 = vmatmul.mubr.f32.gmra.mrb[0].mxu0 %v874
  %v876 = vpop.f32.mrb[0].mxu0
  %v877 = vadd.f32 %v464, %v876
  %v878 = vpop.f32.mrb[0].mxu0
  %v879 = vadd.f32 %v466, %v878
  %880 = vmatprep.mubr.f32.mxu0 0.0
  %v881 = vand.u32 %v128, 4294901760
  %882 = vmatmul.mubr.f32.gmra.mrb[0].mxu0 %v881
  %v883 = vpop.f32.mrb[0].mxu0
  %v884 = vadd.f32 %v475, %v883
  %v885 = vpop.f32.mrb[0].mxu0
  %v886 = vadd.f32 %v477, %v885
  %887 = vmatprep.mubr.f32.mxu0 0.0
  %v888 = vand.u32 %v131, 4294901760
  %889 = vmatmul.mubr.f32.gmra.mrb[0].mxu0 %v888
  %v890 = vpop.f32.mrb[0].mxu0
  %v891 = vadd.f32 %v486, %v890
  %v892 = vpop.f32.mrb[0].mxu0
  %v893 = vadd.f32 %v488, %v892
  %894 = vmatprep.mubr.f32.mxu0 0.0
  %v895 = vand.u32 %v134, 4294901760
  %896 = vmatmul.mubr.f32.gmra.mrb[0].mxu0 %v895
  %v897 = vpop.f32.mrb[0].mxu0
  %v898 = vadd.f32 %v497, %v897
  %v899 = vpop.f32.mrb[0].mxu0
  %v900 = vadd.f32 %v499, %v899
  %901 = vmatprep.mubr.f32.mxu0 0.0
  %v902 = vand.u32 %v137, 4294901760
  %903 = vmatmul.mubr.f32.gmra.mrb[0].mxu0 %v902
  %v904 = vpop.f32.mrb[0].mxu0
  %v905 = vadd.f32 %v508, %v904
  %v906 = vpop.f32.mrb[0].mxu0
  %v907 = vadd.f32 %v510, %v906
  %908 = vmatprep.mubr.f32.mxu0 0.0
  %v909 = vand.u32 %v140, 4294901760
  %910 = vmatmul.mubr.f32.gmra.mrb[0].mxu0 %v909
  %v911 = vpop.f32.mrb[0].mxu0
  %v912 = vadd.f32 %v519, %v911
  %v913 = vpop.f32.mrb[0].mxu0
  %v914 = vadd.f32 %v521, %v913
  %915 = vmatprep.mubr.f32.mxu0 0.0
  %v916 = vand.u32 %v143, 4294901760
  %917 = vmatmul.mubr.f32.gmra.mrb[0].mxu0 %v916
  %v918 = vpop.f32.mrb[0].mxu0
  %v919 = vadd.f32 %v530, %v918
  %v920 = vpop.f32.mrb[0].mxu0
  %v921 = vadd.f32 %v532, %v920
  %922 = vmatprep.mubr.f32.mxu0 0.0
  %v923 = vand.u32 %v146, 4294901760
  %924 = vmatmul.mubr.f32.gmra.mrb[0].mxu0 %v923
  %v925 = vpop.f32.mrb[0].mxu0
  %v926 = vadd.f32 %v541, %v925
  %v927 = vpop.f32.mrb[0].mxu0
  %v928 = vadd.f32 %v543, %v927
  %929 = vmatprep.mubr.f32.mxu0 0.0
  %v930 = vand.u32 %v149, 4294901760
  %931 = vmatmul.mubr.f32.gmra.mrb[0].mxu0 %v930
  %v932 = vpop.f32.mrb[0].mxu0
  %v933 = vadd.f32 %v552, %v932
  %v934 = vpop.f32.mrb[0].mxu0
  %v935 = vadd.f32 %v554, %v934
  %936 = vmatprep.mubr.f32.mxu0 0.0
  %v937 = vand.u32 %v152, 4294901760
  %938 = vmatmul.mubr.f32.gmra.mrb[0].mxu0 %v937
  %v939 = vpop.f32.mrb[0].mxu0
  %v940 = vadd.f32 %v563, %v939
  %v941 = vpop.f32.mrb[0].mxu0
  %v942 = vadd.f32 %v565, %v941
  %943 = vmatprep.mubr.f32.mxu0 0.0
  %v944 = vand.u32 %v155, 4294901760
  %945 = vmatmul.mubr.f32.gmra.mrb[0].mxu0 %v944
  %v946 = vpop.f32.mrb[0].mxu0
  %v947 = vadd.f32 %v574, %v946
  %v948 = vpop.f32.mrb[0].mxu0
  %v949 = vadd.f32 %v576, %v948
  %950 = vmatprep.mubr.f32.mxu0 0.0
  %v951 = vand.u32 %v158, 4294901760
  %952 = vmatmul.mubr.f32.gmra.mrb[0].mxu0 %v951
  %v953 = vpop.f32.mrb[0].mxu0
  %v954 = vadd.f32 %v585, %v953
  %v955 = vpop.f32.mrb[0].mxu0
  %v956 = vadd.f32 %v587, %v955
  %957 = vmatprep.mubr.f32.mxu0 0.0
  %v958 = vand.u32 %v161, 4294901760
  %959 = vmatmul.mubr.f32.gmra.mrb[0].mxu0 %v958
  %v960 = vpop.f32.mrb[0].mxu0
  %v961 = vadd.f32 %v596, %v960
  %v962 = vpop.f32.mrb[0].mxu0
  %v963 = vadd.f32 %v598, %v962
  %964 = vmatprep.mubr.f32.mxu0 0.0
  %v965 = vand.u32 %v164, 4294901760
  %966 = vmatmul.mubr.f32.gmra.mrb[0].mxu0 %v965
  %v967 = vpop.f32.mrb[0].mxu0
  %v968 = vadd.f32 %v607, %v967
  %v969 = vpop.f32.mrb[0].mxu0
  %v970 = vadd.f32 %v609, %v969
  %971 = vmatprep.mubr.f32.mxu0 0.0
  %v972 = vand.u32 %v167, 4294901760
  %973 = vmatmul.mubr.f32.gmra.mrb[0].mxu0 %v972
  %v974 = vpop.f32.mrb[0].mxu0
  %v975 = vadd.f32 %v618, %v974
  %v976 = vpop.f32.mrb[0].mxu0
  %v977 = vadd.f32 %v620, %v976
  %978 = vmatprep.mubr.f32.mxu0 0.0
  %v979 = vand.u32 %v170, 4294901760
  %980 = vmatmul.mubr.f32.gmra.mrb[0].mxu0 %v979
  %v981 = vpop.f32.mrb[0].mxu0
  %v982 = vadd.f32 %v629, %v981
  %v983 = vpop.f32.mrb[0].mxu0
  %v984 = vadd.f32 %v631, %v983
  %985 = vmatprep.mubr.f32.mxu0 0.0
  %v986 = vand.u32 %v173, 4294901760
  %987 = vmatmul.mubr.f32.gmra.mrb[0].mxu0 %v986
  %v988 = vpop.f32.mrb[0].mxu0
  %v989 = vadd.f32 %v640, %v988
  %v990 = vpop.f32.mrb[0].mxu0
  %v991 = vadd.f32 %v642, %v990
  %992 = vmatprep.mubr.f32.mxu0 0.0
  %v993 = vand.u32 %v176, 4294901760
  %994 = vmatmul.mubr.f32.gmra.mrb[0].mxu0 %v993
  %v995 = vpop.f32.mrb[0].mxu0
  %v996 = vadd.f32 %v651, %v995
  %v997 = vpop.f32.mrb[0].mxu0
  %v998 = vadd.f32 %v653, %v997
  %999 = vmatprep.mubr.f32.mxu0 0.0
  %v1000 = vand.u32 %v179, 4294901760
  %1001 = vmatmul.mubr.f32.gmra.mrb[0].mxu0 %v1000
  %v1002 = vpop.f32.mrb[0].mxu0
  %v1003 = vadd.f32 %v662, %v1002
  %v1004 = vpop.f32.mrb[0].mxu0
  %v1005 = vadd.f32 %v664, %v1004
  %1006 = vdwg.mxu0
  %v1007 = vand.u32 %v65, 4294901760
  %v1008 = vsub.f32 %v65, %v1007
  %1009 = vmatprep.subr.mxu0 %v1008
  %v1010 = vand.u32 %v64, 4294901760
  %v1011 = vsub.f32 %v64, %v1010
  %1012 = vmatpush1.msra.mxu0 %v1011
  %1013 = vmatprep.subr.mxu0 0.0
  %1014 = vmatpush1.msra.mxu0 0.0
  %1015 = vmatprep.subr.mxu0 0.0
  %1016 = vmatpush1.msra.mxu0 0.0
  %1017 = vmatprep.subr.mxu0 0.0
  %1018 = vmatpush1.msra.mxu0 0.0
  %1019 = vmatprep.subr.mxu0 0.0
  %1020 = vmatpush1.msra.mxu0 0.0
  %1021 = vmatprep.subr.mxu0 0.0
  %1022 = vmatpush1.msra.mxu0 0.0
  %1023 = vmatprep.subr.mxu0 0.0
  %1024 = vmatpush1.msra.mxu0 0.0
  %1025 = vmatprep.subr.mxu0 0.0
  %1026 = vmatpush1.msra.mxu0 0.0
  %1027 = vmatprep.subr.mxu0 0.0
  %1028 = vmatpush1.msra.mxu0 0.0
  %1029 = vmatprep.subr.mxu0 0.0
  %1030 = vmatpush1.msra.mxu0 0.0
  %1031 = vmatprep.subr.mxu0 0.0
  %1032 = vmatpush1.msra.mxu0 0.0
  %1033 = vmatprep.subr.mxu0 0.0
  %1034 = vmatpush1.msra.mxu0 0.0
  %1035 = vmatprep.subr.mxu0 0.0
  %1036 = vmatpush1.msra.mxu0 0.0
  %1037 = vmatprep.subr.mxu0 0.0
  %1038 = vmatpush1.msra.mxu0 0.0
  %1039 = vmatprep.subr.mxu0 0.0
  %1040 = vmatpush1.msra.mxu0 0.0
  %1041 = vmatprep.subr.mxu0 0.0
  %1042 = vmatpush1.msra.mxu0 0.0
  %1043 = vmatprep.subr.mxu0 0.0
  %1044 = vmatpush1.msra.mxu0 0.0
  %1045 = vmatprep.subr.mxu0 0.0
  %1046 = vmatpush1.msra.mxu0 0.0
  %1047 = vmatprep.subr.mxu0 0.0
  %1048 = vmatpush1.msra.mxu0 0.0
  %1049 = vmatprep.subr.mxu0 0.0
  %1050 = vmatpush1.msra.mxu0 0.0
  %1051 = vmatprep.subr.mxu0 0.0
  %1052 = vmatpush1.msra.mxu0 0.0
  %1053 = vmatprep.subr.mxu0 0.0
  %1054 = vmatpush1.msra.mxu0 0.0
  %1055 = vmatprep.subr.mxu0 0.0
  %1056 = vmatpush1.msra.mxu0 0.0
  %1057 = vmatprep.subr.mxu0 0.0
  %1058 = vmatpush1.msra.mxu0 0.0
  %1059 = vmatprep.subr.mxu0 0.0
  %1060 = vmatpush1.msra.mxu0 0.0
  %1061 = vmatprep.subr.mxu0 0.0
  %1062 = vmatpush1.msra.mxu0 0.0
  %1063 = vmatprep.subr.mxu0 0.0
  %1064 = vmatpush1.msra.mxu0 0.0
  %1065 = vmatprep.subr.mxu0 0.0
  %1066 = vmatpush1.msra.mxu0 0.0
  %1067 = vmatprep.subr.mxu0 0.0
  %1068 = vmatpush1.msra.mxu0 0.0
  %1069 = vmatprep.subr.mxu0 0.0
  %1070 = vmatpush1.msra.mxu0 0.0
  %1071 = vmatprep.subr.mxu0 0.0
  %1072 = vmatpush1.msra.mxu0 0.0
  %1073 = vmatprep.subr.mxu0 0.0
  %1074 = vmatpush1.msra.mxu0 0.0
  %1075 = vmatprep.mubr.f32.mxu0 0.0
  %v1076 = vand.u32 %v68, 4294901760
  %v1077 = vsub.f32 %v68, %v1076
  %1078 = vmatmul.mubr.f32.gmra.mrb[0].mxu0 %v1077
  %v1079 = vpop.f32.mrb[0].mxu0
  %v1080 = vadd.f32 %v744, %v1079
  %v1081 = vpop.f32.mrb[0].mxu0
  %v1082 = vadd.f32 %v746, %v1081
  %1083 = vmatprep.mubr.f32.mxu0 0.0
  %v1084 = vand.u32 %v71, 4294901760
  %v1085 = vsub.f32 %v71, %v1084
  %1086 = vmatmul.mubr.f32.gmra.mrb[0].mxu0 %v1085
  %v1087 = vpop.f32.mrb[0].mxu0
  %v1088 = vadd.f32 %v751, %v1087
  %v1089 = vpop.f32.mrb[0].mxu0
  %v1090 = vadd.f32 %v753, %v1089
  %1091 = vmatprep.mubr.f32.mxu0 0.0
  %v1092 = vand.u32 %v74, 4294901760
  %v1093 = vsub.f32 %v74, %v1092
  %1094 = vmatmul.mubr.f32.gmra.mrb[0].mxu0 %v1093
  %v1095 = vpop.f32.mrb[0].mxu0
  %v1096 = vadd.f32 %v758, %v1095
  %v1097 = vpop.f32.mrb[0].mxu0
  %v1098 = vadd.f32 %v760, %v1097
  %1099 = vmatprep.mubr.f32.mxu0 0.0
  %v1100 = vand.u32 %v77, 4294901760
  %v1101 = vsub.f32 %v77, %v1100
  %1102 = vmatmul.mubr.f32.gmra.mrb[0].mxu0 %v1101
  %v1103 = vpop.f32.mrb[0].mxu0
  %v1104 = vadd.f32 %v765, %v1103
  %v1105 = vpop.f32.mrb[0].mxu0
  %v1106 = vadd.f32 %v767, %v1105
  %1107 = vmatprep.mubr.f32.mxu0 0.0
  %v1108 = vand.u32 %v80, 4294901760
  %v1109 = vsub.f32 %v80, %v1108
  %1110 = vmatmul.mubr.f32.gmra.mrb[0].mxu0 %v1109
  %v1111 = vpop.f32.mrb[0].mxu0
  %v1112 = vadd.f32 %v772, %v1111
  %v1113 = vpop.f32.mrb[0].mxu0
  %v1114 = vadd.f32 %v774, %v1113
  %1115 = vmatprep.mubr.f32.mxu0 0.0
  %v1116 = vand.u32 %v83, 4294901760
  %v1117 = vsub.f32 %v83, %v1116
  %1118 = vmatmul.mubr.f32.gmra.mrb[0].mxu0 %v1117
  %v1119 = vpop.f32.mrb[0].mxu0
  %v1120 = vadd.f32 %v779, %v1119
  %v1121 = vpop.f32.mrb[0].mxu0
  %v1122 = vadd.f32 %v781, %v1121
  %1123 = vmatprep.mubr.f32.mxu0 0.0
  %v1124 = vand.u32 %v86, 4294901760
  %v1125 = vsub.f32 %v86, %v1124
  %1126 = vmatmul.mubr.f32.gmra.mrb[0].mxu0 %v1125
  %v1127 = vpop.f32.mrb[0].mxu0
  %v1128 = vadd.f32 %v786, %v1127
  %v1129 = vpop.f32.mrb[0].mxu0
  %v1130 = vadd.f32 %v788, %v1129
  %1131 = vmatprep.mubr.f32.mxu0 0.0
  %v1132 = vand.u32 %v89, 4294901760
  %v1133 = vsub.f32 %v89, %v1132
  %1134 = vmatmul.mubr.f32.gmra.mrb[0].mxu0 %v1133
  %v1135 = vpop.f32.mrb[0].mxu0
  %v1136 = vadd.f32 %v793, %v1135
  %v1137 = vpop.f32.mrb[0].mxu0
  %v1138 = vadd.f32 %v795, %v1137
  %1139 = vmatprep.mubr.f32.mxu0 0.0
  %v1140 = vand.u32 %v92, 4294901760
  %v1141 = vsub.f32 %v92, %v1140
  %1142 = vmatmul.mubr.f32.gmra.mrb[0].mxu0 %v1141
  %v1143 = vpop.f32.mrb[0].mxu0
  %v1144 = vadd.f32 %v800, %v1143
  %v1145 = vpop.f32.mrb[0].mxu0
  %v1146 = vadd.f32 %v802, %v1145
  %1147 = vmatprep.mubr.f32.mxu0 0.0
  %v1148 = vand.u32 %v95, 4294901760
  %v1149 = vsub.f32 %v95, %v1148
  %1150 = vmatmul.mubr.f32.gmra.mrb[0].mxu0 %v1149
  %v1151 = vpop.f32.mrb[0].mxu0
  %v1152 = vadd.f32 %v807, %v1151
  %v1153 = vpop.f32.mrb[0].mxu0
  %v1154 = vadd.f32 %v809, %v1153
  %1155 = vmatprep.mubr.f32.mxu0 0.0
  %v1156 = vand.u32 %v98, 4294901760
  %v1157 = vsub.f32 %v98, %v1156
  %1158 = vmatmul.mubr.f32.gmra.mrb[0].mxu0 %v1157
  %v1159 = vpop.f32.mrb[0].mxu0
  %v1160 = vadd.f32 %v814, %v1159
  %v1161 = vpop.f32.mrb[0].mxu0
  %v1162 = vadd.f32 %v816, %v1161
  %1163 = vmatprep.mubr.f32.mxu0 0.0
  %v1164 = vand.u32 %v101, 4294901760
  %v1165 = vsub.f32 %v101, %v1164
  %1166 = vmatmul.mubr.f32.gmra.mrb[0].mxu0 %v1165
  %v1167 = vpop.f32.mrb[0].mxu0
  %v1168 = vadd.f32 %v821, %v1167
  %v1169 = vpop.f32.mrb[0].mxu0
  %v1170 = vadd.f32 %v823, %v1169
  %1171 = vmatprep.mubr.f32.mxu0 0.0
  %v1172 = vand.u32 %v104, 4294901760
  %v1173 = vsub.f32 %v104, %v1172
  %1174 = vmatmul.mubr.f32.gmra.mrb[0].mxu0 %v1173
  %v1175 = vpop.f32.mrb[0].mxu0
  %v1176 = vadd.f32 %v828, %v1175
  %v1177 = vpop.f32.mrb[0].mxu0
  %v1178 = vadd.f32 %v830, %v1177
  %1179 = vmatprep.mubr.f32.mxu0 0.0
  %v1180 = vand.u32 %v107, 4294901760
  %v1181 = vsub.f32 %v107, %v1180
  %1182 = vmatmul.mubr.f32.gmra.mrb[0].mxu0 %v1181
  %v1183 = vpop.f32.mrb[0].mxu0
  %v1184 = vadd.f32 %v835, %v1183
  %v1185 = vpop.f32.mrb[0].mxu0
  %v1186 = vadd.f32 %v837, %v1185
  %1187 = vmatprep.mubr.f32.mxu0 0.0
  %v1188 = vand.u32 %v110, 4294901760
  %v1189 = vsub.f32 %v110, %v1188
  %1190 = vmatmul.mubr.f32.gmra.mrb[0].mxu0 %v1189
  %v1191 = vpop.f32.mrb[0].mxu0
  %v1192 = vadd.f32 %v842, %v1191
  %v1193 = vpop.f32.mrb[0].mxu0
  %v1194 = vadd.f32 %v844, %v1193
  %1195 = vmatprep.mubr.f32.mxu0 0.0
  %v1196 = vand.u32 %v113, 4294901760
  %v1197 = vsub.f32 %v113, %v1196
  %1198 = vmatmul.mubr.f32.gmra.mrb[0].mxu0 %v1197
  %v1199 = vpop.f32.mrb[0].mxu0
  %v1200 = vadd.f32 %v849, %v1199
  %v1201 = vpop.f32.mrb[0].mxu0
  %v1202 = vadd.f32 %v851, %v1201
  %1203 = vmatprep.mubr.f32.mxu0 0.0
  %v1204 = vand.u32 %v116, 4294901760
  %v1205 = vsub.f32 %v116, %v1204
  %1206 = vmatmul.mubr.f32.gmra.mrb[0].mxu0 %v1205
  %v1207 = vpop.f32.mrb[0].mxu0
  %v1208 = vadd.f32 %v856, %v1207
  %v1209 = vpop.f32.mrb[0].mxu0
  %v1210 = vadd.f32 %v858, %v1209
  %1211 = vmatprep.mubr.f32.mxu0 0.0
  %v1212 = vand.u32 %v119, 4294901760
  %v1213 = vsub.f32 %v119, %v1212
  %1214 = vmatmul.mubr.f32.gmra.mrb[0].mxu0 %v1213
  %v1215 = vpop.f32.mrb[0].mxu0
  %v1216 = vadd.f32 %v863, %v1215
  %v1217 = vpop.f32.mrb[0].mxu0
  %v1218 = vadd.f32 %v865, %v1217
  %1219 = vmatprep.mubr.f32.mxu0 0.0
  %v1220 = vand.u32 %v122, 4294901760
  %v1221 = vsub.f32 %v122, %v1220
  %1222 = vmatmul.mubr.f32.gmra.mrb[0].mxu0 %v1221
  %v1223 = vpop.f32.mrb[0].mxu0
  %v1224 = vadd.f32 %v870, %v1223
  %v1225 = vpop.f32.mrb[0].mxu0
  %v1226 = vadd.f32 %v872, %v1225
  %1227 = vmatprep.mubr.f32.mxu0 0.0
  %v1228 = vand.u32 %v125, 4294901760
  %v1229 = vsub.f32 %v125, %v1228
  %1230 = vmatmul.mubr.f32.gmra.mrb[0].mxu0 %v1229
  %v1231 = vpop.f32.mrb[0].mxu0
  %v1232 = vadd.f32 %v877, %v1231
  %v1233 = vpop.f32.mrb[0].mxu0
  %v1234 = vadd.f32 %v879, %v1233
  %1235 = vmatprep.mubr.f32.mxu0 0.0
  %v1236 = vand.u32 %v128, 4294901760
  %v1237 = vsub.f32 %v128, %v1236
  %1238 = vmatmul.mubr.f32.gmra.mrb[0].mxu0 %v1237
  %v1239 = vpop.f32.mrb[0].mxu0
  %v1240 = vadd.f32 %v884, %v1239
  %v1241 = vpop.f32.mrb[0].mxu0
  %v1242 = vadd.f32 %v886, %v1241
  %1243 = vmatprep.mubr.f32.mxu0 0.0
  %v1244 = vand.u32 %v131, 4294901760
  %v1245 = vsub.f32 %v131, %v1244
  %1246 = vmatmul.mubr.f32.gmra.mrb[0].mxu0 %v1245
  %v1247 = vpop.f32.mrb[0].mxu0
  %v1248 = vadd.f32 %v891, %v1247
  %v1249 = vpop.f32.mrb[0].mxu0
  %v1250 = vadd.f32 %v893, %v1249
  %1251 = vmatprep.mubr.f32.mxu0 0.0
  %v1252 = vand.u32 %v134, 4294901760
  %v1253 = vsub.f32 %v134, %v1252
  %1254 = vmatmul.mubr.f32.gmra.mrb[0].mxu0 %v1253
  %v1255 = vpop.f32.mrb[0].mxu0
  %v1256 = vadd.f32 %v898, %v1255
  %v1257 = vpop.f32.mrb[0].mxu0
  %v1258 = vadd.f32 %v900, %v1257
  %1259 = vmatprep.mubr.f32.mxu0 0.0
  %v1260 = vand.u32 %v137, 4294901760
  %v1261 = vsub.f32 %v137, %v1260
  %1262 = vmatmul.mubr.f32.gmra.mrb[0].mxu0 %v1261
  %v1263 = vpop.f32.mrb[0].mxu0
  %v1264 = vadd.f32 %v905, %v1263
  %v1265 = vpop.f32.mrb[0].mxu0
  %v1266 = vadd.f32 %v907, %v1265
  %1267 = vmatprep.mubr.f32.mxu0 0.0
  %v1268 = vand.u32 %v140, 4294901760
  %v1269 = vsub.f32 %v140, %v1268
  %1270 = vmatmul.mubr.f32.gmra.mrb[0].mxu0 %v1269
  %v1271 = vpop.f32.mrb[0].mxu0
  %v1272 = vadd.f32 %v912, %v1271
  %v1273 = vpop.f32.mrb[0].mxu0
  %v1274 = vadd.f32 %v914, %v1273
  %1275 = vmatprep.mubr.f32.mxu0 0.0
  %v1276 = vand.u32 %v143, 4294901760
  %v1277 = vsub.f32 %v143, %v1276
  %1278 = vmatmul.mubr.f32.gmra.mrb[0].mxu0 %v1277
  %v1279 = vpop.f32.mrb[0].mxu0
  %v1280 = vadd.f32 %v919, %v1279
  %v1281 = vpop.f32.mrb[0].mxu0
  %v1282 = vadd.f32 %v921, %v1281
  %1283 = vmatprep.mubr.f32.mxu0 0.0
  %v1284 = vand.u32 %v146, 4294901760
  %v1285 = vsub.f32 %v146, %v1284
  %1286 = vmatmul.mubr.f32.gmra.mrb[0].mxu0 %v1285
  %v1287 = vpop.f32.mrb[0].mxu0
  %v1288 = vadd.f32 %v926, %v1287
  %v1289 = vpop.f32.mrb[0].mxu0
  %v1290 = vadd.f32 %v928, %v1289
  %1291 = vmatprep.mubr.f32.mxu0 0.0
  %v1292 = vand.u32 %v149, 4294901760
  %v1293 = vsub.f32 %v149, %v1292
  %1294 = vmatmul.mubr.f32.gmra.mrb[0].mxu0 %v1293
  %v1295 = vpop.f32.mrb[0].mxu0
  %v1296 = vadd.f32 %v933, %v1295
  %v1297 = vpop.f32.mrb[0].mxu0
  %v1298 = vadd.f32 %v935, %v1297
  %1299 = vmatprep.mubr.f32.mxu0 0.0
  %v1300 = vand.u32 %v152, 4294901760
  %v1301 = vsub.f32 %v152, %v1300
  %1302 = vmatmul.mubr.f32.gmra.mrb[0].mxu0 %v1301
  %v1303 = vpop.f32.mrb[0].mxu0
  %v1304 = vadd.f32 %v940, %v1303
  %v1305 = vpop.f32.mrb[0].mxu0
  %v1306 = vadd.f32 %v942, %v1305
  %1307 = vmatprep.mubr.f32.mxu0 0.0
  %v1308 = vand.u32 %v155, 4294901760
  %v1309 = vsub.f32 %v155, %v1308
  %1310 = vmatmul.mubr.f32.gmra.mrb[0].mxu0 %v1309
  %v1311 = vpop.f32.mrb[0].mxu0
  %v1312 = vadd.f32 %v947, %v1311
  %v1313 = vpop.f32.mrb[0].mxu0
  %v1314 = vadd.f32 %v949, %v1313
  %1315 = vmatprep.mubr.f32.mxu0 0.0
  %v1316 = vand.u32 %v158, 4294901760
  %v1317 = vsub.f32 %v158, %v1316
  %1318 = vmatmul.mubr.f32.gmra.mrb[0].mxu0 %v1317
  %v1319 = vpop.f32.mrb[0].mxu0
  %v1320 = vadd.f32 %v954, %v1319
  %v1321 = vpop.f32.mrb[0].mxu0
  %v1322 = vadd.f32 %v956, %v1321
  %1323 = vmatprep.mubr.f32.mxu0 0.0
  %v1324 = vand.u32 %v161, 4294901760
  %v1325 = vsub.f32 %v161, %v1324
  %1326 = vmatmul.mubr.f32.gmra.mrb[0].mxu0 %v1325
  %v1327 = vpop.f32.mrb[0].mxu0
  %v1328 = vadd.f32 %v961, %v1327
  %v1329 = vpop.f32.mrb[0].mxu0
  %v1330 = vadd.f32 %v963, %v1329
  %1331 = vmatprep.mubr.f32.mxu0 0.0
  %v1332 = vand.u32 %v164, 4294901760
  %v1333 = vsub.f32 %v164, %v1332
  %1334 = vmatmul.mubr.f32.gmra.mrb[0].mxu0 %v1333
  %v1335 = vpop.f32.mrb[0].mxu0
  %v1336 = vadd.f32 %v968, %v1335
  %v1337 = vpop.f32.mrb[0].mxu0
  %v1338 = vadd.f32 %v970, %v1337
  %1339 = vmatprep.mubr.f32.mxu0 0.0
  %v1340 = vand.u32 %v167, 4294901760
  %v1341 = vsub.f32 %v167, %v1340
  %1342 = vmatmul.mubr.f32.gmra.mrb[0].mxu0 %v1341
  %v1343 = vpop.f32.mrb[0].mxu0
  %v1344 = vadd.f32 %v975, %v1343
  %v1345 = vpop.f32.mrb[0].mxu0
  %v1346 = vadd.f32 %v977, %v1345
  %1347 = vmatprep.mubr.f32.mxu0 0.0
  %v1348 = vand.u32 %v170, 4294901760
  %v1349 = vsub.f32 %v170, %v1348
  %1350 = vmatmul.mubr.f32.gmra.mrb[0].mxu0 %v1349
  %v1351 = vpop.f32.mrb[0].mxu0
  %v1352 = vadd.f32 %v982, %v1351
  %v1353 = vpop.f32.mrb[0].mxu0
  %v1354 = vadd.f32 %v984, %v1353
  %1355 = vmatprep.mubr.f32.mxu0 0.0
  %v1356 = vand.u32 %v173, 4294901760
  %v1357 = vsub.f32 %v173, %v1356
  %1358 = vmatmul.mubr.f32.gmra.mrb[0].mxu0 %v1357
  %v1359 = vpop.f32.mrb[0].mxu0
  %v1360 = vadd.f32 %v989, %v1359
  %v1361 = vpop.f32.mrb[0].mxu0
  %v1362 = vadd.f32 %v991, %v1361
  %1363 = vmatprep.mubr.f32.mxu0 0.0
  %v1364 = vand.u32 %v176, 4294901760
  %v1365 = vsub.f32 %v176, %v1364
  %1366 = vmatmul.mubr.f32.gmra.mrb[0].mxu0 %v1365
  %v1367 = vpop.f32.mrb[0].mxu0
  %v1368 = vadd.f32 %v996, %v1367
  %v1369 = vpop.f32.mrb[0].mxu0
  %v1370 = vadd.f32 %v998, %v1369
  %1371 = vmatprep.mubr.f32.mxu0 0.0
  %v1372 = vand.u32 %v179, 4294901760
  %v1373 = vsub.f32 %v179, %v1372
  %1374 = vmatmul.mubr.f32.gmra.mrb[0].mxu0 %v1373
  %v1375 = vpop.f32.mrb[0].mxu0
  %v1376 = vadd.f32 %v1003, %v1375
  %v1377 = vpop.f32.mrb[0].mxu0
  %v1378 = vadd.f32 %v1005, %v1377
  %1379 = vdwg.mxu0
  %v1380 = vand.u32 %v65, 4294901760
  %1381 = vmatprep.subr.mxu0 %v1380
  %v1382 = vand.u32 %v64, 4294901760
  %1383 = vmatpush1.msra.mxu0 %v1382
  %1384 = vmatprep.subr.mxu0 0.0
  %1385 = vmatpush1.msra.mxu0 0.0
  %1386 = vmatprep.subr.mxu0 0.0
  %1387 = vmatpush1.msra.mxu0 0.0
  %1388 = vmatprep.subr.mxu0 0.0
  %1389 = vmatpush1.msra.mxu0 0.0
  %1390 = vmatprep.subr.mxu0 0.0
  %1391 = vmatpush1.msra.mxu0 0.0
  %1392 = vmatprep.subr.mxu0 0.0
  %1393 = vmatpush1.msra.mxu0 0.0
  %1394 = vmatprep.subr.mxu0 0.0
  %1395 = vmatpush1.msra.mxu0 0.0
  %1396 = vmatprep.subr.mxu0 0.0
  %1397 = vmatpush1.msra.mxu0 0.0
  %1398 = vmatprep.subr.mxu0 0.0
  %1399 = vmatpush1.msra.mxu0 0.0
  %1400 = vmatprep.subr.mxu0 0.0
  %1401 = vmatpush1.msra.mxu0 0.0
  %1402 = vmatprep.subr.mxu0 0.0
  %1403 = vmatpush1.msra.mxu0 0.0
  %1404 = vmatprep.subr.mxu0 0.0
  %1405 = vmatpush1.msra.mxu0 0.0
  %1406 = vmatprep.subr.mxu0 0.0
  %1407 = vmatpush1.msra.mxu0 0.0
  %1408 = vmatprep.subr.mxu0 0.0
  %1409 = vmatpush1.msra.mxu0 0.0
  %1410 = vmatprep.subr.mxu0 0.0
  %1411 = vmatpush1.msra.mxu0 0.0
  %1412 = vmatprep.subr.mxu0 0.0
  %1413 = vmatpush1.msra.mxu0 0.0
  %1414 = vmatprep.subr.mxu0 0.0
  %1415 = vmatpush1.msra.mxu0 0.0
  %1416 = vmatprep.subr.mxu0 0.0
  %1417 = vmatpush1.msra.mxu0 0.0
  %1418 = vmatprep.subr.mxu0 0.0
  %1419 = vmatpush1.msra.mxu0 0.0
  %1420 = vmatprep.subr.mxu0 0.0
  %1421 = vmatpush1.msra.mxu0 0.0
  %1422 = vmatprep.subr.mxu0 0.0
  %1423 = vmatpush1.msra.mxu0 0.0
  %1424 = vmatprep.subr.mxu0 0.0
  %1425 = vmatpush1.msra.mxu0 0.0
  %1426 = vmatprep.subr.mxu0 0.0
  %1427 = vmatpush1.msra.mxu0 0.0
  %1428 = vmatprep.subr.mxu0 0.0
  %1429 = vmatpush1.msra.mxu0 0.0
  %1430 = vmatprep.subr.mxu0 0.0
  %1431 = vmatpush1.msra.mxu0 0.0
  %1432 = vmatprep.subr.mxu0 0.0
  %1433 = vmatpush1.msra.mxu0 0.0
  %1434 = vmatprep.subr.mxu0 0.0
  %1435 = vmatpush1.msra.mxu0 0.0
  %1436 = vmatprep.subr.mxu0 0.0
  %1437 = vmatpush1.msra.mxu0 0.0
  %1438 = vmatprep.subr.mxu0 0.0
  %1439 = vmatpush1.msra.mxu0 0.0
  %1440 = vmatprep.subr.mxu0 0.0
  %1441 = vmatpush1.msra.mxu0 0.0
  %1442 = vmatprep.subr.mxu0 0.0
  %1443 = vmatpush1.msra.mxu0 0.0
  %1444 = vmatprep.subr.mxu0 0.0
  %1445 = vmatpush1.msra.mxu0 0.0
  %1446 = vmatprep.mubr.f32.mxu0 0.0
  %v1447 = vand.u32 %v68, 4294901760
  %v1448 = vsub.f32 %v68, %v1447
  %v1449 = vand.u32 %v1448, 4294901760
  %1450 = vmatmul.mubr.f32.gmra.mrb[0].mxu0 %v1449
  %v1451 = vpop.f32.mrb[0].mxu0
  %v1452 = vadd.f32 %v1080, %v1451
  %v1453 = vpop.f32.mrb[0].mxu0
  %v1454 = vadd.f32 %v1082, %v1453
  %1455 = vmatprep.mubr.f32.mxu0 0.0
  %v1456 = vand.u32 %v71, 4294901760
  %v1457 = vsub.f32 %v71, %v1456
  %v1458 = vand.u32 %v1457, 4294901760
  %1459 = vmatmul.mubr.f32.gmra.mrb[0].mxu0 %v1458
  %v1460 = vpop.f32.mrb[0].mxu0
  %v1461 = vadd.f32 %v1088, %v1460
  %v1462 = vpop.f32.mrb[0].mxu0
  %v1463 = vadd.f32 %v1090, %v1462
  %1464 = vmatprep.mubr.f32.mxu0 0.0
  %v1465 = vand.u32 %v74, 4294901760
  %v1466 = vsub.f32 %v74, %v1465
  %v1467 = vand.u32 %v1466, 4294901760
  %1468 = vmatmul.mubr.f32.gmra.mrb[0].mxu0 %v1467
  %v1469 = vpop.f32.mrb[0].mxu0
  %v1470 = vadd.f32 %v1096, %v1469
  %v1471 = vpop.f32.mrb[0].mxu0
  %v1472 = vadd.f32 %v1098, %v1471
  %1473 = vmatprep.mubr.f32.mxu0 0.0
  %v1474 = vand.u32 %v77, 4294901760
  %v1475 = vsub.f32 %v77, %v1474
  %v1476 = vand.u32 %v1475, 4294901760
  %1477 = vmatmul.mubr.f32.gmra.mrb[0].mxu0 %v1476
  %v1478 = vpop.f32.mrb[0].mxu0
  %v1479 = vadd.f32 %v1104, %v1478
  %v1480 = vpop.f32.mrb[0].mxu0
  %v1481 = vadd.f32 %v1106, %v1480
  %1482 = vmatprep.mubr.f32.mxu0 0.0
  %v1483 = vand.u32 %v80, 4294901760
  %v1484 = vsub.f32 %v80, %v1483
  %v1485 = vand.u32 %v1484, 4294901760
  %1486 = vmatmul.mubr.f32.gmra.mrb[0].mxu0 %v1485
  %v1487 = vpop.f32.mrb[0].mxu0
  %v1488 = vadd.f32 %v1112, %v1487
  %v1489 = vpop.f32.mrb[0].mxu0
  %v1490 = vadd.f32 %v1114, %v1489
  %1491 = vmatprep.mubr.f32.mxu0 0.0
  %v1492 = vand.u32 %v83, 4294901760
  %v1493 = vsub.f32 %v83, %v1492
  %v1494 = vand.u32 %v1493, 4294901760
  %1495 = vmatmul.mubr.f32.gmra.mrb[0].mxu0 %v1494
  %v1496 = vpop.f32.mrb[0].mxu0
  %v1497 = vadd.f32 %v1120, %v1496
  %v1498 = vpop.f32.mrb[0].mxu0
  %v1499 = vadd.f32 %v1122, %v1498
  %1500 = vmatprep.mubr.f32.mxu0 0.0
  %v1501 = vand.u32 %v86, 4294901760
  %v1502 = vsub.f32 %v86, %v1501
  %v1503 = vand.u32 %v1502, 4294901760
  %1504 = vmatmul.mubr.f32.gmra.mrb[0].mxu0 %v1503
  %v1505 = vpop.f32.mrb[0].mxu0
  %v1506 = vadd.f32 %v1128, %v1505
  %v1507 = vpop.f32.mrb[0].mxu0
  %v1508 = vadd.f32 %v1130, %v1507
  %1509 = vmatprep.mubr.f32.mxu0 0.0
  %v1510 = vand.u32 %v89, 4294901760
  %v1511 = vsub.f32 %v89, %v1510
  %v1512 = vand.u32 %v1511, 4294901760
  %1513 = vmatmul.mubr.f32.gmra.mrb[0].mxu0 %v1512
  %v1514 = vpop.f32.mrb[0].mxu0
  %v1515 = vadd.f32 %v1136, %v1514
  %v1516 = vpop.f32.mrb[0].mxu0
  %v1517 = vadd.f32 %v1138, %v1516
  %1518 = vmatprep.mubr.f32.mxu0 0.0
  %v1519 = vand.u32 %v92, 4294901760
  %v1520 = vsub.f32 %v92, %v1519
  %v1521 = vand.u32 %v1520, 4294901760
  %1522 = vmatmul.mubr.f32.gmra.mrb[0].mxu0 %v1521
  %v1523 = vpop.f32.mrb[0].mxu0
  %v1524 = vadd.f32 %v1144, %v1523
  %v1525 = vpop.f32.mrb[0].mxu0
  %v1526 = vadd.f32 %v1146, %v1525
  %1527 = vmatprep.mubr.f32.mxu0 0.0
  %v1528 = vand.u32 %v95, 4294901760
  %v1529 = vsub.f32 %v95, %v1528
  %v1530 = vand.u32 %v1529, 4294901760
  %1531 = vmatmul.mubr.f32.gmra.mrb[0].mxu0 %v1530
  %v1532 = vpop.f32.mrb[0].mxu0
  %v1533 = vadd.f32 %v1152, %v1532
  %v1534 = vpop.f32.mrb[0].mxu0
  %v1535 = vadd.f32 %v1154, %v1534
  %1536 = vmatprep.mubr.f32.mxu0 0.0
  %v1537 = vand.u32 %v98, 4294901760
  %v1538 = vsub.f32 %v98, %v1537
  %v1539 = vand.u32 %v1538, 4294901760
  %1540 = vmatmul.mubr.f32.gmra.mrb[0].mxu0 %v1539
  %v1541 = vpop.f32.mrb[0].mxu0
  %v1542 = vadd.f32 %v1160, %v1541
  %v1543 = vpop.f32.mrb[0].mxu0
  %v1544 = vadd.f32 %v1162, %v1543
  %1545 = vmatprep.mubr.f32.mxu0 0.0
  %v1546 = vand.u32 %v101, 4294901760
  %v1547 = vsub.f32 %v101, %v1546
  %v1548 = vand.u32 %v1547, 4294901760
  %1549 = vmatmul.mubr.f32.gmra.mrb[0].mxu0 %v1548
  %v1550 = vpop.f32.mrb[0].mxu0
  %v1551 = vadd.f32 %v1168, %v1550
  %v1552 = vpop.f32.mrb[0].mxu0
  %v1553 = vadd.f32 %v1170, %v1552
  %1554 = vmatprep.mubr.f32.mxu0 0.0
  %v1555 = vand.u32 %v104, 4294901760
  %v1556 = vsub.f32 %v104, %v1555
  %v1557 = vand.u32 %v1556, 4294901760
  %1558 = vmatmul.mubr.f32.gmra.mrb[0].mxu0 %v1557
  %v1559 = vpop.f32.mrb[0].mxu0
  %v1560 = vadd.f32 %v1176, %v1559
  %v1561 = vpop.f32.mrb[0].mxu0
  %v1562 = vadd.f32 %v1178, %v1561
  %1563 = vmatprep.mubr.f32.mxu0 0.0
  %v1564 = vand.u32 %v107, 4294901760
  %v1565 = vsub.f32 %v107, %v1564
  %v1566 = vand.u32 %v1565, 4294901760
  %1567 = vmatmul.mubr.f32.gmra.mrb[0].mxu0 %v1566
  %v1568 = vpop.f32.mrb[0].mxu0
  %v1569 = vadd.f32 %v1184, %v1568
  %v1570 = vpop.f32.mrb[0].mxu0
  %v1571 = vadd.f32 %v1186, %v1570
  %1572 = vmatprep.mubr.f32.mxu0 0.0
  %v1573 = vand.u32 %v110, 4294901760
  %v1574 = vsub.f32 %v110, %v1573
  %v1575 = vand.u32 %v1574, 4294901760
  %1576 = vmatmul.mubr.f32.gmra.mrb[0].mxu0 %v1575
  %v1577 = vpop.f32.mrb[0].mxu0
  %v1578 = vadd.f32 %v1192, %v1577
  %v1579 = vpop.f32.mrb[0].mxu0
  %v1580 = vadd.f32 %v1194, %v1579
  %1581 = vmatprep.mubr.f32.mxu0 0.0
  %v1582 = vand.u32 %v113, 4294901760
  %v1583 = vsub.f32 %v113, %v1582
  %v1584 = vand.u32 %v1583, 4294901760
  %1585 = vmatmul.mubr.f32.gmra.mrb[0].mxu0 %v1584
  %v1586 = vpop.f32.mrb[0].mxu0
  %v1587 = vadd.f32 %v1200, %v1586
  %v1588 = vpop.f32.mrb[0].mxu0
  %v1589 = vadd.f32 %v1202, %v1588
  %1590 = vmatprep.mubr.f32.mxu0 0.0
  %v1591 = vand.u32 %v116, 4294901760
  %v1592 = vsub.f32 %v116, %v1591
  %v1593 = vand.u32 %v1592, 4294901760
  %1594 = vmatmul.mubr.f32.gmra.mrb[0].mxu0 %v1593
  %v1595 = vpop.f32.mrb[0].mxu0
  %v1596 = vadd.f32 %v1208, %v1595
  %v1597 = vpop.f32.mrb[0].mxu0
  %v1598 = vadd.f32 %v1210, %v1597
  %1599 = vmatprep.mubr.f32.mxu0 0.0
  %v1600 = vand.u32 %v119, 4294901760
  %v1601 = vsub.f32 %v119, %v1600
  %v1602 = vand.u32 %v1601, 4294901760
  %1603 = vmatmul.mubr.f32.gmra.mrb[0].mxu0 %v1602
  %v1604 = vpop.f32.mrb[0].mxu0
  %v1605 = vadd.f32 %v1216, %v1604
  %v1606 = vpop.f32.mrb[0].mxu0
  %v1607 = vadd.f32 %v1218, %v1606
  %1608 = vmatprep.mubr.f32.mxu0 0.0
  %v1609 = vand.u32 %v122, 4294901760
  %v1610 = vsub.f32 %v122, %v1609
  %v1611 = vand.u32 %v1610, 4294901760
  %1612 = vmatmul.mubr.f32.gmra.mrb[0].mxu0 %v1611
  %v1613 = vpop.f32.mrb[0].mxu0
  %v1614 = vadd.f32 %v1224, %v1613
  %v1615 = vpop.f32.mrb[0].mxu0
  %v1616 = vadd.f32 %v1226, %v1615
  %1617 = vmatprep.mubr.f32.mxu0 0.0
  %v1618 = vand.u32 %v125, 4294901760
  %v1619 = vsub.f32 %v125, %v1618
  %v1620 = vand.u32 %v1619, 4294901760
  %1621 = vmatmul.mubr.f32.gmra.mrb[0].mxu0 %v1620
  %v1622 = vpop.f32.mrb[0].mxu0
  %v1623 = vadd.f32 %v1232, %v1622
  %v1624 = vpop.f32.mrb[0].mxu0
  %v1625 = vadd.f32 %v1234, %v1624
  %1626 = vmatprep.mubr.f32.mxu0 0.0
  %v1627 = vand.u32 %v128, 4294901760
  %v1628 = vsub.f32 %v128, %v1627
  %v1629 = vand.u32 %v1628, 4294901760
  %1630 = vmatmul.mubr.f32.gmra.mrb[0].mxu0 %v1629
  %v1631 = vpop.f32.mrb[0].mxu0
  %v1632 = vadd.f32 %v1240, %v1631
  %v1633 = vpop.f32.mrb[0].mxu0
  %v1634 = vadd.f32 %v1242, %v1633
  %1635 = vmatprep.mubr.f32.mxu0 0.0
  %v1636 = vand.u32 %v131, 4294901760
  %v1637 = vsub.f32 %v131, %v1636
  %v1638 = vand.u32 %v1637, 4294901760
  %1639 = vmatmul.mubr.f32.gmra.mrb[0].mxu0 %v1638
  %v1640 = vpop.f32.mrb[0].mxu0
  %v1641 = vadd.f32 %v1248, %v1640
  %v1642 = vpop.f32.mrb[0].mxu0
  %v1643 = vadd.f32 %v1250, %v1642
  %1644 = vmatprep.mubr.f32.mxu0 0.0
  %v1645 = vand.u32 %v134, 4294901760
  %v1646 = vsub.f32 %v134, %v1645
  %v1647 = vand.u32 %v1646, 4294901760
  %1648 = vmatmul.mubr.f32.gmra.mrb[0].mxu0 %v1647
  %v1649 = vpop.f32.mrb[0].mxu0
  %v1650 = vadd.f32 %v1256, %v1649
  %v1651 = vpop.f32.mrb[0].mxu0
  %v1652 = vadd.f32 %v1258, %v1651
  %1653 = vmatprep.mubr.f32.mxu0 0.0
  %v1654 = vand.u32 %v137, 4294901760
  %v1655 = vsub.f32 %v137, %v1654
  %v1656 = vand.u32 %v1655, 4294901760
  %1657 = vmatmul.mubr.f32.gmra.mrb[0].mxu0 %v1656
  %v1658 = vpop.f32.mrb[0].mxu0
  %v1659 = vadd.f32 %v1264, %v1658
  %v1660 = vpop.f32.mrb[0].mxu0
  %v1661 = vadd.f32 %v1266, %v1660
  %1662 = vmatprep.mubr.f32.mxu0 0.0
  %v1663 = vand.u32 %v140, 4294901760
  %v1664 = vsub.f32 %v140, %v1663
  %v1665 = vand.u32 %v1664, 4294901760
  %1666 = vmatmul.mubr.f32.gmra.mrb[0].mxu0 %v1665
  %v1667 = vpop.f32.mrb[0].mxu0
  %v1668 = vadd.f32 %v1272, %v1667
  %v1669 = vpop.f32.mrb[0].mxu0
  %v1670 = vadd.f32 %v1274, %v1669
  %1671 = vmatprep.mubr.f32.mxu0 0.0
  %v1672 = vand.u32 %v143, 4294901760
  %v1673 = vsub.f32 %v143, %v1672
  %v1674 = vand.u32 %v1673, 4294901760
  %1675 = vmatmul.mubr.f32.gmra.mrb[0].mxu0 %v1674
  %v1676 = vpop.f32.mrb[0].mxu0
  %v1677 = vadd.f32 %v1280, %v1676
  %v1678 = vpop.f32.mrb[0].mxu0
  %v1679 = vadd.f32 %v1282, %v1678
  %1680 = vmatprep.mubr.f32.mxu0 0.0
  %v1681 = vand.u32 %v146, 4294901760
  %v1682 = vsub.f32 %v146, %v1681
  %v1683 = vand.u32 %v1682, 4294901760
  %1684 = vmatmul.mubr.f32.gmra.mrb[0].mxu0 %v1683
  %v1685 = vpop.f32.mrb[0].mxu0
  %v1686 = vadd.f32 %v1288, %v1685
  %v1687 = vpop.f32.mrb[0].mxu0
  %v1688 = vadd.f32 %v1290, %v1687
  %1689 = vmatprep.mubr.f32.mxu0 0.0
  %v1690 = vand.u32 %v149, 4294901760
  %v1691 = vsub.f32 %v149, %v1690
  %v1692 = vand.u32 %v1691, 4294901760
  %1693 = vmatmul.mubr.f32.gmra.mrb[0].mxu0 %v1692
  %v1694 = vpop.f32.mrb[0].mxu0
  %v1695 = vadd.f32 %v1296, %v1694
  %v1696 = vpop.f32.mrb[0].mxu0
  %v1697 = vadd.f32 %v1298, %v1696
  %1698 = vmatprep.mubr.f32.mxu0 0.0
  %v1699 = vand.u32 %v152, 4294901760
  %v1700 = vsub.f32 %v152, %v1699
  %v1701 = vand.u32 %v1700, 4294901760
  %1702 = vmatmul.mubr.f32.gmra.mrb[0].mxu0 %v1701
  %v1703 = vpop.f32.mrb[0].mxu0
  %v1704 = vadd.f32 %v1304, %v1703
  %v1705 = vpop.f32.mrb[0].mxu0
  %v1706 = vadd.f32 %v1306, %v1705
  %1707 = vmatprep.mubr.f32.mxu0 0.0
  %v1708 = vand.u32 %v155, 4294901760
  %v1709 = vsub.f32 %v155, %v1708
  %v1710 = vand.u32 %v1709, 4294901760
  %1711 = vmatmul.mubr.f32.gmra.mrb[0].mxu0 %v1710
  %v1712 = vpop.f32.mrb[0].mxu0
  %v1713 = vadd.f32 %v1312, %v1712
  %v1714 = vpop.f32.mrb[0].mxu0
  %v1715 = vadd.f32 %v1314, %v1714
  %1716 = vmatprep.mubr.f32.mxu0 0.0
  %v1717 = vand.u32 %v158, 4294901760
  %v1718 = vsub.f32 %v158, %v1717
  %v1719 = vand.u32 %v1718, 4294901760
  %1720 = vmatmul.mubr.f32.gmra.mrb[0].mxu0 %v1719
  %v1721 = vpop.f32.mrb[0].mxu0
  %v1722 = vadd.f32 %v1320, %v1721
  %v1723 = vpop.f32.mrb[0].mxu0
  %v1724 = vadd.f32 %v1322, %v1723
  %1725 = vmatprep.mubr.f32.mxu0 0.0
  %v1726 = vand.u32 %v161, 4294901760
  %v1727 = vsub.f32 %v161, %v1726
  %v1728 = vand.u32 %v1727, 4294901760
  %1729 = vmatmul.mubr.f32.gmra.mrb[0].mxu0 %v1728
  %v1730 = vpop.f32.mrb[0].mxu0
  %v1731 = vadd.f32 %v1328, %v1730
  %v1732 = vpop.f32.mrb[0].mxu0
  %v1733 = vadd.f32 %v1330, %v1732
  %1734 = vmatprep.mubr.f32.mxu0 0.0
  %v1735 = vand.u32 %v164, 4294901760
  %v1736 = vsub.f32 %v164, %v1735
  %v1737 = vand.u32 %v1736, 4294901760
  %1738 = vmatmul.mubr.f32.gmra.mrb[0].mxu0 %v1737
  %v1739 = vpop.f32.mrb[0].mxu0
  %v1740 = vadd.f32 %v1336, %v1739
  %v1741 = vpop.f32.mrb[0].mxu0
  %v1742 = vadd.f32 %v1338, %v1741
  %1743 = vmatprep.mubr.f32.mxu0 0.0
  %v1744 = vand.u32 %v167, 4294901760
  %v1745 = vsub.f32 %v167, %v1744
  %v1746 = vand.u32 %v1745, 4294901760
  %1747 = vmatmul.mubr.f32.gmra.mrb[0].mxu0 %v1746
  %v1748 = vpop.f32.mrb[0].mxu0
  %v1749 = vadd.f32 %v1344, %v1748
  %v1750 = vpop.f32.mrb[0].mxu0
  %v1751 = vadd.f32 %v1346, %v1750
  %1752 = vmatprep.mubr.f32.mxu0 0.0
  %v1753 = vand.u32 %v170, 4294901760
  %v1754 = vsub.f32 %v170, %v1753
  %v1755 = vand.u32 %v1754, 4294901760
  %1756 = vmatmul.mubr.f32.gmra.mrb[0].mxu0 %v1755
  %v1757 = vpop.f32.mrb[0].mxu0
  %v1758 = vadd.f32 %v1352, %v1757
  %v1759 = vpop.f32.mrb[0].mxu0
  %v1760 = vadd.f32 %v1354, %v1759
  %1761 = vmatprep.mubr.f32.mxu0 0.0
  %v1762 = vand.u32 %v173, 4294901760
  %v1763 = vsub.f32 %v173, %v1762
  %v1764 = vand.u32 %v1763, 4294901760
  %1765 = vmatmul.mubr.f32.gmra.mrb[0].mxu0 %v1764
  %v1766 = vpop.f32.mrb[0].mxu0
  %v1767 = vadd.f32 %v1360, %v1766
  %v1768 = vpop.f32.mrb[0].mxu0
  %v1769 = vadd.f32 %v1362, %v1768
  %1770 = vmatprep.mubr.f32.mxu0 0.0
  %v1771 = vand.u32 %v176, 4294901760
  %v1772 = vsub.f32 %v176, %v1771
  %v1773 = vand.u32 %v1772, 4294901760
  %1774 = vmatmul.mubr.f32.gmra.mrb[0].mxu0 %v1773
  %v1775 = vpop.f32.mrb[0].mxu0
  %v1776 = vadd.f32 %v1368, %v1775
  %v1777 = vpop.f32.mrb[0].mxu0
  %v1778 = vadd.f32 %v1370, %v1777
  %1779 = vmatprep.mubr.f32.mxu0 0.0
  %v1780 = vand.u32 %v179, 4294901760
  %v1781 = vsub.f32 %v179, %v1780
  %v1782 = vand.u32 %v1781, 4294901760
  %1783 = vmatmul.mubr.f32.gmra.mrb[0].mxu0 %v1782
  %v1784 = vpop.f32.mrb[0].mxu0
  %v1785 = vadd.f32 %v1376, %v1784
  %v1786 = vpop.f32.mrb[0].mxu0
  %v1787 = vadd.f32 %v1378, %v1786
  %1788 = vdwg.mxu0
  %v1789 = vand.u32 %v65, 4294901760
  %v1790 = vsub.f32 %v65, %v1789
  %v1791 = vand.u32 %v1790, 4294901760
  %1792 = vmatprep.subr.mxu0 %v1791
  %v1793 = vand.u32 %v64, 4294901760
  %v1794 = vsub.f32 %v64, %v1793
  %v1795 = vand.u32 %v1794, 4294901760
  %1796 = vmatpush1.msra.mxu0 %v1795
  %1797 = vmatprep.subr.mxu0 0.0
  %1798 = vmatpush1.msra.mxu0 0.0
  %1799 = vmatprep.subr.mxu0 0.0
  %1800 = vmatpush1.msra.mxu0 0.0
  %1801 = vmatprep.subr.mxu0 0.0
  %1802 = vmatpush1.msra.mxu0 0.0
  %1803 = vmatprep.subr.mxu0 0.0
  %1804 = vmatpush1.msra.mxu0 0.0
  %1805 = vmatprep.subr.mxu0 0.0
  %1806 = vmatpush1.msra.mxu0 0.0
  %1807 = vmatprep.subr.mxu0 0.0
  %1808 = vmatpush1.msra.mxu0 0.0
  %1809 = vmatprep.subr.mxu0 0.0
  %1810 = vmatpush1.msra.mxu0 0.0
  %1811 = vmatprep.subr.mxu0 0.0
  %1812 = vmatpush1.msra.mxu0 0.0
  %1813 = vmatprep.subr.mxu0 0.0
  %1814 = vmatpush1.msra.mxu0 0.0
  %1815 = vmatprep.subr.mxu0 0.0
  %1816 = vmatpush1.msra.mxu0 0.0
  %1817 = vmatprep.subr.mxu0 0.0
  %1818 = vmatpush1.msra.mxu0 0.0
  %1819 = vmatprep.subr.mxu0 0.0
  %1820 = vmatpush1.msra.mxu0 0.0
  %1821 = vmatprep.subr.mxu0 0.0
  %1822 = vmatpush1.msra.mxu0 0.0
  %1823 = vmatprep.subr.mxu0 0.0
  %1824 = vmatpush1.msra.mxu0 0.0
  %1825 = vmatprep.subr.mxu0 0.0
  %1826 = vmatpush1.msra.mxu0 0.0
  %1827 = vmatprep.subr.mxu0 0.0
  %1828 = vmatpush1.msra.mxu0 0.0
  %1829 = vmatprep.subr.mxu0 0.0
  %1830 = vmatpush1.msra.mxu0 0.0
  %1831 = vmatprep.subr.mxu0 0.0
  %1832 = vmatpush1.msra.mxu0 0.0
  %1833 = vmatprep.subr.mxu0 0.0
  %1834 = vmatpush1.msra.mxu0 0.0
  %1835 = vmatprep.subr.mxu0 0.0
  %1836 = vmatpush1.msra.mxu0 0.0
  %1837 = vmatprep.subr.mxu0 0.0
  %1838 = vmatpush1.msra.mxu0 0.0
  %1839 = vmatprep.subr.mxu0 0.0
  %1840 = vmatpush1.msra.mxu0 0.0
  %1841 = vmatprep.subr.mxu0 0.0
  %1842 = vmatpush1.msra.mxu0 0.0
  %1843 = vmatprep.subr.mxu0 0.0
  %1844 = vmatpush1.msra.mxu0 0.0
  %1845 = vmatprep.subr.mxu0 0.0
  %1846 = vmatpush1.msra.mxu0 0.0
  %1847 = vmatprep.subr.mxu0 0.0
  %1848 = vmatpush1.msra.mxu0 0.0
  %1849 = vmatprep.subr.mxu0 0.0
  %1850 = vmatpush1.msra.mxu0 0.0
  %1851 = vmatprep.subr.mxu0 0.0
  %1852 = vmatpush1.msra.mxu0 0.0
  %1853 = vmatprep.subr.mxu0 0.0
  %1854 = vmatpush1.msra.mxu0 0.0
  %1855 = vmatprep.subr.mxu0 0.0
  %1856 = vmatpush1.msra.mxu0 0.0
  %1857 = vmatprep.subr.mxu0 0.0
  %1858 = vmatpush1.msra.mxu0 0.0
  %1859 = vmatprep.mubr.f32.mxu0 0.0
  %v1860 = vand.u32 %v68, 4294901760
  %1861 = vmatmul.mubr.f32.gmra.mrb[0].mxu0 %v1860
  %v1862 = vpop.f32.mrb[0].mxu0
  %v1863 = vadd.f32 %v1452, %v1862
  %v1864 = vpop.f32.mrb[0].mxu0
  %v1865 = vadd.f32 %v1454, %v1864
  %1866 = vmatprep.mubr.f32.mxu0 0.0
  %v1867 = vand.u32 %v71, 4294901760
  %1868 = vmatmul.mubr.f32.gmra.mrb[0].mxu0 %v1867
  %v1869 = vpop.f32.mrb[0].mxu0
  %v1870 = vadd.f32 %v1461, %v1869
  %v1871 = vpop.f32.mrb[0].mxu0
  %v1872 = vadd.f32 %v1463, %v1871
  %1873 = vmatprep.mubr.f32.mxu0 0.0
  %v1874 = vand.u32 %v74, 4294901760
  %1875 = vmatmul.mubr.f32.gmra.mrb[0].mxu0 %v1874
  %v1876 = vpop.f32.mrb[0].mxu0
  %v1877 = vadd.f32 %v1470, %v1876
  %v1878 = vpop.f32.mrb[0].mxu0
  %v1879 = vadd.f32 %v1472, %v1878
  %1880 = vmatprep.mubr.f32.mxu0 0.0
  %v1881 = vand.u32 %v77, 4294901760
  %1882 = vmatmul.mubr.f32.gmra.mrb[0].mxu0 %v1881
  %v1883 = vpop.f32.mrb[0].mxu0
  %v1884 = vadd.f32 %v1479, %v1883
  %v1885 = vpop.f32.mrb[0].mxu0
  %v1886 = vadd.f32 %v1481, %v1885
  %1887 = vmatprep.mubr.f32.mxu0 0.0
  %v1888 = vand.u32 %v80, 4294901760
  %1889 = vmatmul.mubr.f32.gmra.mrb[0].mxu0 %v1888
  %v1890 = vpop.f32.mrb[0].mxu0
  %v1891 = vadd.f32 %v1488, %v1890
  %v1892 = vpop.f32.mrb[0].mxu0
  %v1893 = vadd.f32 %v1490, %v1892
  %1894 = vmatprep.mubr.f32.mxu0 0.0
  %v1895 = vand.u32 %v83, 4294901760
  %1896 = vmatmul.mubr.f32.gmra.mrb[0].mxu0 %v1895
  %v1897 = vpop.f32.mrb[0].mxu0
  %v1898 = vadd.f32 %v1497, %v1897
  %v1899 = vpop.f32.mrb[0].mxu0
  %v1900 = vadd.f32 %v1499, %v1899
  %1901 = vmatprep.mubr.f32.mxu0 0.0
  %v1902 = vand.u32 %v86, 4294901760
  %1903 = vmatmul.mubr.f32.gmra.mrb[0].mxu0 %v1902
  %v1904 = vpop.f32.mrb[0].mxu0
  %v1905 = vadd.f32 %v1506, %v1904
  %v1906 = vpop.f32.mrb[0].mxu0
  %v1907 = vadd.f32 %v1508, %v1906
  %1908 = vmatprep.mubr.f32.mxu0 0.0
  %v1909 = vand.u32 %v89, 4294901760
  %1910 = vmatmul.mubr.f32.gmra.mrb[0].mxu0 %v1909
  %v1911 = vpop.f32.mrb[0].mxu0
  %v1912 = vadd.f32 %v1515, %v1911
  %v1913 = vpop.f32.mrb[0].mxu0
  %v1914 = vadd.f32 %v1517, %v1913
  %1915 = vmatprep.mubr.f32.mxu0 0.0
  %v1916 = vand.u32 %v92, 4294901760
  %1917 = vmatmul.mubr.f32.gmra.mrb[0].mxu0 %v1916
  %v1918 = vpop.f32.mrb[0].mxu0
  %v1919 = vadd.f32 %v1524, %v1918
  %v1920 = vpop.f32.mrb[0].mxu0
  %v1921 = vadd.f32 %v1526, %v1920
  %1922 = vmatprep.mubr.f32.mxu0 0.0
  %v1923 = vand.u32 %v95, 4294901760
  %1924 = vmatmul.mubr.f32.gmra.mrb[0].mxu0 %v1923
  %v1925 = vpop.f32.mrb[0].mxu0
  %v1926 = vadd.f32 %v1533, %v1925
  %v1927 = vpop.f32.mrb[0].mxu0
  %v1928 = vadd.f32 %v1535, %v1927
  %1929 = vmatprep.mubr.f32.mxu0 0.0
  %v1930 = vand.u32 %v98, 4294901760
  %1931 = vmatmul.mubr.f32.gmra.mrb[0].mxu0 %v1930
  %v1932 = vpop.f32.mrb[0].mxu0
  %v1933 = vadd.f32 %v1542, %v1932
  %v1934 = vpop.f32.mrb[0].mxu0
  %v1935 = vadd.f32 %v1544, %v1934
  %1936 = vmatprep.mubr.f32.mxu0 0.0
  %v1937 = vand.u32 %v101, 4294901760
  %1938 = vmatmul.mubr.f32.gmra.mrb[0].mxu0 %v1937
  %v1939 = vpop.f32.mrb[0].mxu0
  %v1940 = vadd.f32 %v1551, %v1939
  %v1941 = vpop.f32.mrb[0].mxu0
  %v1942 = vadd.f32 %v1553, %v1941
  %1943 = vmatprep.mubr.f32.mxu0 0.0
  %v1944 = vand.u32 %v104, 4294901760
  %1945 = vmatmul.mubr.f32.gmra.mrb[0].mxu0 %v1944
  %v1946 = vpop.f32.mrb[0].mxu0
  %v1947 = vadd.f32 %v1560, %v1946
  %v1948 = vpop.f32.mrb[0].mxu0
  %v1949 = vadd.f32 %v1562, %v1948
  %1950 = vmatprep.mubr.f32.mxu0 0.0
  %v1951 = vand.u32 %v107, 4294901760
  %1952 = vmatmul.mubr.f32.gmra.mrb[0].mxu0 %v1951
  %v1953 = vpop.f32.mrb[0].mxu0
  %v1954 = vadd.f32 %v1569, %v1953
  %v1955 = vpop.f32.mrb[0].mxu0
  %v1956 = vadd.f32 %v1571, %v1955
  %1957 = vmatprep.mubr.f32.mxu0 0.0
  %v1958 = vand.u32 %v110, 4294901760
  %1959 = vmatmul.mubr.f32.gmra.mrb[0].mxu0 %v1958
  %v1960 = vpop.f32.mrb[0].mxu0
  %v1961 = vadd.f32 %v1578, %v1960
  %v1962 = vpop.f32.mrb[0].mxu0
  %v1963 = vadd.f32 %v1580, %v1962
  %1964 = vmatprep.mubr.f32.mxu0 0.0
  %v1965 = vand.u32 %v113, 4294901760
  %1966 = vmatmul.mubr.f32.gmra.mrb[0].mxu0 %v1965
  %v1967 = vpop.f32.mrb[0].mxu0
  %v1968 = vadd.f32 %v1587, %v1967
  %v1969 = vpop.f32.mrb[0].mxu0
  %v1970 = vadd.f32 %v1589, %v1969
  %1971 = vmatprep.mubr.f32.mxu0 0.0
  %v1972 = vand.u32 %v116, 4294901760
  %1973 = vmatmul.mubr.f32.gmra.mrb[0].mxu0 %v1972
  %v1974 = vpop.f32.mrb[0].mxu0
  %v1975 = vadd.f32 %v1596, %v1974
  %v1976 = vpop.f32.mrb[0].mxu0
  %v1977 = vadd.f32 %v1598, %v1976
  %1978 = vmatprep.mubr.f32.mxu0 0.0
  %v1979 = vand.u32 %v119, 4294901760
  %1980 = vmatmul.mubr.f32.gmra.mrb[0].mxu0 %v1979
  %v1981 = vpop.f32.mrb[0].mxu0
  %v1982 = vadd.f32 %v1605, %v1981
  %v1983 = vpop.f32.mrb[0].mxu0
  %v1984 = vadd.f32 %v1607, %v1983
  %1985 = vmatprep.mubr.f32.mxu0 0.0
  %v1986 = vand.u32 %v122, 4294901760
  %1987 = vmatmul.mubr.f32.gmra.mrb[0].mxu0 %v1986
  %v1988 = vpop.f32.mrb[0].mxu0
  %v1989 = vadd.f32 %v1614, %v1988
  %v1990 = vpop.f32.mrb[0].mxu0
  %v1991 = vadd.f32 %v1616, %v1990
  %1992 = vmatprep.mubr.f32.mxu0 0.0
  %v1993 = vand.u32 %v125, 4294901760
  %1994 = vmatmul.mubr.f32.gmra.mrb[0].mxu0 %v1993
  %v1995 = vpop.f32.mrb[0].mxu0
  %v1996 = vadd.f32 %v1623, %v1995
  %v1997 = vpop.f32.mrb[0].mxu0
  %v1998 = vadd.f32 %v1625, %v1997
  %1999 = vmatprep.mubr.f32.mxu0 0.0
  %v2000 = vand.u32 %v128, 4294901760
  %2001 = vmatmul.mubr.f32.gmra.mrb[0].mxu0 %v2000
  %v2002 = vpop.f32.mrb[0].mxu0
  %v2003 = vadd.f32 %v1632, %v2002
  %v2004 = vpop.f32.mrb[0].mxu0
  %v2005 = vadd.f32 %v1634, %v2004
  %2006 = vmatprep.mubr.f32.mxu0 0.0
  %v2007 = vand.u32 %v131, 4294901760
  %2008 = vmatmul.mubr.f32.gmra.mrb[0].mxu0 %v2007
  %v2009 = vpop.f32.mrb[0].mxu0
  %v2010 = vadd.f32 %v1641, %v2009
  %v2011 = vpop.f32.mrb[0].mxu0
  %v2012 = vadd.f32 %v1643, %v2011
  %2013 = vmatprep.mubr.f32.mxu0 0.0
  %v2014 = vand.u32 %v134, 4294901760
  %2015 = vmatmul.mubr.f32.gmra.mrb[0].mxu0 %v2014
  %v2016 = vpop.f32.mrb[0].mxu0
  %v2017 = vadd.f32 %v1650, %v2016
  %v2018 = vpop.f32.mrb[0].mxu0
  %v2019 = vadd.f32 %v1652, %v2018
  %2020 = vmatprep.mubr.f32.mxu0 0.0
  %v2021 = vand.u32 %v137, 4294901760
  %2022 = vmatmul.mubr.f32.gmra.mrb[0].mxu0 %v2021
  %v2023 = vpop.f32.mrb[0].mxu0
  %v2024 = vadd.f32 %v1659, %v2023
  %v2025 = vpop.f32.mrb[0].mxu0
  %v2026 = vadd.f32 %v1661, %v2025
  %2027 = vmatprep.mubr.f32.mxu0 0.0
  %v2028 = vand.u32 %v140, 4294901760
  %2029 = vmatmul.mubr.f32.gmra.mrb[0].mxu0 %v2028
  %v2030 = vpop.f32.mrb[0].mxu0
  %v2031 = vadd.f32 %v1668, %v2030
  %v2032 = vpop.f32.mrb[0].mxu0
  %v2033 = vadd.f32 %v1670, %v2032
  %2034 = vmatprep.mubr.f32.mxu0 0.0
  %v2035 = vand.u32 %v143, 4294901760
  %2036 = vmatmul.mubr.f32.gmra.mrb[0].mxu0 %v2035
  %v2037 = vpop.f32.mrb[0].mxu0
  %v2038 = vadd.f32 %v1677, %v2037
  %v2039 = vpop.f32.mrb[0].mxu0
  %v2040 = vadd.f32 %v1679, %v2039
  %2041 = vmatprep.mubr.f32.mxu0 0.0
  %v2042 = vand.u32 %v146, 4294901760
  %2043 = vmatmul.mubr.f32.gmra.mrb[0].mxu0 %v2042
  %v2044 = vpop.f32.mrb[0].mxu0
  %v2045 = vadd.f32 %v1686, %v2044
  %v2046 = vpop.f32.mrb[0].mxu0
  %v2047 = vadd.f32 %v1688, %v2046
  %2048 = vmatprep.mubr.f32.mxu0 0.0
  %v2049 = vand.u32 %v149, 4294901760
  %2050 = vmatmul.mubr.f32.gmra.mrb[0].mxu0 %v2049
  %v2051 = vpop.f32.mrb[0].mxu0
  %v2052 = vadd.f32 %v1695, %v2051
  %v2053 = vpop.f32.mrb[0].mxu0
  %v2054 = vadd.f32 %v1697, %v2053
  %2055 = vmatprep.mubr.f32.mxu0 0.0
  %v2056 = vand.u32 %v152, 4294901760
  %2057 = vmatmul.mubr.f32.gmra.mrb[0].mxu0 %v2056
  %v2058 = vpop.f32.mrb[0].mxu0
  %v2059 = vadd.f32 %v1704, %v2058
  %v2060 = vpop.f32.mrb[0].mxu0
  %v2061 = vadd.f32 %v1706, %v2060
  %2062 = vmatprep.mubr.f32.mxu0 0.0
  %v2063 = vand.u32 %v155, 4294901760
  %2064 = vmatmul.mubr.f32.gmra.mrb[0].mxu0 %v2063
  %v2065 = vpop.f32.mrb[0].mxu0
  %v2066 = vadd.f32 %v1713, %v2065
  %v2067 = vpop.f32.mrb[0].mxu0
  %v2068 = vadd.f32 %v1715, %v2067
  %2069 = vmatprep.mubr.f32.mxu0 0.0
  %v2070 = vand.u32 %v158, 4294901760
  %2071 = vmatmul.mubr.f32.gmra.mrb[0].mxu0 %v2070
  %v2072 = vpop.f32.mrb[0].mxu0
  %v2073 = vadd.f32 %v1722, %v2072
  %v2074 = vpop.f32.mrb[0].mxu0
  %v2075 = vadd.f32 %v1724, %v2074
  %2076 = vmatprep.mubr.f32.mxu0 0.0
  %v2077 = vand.u32 %v161, 4294901760
  %2078 = vmatmul.mubr.f32.gmra.mrb[0].mxu0 %v2077
  %v2079 = vpop.f32.mrb[0].mxu0
  %v2080 = vadd.f32 %v1731, %v2079
  %v2081 = vpop.f32.mrb[0].mxu0
  %v2082 = vadd.f32 %v1733, %v2081
  %2083 = vmatprep.mubr.f32.mxu0 0.0
  %v2084 = vand.u32 %v164, 4294901760
  %2085 = vmatmul.mubr.f32.gmra.mrb[0].mxu0 %v2084
  %v2086 = vpop.f32.mrb[0].mxu0
  %v2087 = vadd.f32 %v1740, %v2086
  %v2088 = vpop.f32.mrb[0].mxu0
  %v2089 = vadd.f32 %v1742, %v2088
  %2090 = vmatprep.mubr.f32.mxu0 0.0
  %v2091 = vand.u32 %v167, 4294901760
  %2092 = vmatmul.mubr.f32.gmra.mrb[0].mxu0 %v2091
  %v2093 = vpop.f32.mrb[0].mxu0
  %v2094 = vadd.f32 %v1749, %v2093
  %v2095 = vpop.f32.mrb[0].mxu0
  %v2096 = vadd.f32 %v1751, %v2095
  %2097 = vmatprep.mubr.f32.mxu0 0.0
  %v2098 = vand.u32 %v170, 4294901760
  %2099 = vmatmul.mubr.f32.gmra.mrb[0].mxu0 %v2098
  %v2100 = vpop.f32.mrb[0].mxu0
  %v2101 = vadd.f32 %v1758, %v2100
  %v2102 = vpop.f32.mrb[0].mxu0
  %v2103 = vadd.f32 %v1760, %v2102
  %2104 = vmatprep.mubr.f32.mxu0 0.0
  %v2105 = vand.u32 %v173, 4294901760
  %2106 = vmatmul.mubr.f32.gmra.mrb[0].mxu0 %v2105
  %v2107 = vpop.f32.mrb[0].mxu0
  %v2108 = vadd.f32 %v1767, %v2107
  %v2109 = vpop.f32.mrb[0].mxu0
  %v2110 = vadd.f32 %v1769, %v2109
  %2111 = vmatprep.mubr.f32.mxu0 0.0
  %v2112 = vand.u32 %v176, 4294901760
  %2113 = vmatmul.mubr.f32.gmra.mrb[0].mxu0 %v2112
  %v2114 = vpop.f32.mrb[0].mxu0
  %v2115 = vadd.f32 %v1776, %v2114
  %v2116 = vpop.f32.mrb[0].mxu0
  %v2117 = vadd.f32 %v1778, %v2116
  %2118 = vmatprep.mubr.f32.mxu0 0.0
  %v2119 = vand.u32 %v179, 4294901760
  %2120 = vmatmul.mubr.f32.gmra.mrb[0].mxu0 %v2119
  %v2121 = vpop.f32.mrb[0].mxu0
  %v2122 = vadd.f32 %v1785, %v2121
  %v2123 = vpop.f32.mrb[0].mxu0
  %v2124 = vadd.f32 %v1787, %v2123
  %2125 = vdwg.mxu0
  %v2126 = vand.u32 %v65, 4294901760
  %2127 = vmatprep.subr.mxu0 %v2126
  %v2128 = vand.u32 %v64, 4294901760
  %2129 = vmatpush1.msra.mxu0 %v2128
  %2130 = vmatprep.subr.mxu0 0.0
  %2131 = vmatpush1.msra.mxu0 0.0
  %2132 = vmatprep.subr.mxu0 0.0
  %2133 = vmatpush1.msra.mxu0 0.0
  %2134 = vmatprep.subr.mxu0 0.0
  %2135 = vmatpush1.msra.mxu0 0.0
  %2136 = vmatprep.subr.mxu0 0.0
  %2137 = vmatpush1.msra.mxu0 0.0
  %2138 = vmatprep.subr.mxu0 0.0
  %2139 = vmatpush1.msra.mxu0 0.0
  %2140 = vmatprep.subr.mxu0 0.0
  %2141 = vmatpush1.msra.mxu0 0.0
  %2142 = vmatprep.subr.mxu0 0.0
  %2143 = vmatpush1.msra.mxu0 0.0
  %2144 = vmatprep.subr.mxu0 0.0
  %2145 = vmatpush1.msra.mxu0 0.0
  %2146 = vmatprep.subr.mxu0 0.0
  %2147 = vmatpush1.msra.mxu0 0.0
  %2148 = vmatprep.subr.mxu0 0.0
  %2149 = vmatpush1.msra.mxu0 0.0
  %2150 = vmatprep.subr.mxu0 0.0
  %2151 = vmatpush1.msra.mxu0 0.0
  %2152 = vmatprep.subr.mxu0 0.0
  %2153 = vmatpush1.msra.mxu0 0.0
  %2154 = vmatprep.subr.mxu0 0.0
  %2155 = vmatpush1.msra.mxu0 0.0
  %2156 = vmatprep.subr.mxu0 0.0
  %2157 = vmatpush1.msra.mxu0 0.0
  %2158 = vmatprep.subr.mxu0 0.0
  %2159 = vmatpush1.msra.mxu0 0.0
  %2160 = vmatprep.subr.mxu0 0.0
  %2161 = vmatpush1.msra.mxu0 0.0
  %2162 = vmatprep.subr.mxu0 0.0
  %2163 = vmatpush1.msra.mxu0 0.0
  %2164 = vmatprep.subr.mxu0 0.0
  %2165 = vmatpush1.msra.mxu0 0.0
  %2166 = vmatprep.subr.mxu0 0.0
  %2167 = vmatpush1.msra.mxu0 0.0
  %2168 = vmatprep.subr.mxu0 0.0
  %2169 = vmatpush1.msra.mxu0 0.0
  %2170 = vmatprep.subr.mxu0 0.0
  %2171 = vmatpush1.msra.mxu0 0.0
  %2172 = vmatprep.subr.mxu0 0.0
  %2173 = vmatpush1.msra.mxu0 0.0
  %2174 = vmatprep.subr.mxu0 0.0
  %2175 = vmatpush1.msra.mxu0 0.0
  %2176 = vmatprep.subr.mxu0 0.0
  %2177 = vmatpush1.msra.mxu0 0.0
  %2178 = vmatprep.subr.mxu0 0.0
  %2179 = vmatpush1.msra.mxu0 0.0
  %2180 = vmatprep.subr.mxu0 0.0
  %2181 = vmatpush1.msra.mxu0 0.0
  %2182 = vmatprep.subr.mxu0 0.0
  %2183 = vmatpush1.msra.mxu0 0.0
  %2184 = vmatprep.subr.mxu0 0.0
  %2185 = vmatpush1.msra.mxu0 0.0
  %2186 = vmatprep.subr.mxu0 0.0
  %2187 = vmatpush1.msra.mxu0 0.0
  %2188 = vmatprep.subr.mxu0 0.0
  %2189 = vmatpush1.msra.mxu0 0.0
  %2190 = vmatprep.subr.mxu0 0.0
  %2191 = vmatpush1.msra.mxu0 0.0
  %2192 = vmatprep.mubr.f32.mxu0 0.0
  %v2193 = vand.u32 %v68, 4294901760
  %2194 = vmatmul.mubr.f32.gmra.mrb[0].mxu0 %v2193
  %v2195 = vpop.f32.mrb[0].mxu0
  %v2196 = vadd.f32 %v1863, %v2195
  %v2197 = vpop.f32.mrb[0].mxu0
  %v2198 = vadd.f32 %v1865, %v2197
  %2199 = vmatprep.mubr.f32.mxu0 0.0
  %v2200 = vand.u32 %v71, 4294901760
  %2201 = vmatmul.mubr.f32.gmra.mrb[0].mxu0 %v2200
  %v2202 = vpop.f32.mrb[0].mxu0
  %v2203 = vadd.f32 %v1870, %v2202
  %v2204 = vpop.f32.mrb[0].mxu0
  %v2205 = vadd.f32 %v1872, %v2204
  %2206 = vmatprep.mubr.f32.mxu0 0.0
  %v2207 = vand.u32 %v74, 4294901760
  %2208 = vmatmul.mubr.f32.gmra.mrb[0].mxu0 %v2207
  %v2209 = vpop.f32.mrb[0].mxu0
  %v2210 = vadd.f32 %v1877, %v2209
  %v2211 = vpop.f32.mrb[0].mxu0
  %v2212 = vadd.f32 %v1879, %v2211
  %2213 = vmatprep.mubr.f32.mxu0 0.0
  %v2214 = vand.u32 %v77, 4294901760
  %2215 = vmatmul.mubr.f32.gmra.mrb[0].mxu0 %v2214
  %v2216 = vpop.f32.mrb[0].mxu0
  %v2217 = vadd.f32 %v1884, %v2216
  %v2218 = vpop.f32.mrb[0].mxu0
  %v2219 = vadd.f32 %v1886, %v2218
  %2220 = vmatprep.mubr.f32.mxu0 0.0
  %v2221 = vand.u32 %v80, 4294901760
  %2222 = vmatmul.mubr.f32.gmra.mrb[0].mxu0 %v2221
  %v2223 = vpop.f32.mrb[0].mxu0
  %v2224 = vadd.f32 %v1891, %v2223
  %v2225 = vpop.f32.mrb[0].mxu0
  %v2226 = vadd.f32 %v1893, %v2225
  %2227 = vmatprep.mubr.f32.mxu0 0.0
  %v2228 = vand.u32 %v83, 4294901760
  %2229 = vmatmul.mubr.f32.gmra.mrb[0].mxu0 %v2228
  %v2230 = vpop.f32.mrb[0].mxu0
  %v2231 = vadd.f32 %v1898, %v2230
  %v2232 = vpop.f32.mrb[0].mxu0
  %v2233 = vadd.f32 %v1900, %v2232
  %2234 = vmatprep.mubr.f32.mxu0 0.0
  %v2235 = vand.u32 %v86, 4294901760
  %2236 = vmatmul.mubr.f32.gmra.mrb[0].mxu0 %v2235
  %v2237 = vpop.f32.mrb[0].mxu0
  %v2238 = vadd.f32 %v1905, %v2237
  %v2239 = vpop.f32.mrb[0].mxu0
  %v2240 = vadd.f32 %v1907, %v2239
  %2241 = vmatprep.mubr.f32.mxu0 0.0
  %v2242 = vand.u32 %v89, 4294901760
  %2243 = vmatmul.mubr.f32.gmra.mrb[0].mxu0 %v2242
  %v2244 = vpop.f32.mrb[0].mxu0
  %v2245 = vadd.f32 %v1912, %v2244
  %v2246 = vpop.f32.mrb[0].mxu0
  %v2247 = vadd.f32 %v1914, %v2246
  %2248 = vmatprep.mubr.f32.mxu0 0.0
  %v2249 = vand.u32 %v92, 4294901760
  %2250 = vmatmul.mubr.f32.gmra.mrb[0].mxu0 %v2249
  %v2251 = vpop.f32.mrb[0].mxu0
  %v2252 = vadd.f32 %v1919, %v2251
  %v2253 = vpop.f32.mrb[0].mxu0
  %v2254 = vadd.f32 %v1921, %v2253
  %2255 = vmatprep.mubr.f32.mxu0 0.0
  %v2256 = vand.u32 %v95, 4294901760
  %2257 = vmatmul.mubr.f32.gmra.mrb[0].mxu0 %v2256
  %v2258 = vpop.f32.mrb[0].mxu0
  %v2259 = vadd.f32 %v1926, %v2258
  %v2260 = vpop.f32.mrb[0].mxu0
  %v2261 = vadd.f32 %v1928, %v2260
  %2262 = vmatprep.mubr.f32.mxu0 0.0
  %v2263 = vand.u32 %v98, 4294901760
  %2264 = vmatmul.mubr.f32.gmra.mrb[0].mxu0 %v2263
  %v2265 = vpop.f32.mrb[0].mxu0
  %v2266 = vadd.f32 %v1933, %v2265
  %v2267 = vpop.f32.mrb[0].mxu0
  %v2268 = vadd.f32 %v1935, %v2267
  %2269 = vmatprep.mubr.f32.mxu0 0.0
  %v2270 = vand.u32 %v101, 4294901760
  %2271 = vmatmul.mubr.f32.gmra.mrb[0].mxu0 %v2270
  %v2272 = vpop.f32.mrb[0].mxu0
  %v2273 = vadd.f32 %v1940, %v2272
  %v2274 = vpop.f32.mrb[0].mxu0
  %v2275 = vadd.f32 %v1942, %v2274
  %2276 = vmatprep.mubr.f32.mxu0 0.0
  %v2277 = vand.u32 %v104, 4294901760
  %2278 = vmatmul.mubr.f32.gmra.mrb[0].mxu0 %v2277
  %v2279 = vpop.f32.mrb[0].mxu0
  %v2280 = vadd.f32 %v1947, %v2279
  %v2281 = vpop.f32.mrb[0].mxu0
  %v2282 = vadd.f32 %v1949, %v2281
  %2283 = vmatprep.mubr.f32.mxu0 0.0
  %v2284 = vand.u32 %v107, 4294901760
  %2285 = vmatmul.mubr.f32.gmra.mrb[0].mxu0 %v2284
  %v2286 = vpop.f32.mrb[0].mxu0
  %v2287 = vadd.f32 %v1954, %v2286
  %v2288 = vpop.f32.mrb[0].mxu0
  %v2289 = vadd.f32 %v1956, %v2288
  %2290 = vmatprep.mubr.f32.mxu0 0.0
  %v2291 = vand.u32 %v110, 4294901760
  %2292 = vmatmul.mubr.f32.gmra.mrb[0].mxu0 %v2291
  %v2293 = vpop.f32.mrb[0].mxu0
  %v2294 = vadd.f32 %v1961, %v2293
  %v2295 = vpop.f32.mrb[0].mxu0
  %v2296 = vadd.f32 %v1963, %v2295
  %2297 = vmatprep.mubr.f32.mxu0 0.0
  %v2298 = vand.u32 %v113, 4294901760
  %2299 = vmatmul.mubr.f32.gmra.mrb[0].mxu0 %v2298
  %v2300 = vpop.f32.mrb[0].mxu0
  %v2301 = vadd.f32 %v1968, %v2300
  %v2302 = vpop.f32.mrb[0].mxu0
  %v2303 = vadd.f32 %v1970, %v2302
  %2304 = vmatprep.mubr.f32.mxu0 0.0
  %v2305 = vand.u32 %v116, 4294901760
  %2306 = vmatmul.mubr.f32.gmra.mrb[0].mxu0 %v2305
  %v2307 = vpop.f32.mrb[0].mxu0
  %v2308 = vadd.f32 %v1975, %v2307
  %v2309 = vpop.f32.mrb[0].mxu0
  %v2310 = vadd.f32 %v1977, %v2309
  %2311 = vmatprep.mubr.f32.mxu0 0.0
  %v2312 = vand.u32 %v119, 4294901760
  %2313 = vmatmul.mubr.f32.gmra.mrb[0].mxu0 %v2312
  %v2314 = vpop.f32.mrb[0].mxu0
  %v2315 = vadd.f32 %v1982, %v2314
  %v2316 = vpop.f32.mrb[0].mxu0
  %v2317 = vadd.f32 %v1984, %v2316
  %2318 = vmatprep.mubr.f32.mxu0 0.0
  %v2319 = vand.u32 %v122, 4294901760
  %2320 = vmatmul.mubr.f32.gmra.mrb[0].mxu0 %v2319
  %v2321 = vpop.f32.mrb[0].mxu0
  %v2322 = vadd.f32 %v1989, %v2321
  %v2323 = vpop.f32.mrb[0].mxu0
  %v2324 = vadd.f32 %v1991, %v2323
  %2325 = vmatprep.mubr.f32.mxu0 0.0
  %v2326 = vand.u32 %v125, 4294901760
  %2327 = vmatmul.mubr.f32.gmra.mrb[0].mxu0 %v2326
  %v2328 = vpop.f32.mrb[0].mxu0
  %v2329 = vadd.f32 %v1996, %v2328
  %v2330 = vpop.f32.mrb[0].mxu0
  %v2331 = vadd.f32 %v1998, %v2330
  %2332 = vmatprep.mubr.f32.mxu0 0.0
  %v2333 = vand.u32 %v128, 4294901760
  %2334 = vmatmul.mubr.f32.gmra.mrb[0].mxu0 %v2333
  %v2335 = vpop.f32.mrb[0].mxu0
  %v2336 = vadd.f32 %v2003, %v2335
  %v2337 = vpop.f32.mrb[0].mxu0
  %v2338 = vadd.f32 %v2005, %v2337
  %2339 = vmatprep.mubr.f32.mxu0 0.0
  %v2340 = vand.u32 %v131, 4294901760
  %2341 = vmatmul.mubr.f32.gmra.mrb[0].mxu0 %v2340
  %v2342 = vpop.f32.mrb[0].mxu0
  %v2343 = vadd.f32 %v2010, %v2342
  %v2344 = vpop.f32.mrb[0].mxu0
  %v2345 = vadd.f32 %v2012, %v2344
  %2346 = vmatprep.mubr.f32.mxu0 0.0
  %v2347 = vand.u32 %v134, 4294901760
  %2348 = vmatmul.mubr.f32.gmra.mrb[0].mxu0 %v2347
  %v2349 = vpop.f32.mrb[0].mxu0
  %v2350 = vadd.f32 %v2017, %v2349
  %v2351 = vpop.f32.mrb[0].mxu0
  %v2352 = vadd.f32 %v2019, %v2351
  %2353 = vmatprep.mubr.f32.mxu0 0.0
  %v2354 = vand.u32 %v137, 4294901760
  %2355 = vmatmul.mubr.f32.gmra.mrb[0].mxu0 %v2354
  %v2356 = vpop.f32.mrb[0].mxu0
  %v2357 = vadd.f32 %v2024, %v2356
  %v2358 = vpop.f32.mrb[0].mxu0
  %v2359 = vadd.f32 %v2026, %v2358
  %2360 = vmatprep.mubr.f32.mxu0 0.0
  %v2361 = vand.u32 %v140, 4294901760
  %2362 = vmatmul.mubr.f32.gmra.mrb[0].mxu0 %v2361
  %v2363 = vpop.f32.mrb[0].mxu0
  %v2364 = vadd.f32 %v2031, %v2363
  %v2365 = vpop.f32.mrb[0].mxu0
  %v2366 = vadd.f32 %v2033, %v2365
  %2367 = vmatprep.mubr.f32.mxu0 0.0
  %v2368 = vand.u32 %v143, 4294901760
  %2369 = vmatmul.mubr.f32.gmra.mrb[0].mxu0 %v2368
  %v2370 = vpop.f32.mrb[0].mxu0
  %v2371 = vadd.f32 %v2038, %v2370
  %v2372 = vpop.f32.mrb[0].mxu0
  %v2373 = vadd.f32 %v2040, %v2372
  %2374 = vmatprep.mubr.f32.mxu0 0.0
  %v2375 = vand.u32 %v146, 4294901760
  %2376 = vmatmul.mubr.f32.gmra.mrb[0].mxu0 %v2375
  %v2377 = vpop.f32.mrb[0].mxu0
  %v2378 = vadd.f32 %v2045, %v2377
  %v2379 = vpop.f32.mrb[0].mxu0
  %v2380 = vadd.f32 %v2047, %v2379
  %2381 = vmatprep.mubr.f32.mxu0 0.0
  %v2382 = vand.u32 %v149, 4294901760
  %2383 = vmatmul.mubr.f32.gmra.mrb[0].mxu0 %v2382
  %v2384 = vpop.f32.mrb[0].mxu0
  %v2385 = vadd.f32 %v2052, %v2384
  %v2386 = vpop.f32.mrb[0].mxu0
  %v2387 = vadd.f32 %v2054, %v2386
  %2388 = vmatprep.mubr.f32.mxu0 0.0
  %v2389 = vand.u32 %v152, 4294901760
  %2390 = vmatmul.mubr.f32.gmra.mrb[0].mxu0 %v2389
  %v2391 = vpop.f32.mrb[0].mxu0
  %v2392 = vadd.f32 %v2059, %v2391
  %v2393 = vpop.f32.mrb[0].mxu0
  %v2394 = vadd.f32 %v2061, %v2393
  %2395 = vmatprep.mubr.f32.mxu0 0.0
  %v2396 = vand.u32 %v155, 4294901760
  %2397 = vmatmul.mubr.f32.gmra.mrb[0].mxu0 %v2396
  %v2398 = vpop.f32.mrb[0].mxu0
  %v2399 = vadd.f32 %v2066, %v2398
  %v2400 = vpop.f32.mrb[0].mxu0
  %v2401 = vadd.f32 %v2068, %v2400
  %2402 = vmatprep.mubr.f32.mxu0 0.0
  %v2403 = vand.u32 %v158, 4294901760
  %2404 = vmatmul.mubr.f32.gmra.mrb[0].mxu0 %v2403
  %v2405 = vpop.f32.mrb[0].mxu0
  %v2406 = vadd.f32 %v2073, %v2405
  %v2407 = vpop.f32.mrb[0].mxu0
  %v2408 = vadd.f32 %v2075, %v2407
  %2409 = vmatprep.mubr.f32.mxu0 0.0
  %v2410 = vand.u32 %v161, 4294901760
  %2411 = vmatmul.mubr.f32.gmra.mrb[0].mxu0 %v2410
  %v2412 = vpop.f32.mrb[0].mxu0
  %v2413 = vadd.f32 %v2080, %v2412
  %v2414 = vpop.f32.mrb[0].mxu0
  %v2415 = vadd.f32 %v2082, %v2414
  %2416 = vmatprep.mubr.f32.mxu0 0.0
  %v2417 = vand.u32 %v164, 4294901760
  %2418 = vmatmul.mubr.f32.gmra.mrb[0].mxu0 %v2417
  %v2419 = vpop.f32.mrb[0].mxu0
  %v2420 = vadd.f32 %v2087, %v2419
  %v2421 = vpop.f32.mrb[0].mxu0
  %v2422 = vadd.f32 %v2089, %v2421
  %2423 = vmatprep.mubr.f32.mxu0 0.0
  %v2424 = vand.u32 %v167, 4294901760
  %2425 = vmatmul.mubr.f32.gmra.mrb[0].mxu0 %v2424
  %v2426 = vpop.f32.mrb[0].mxu0
  %v2427 = vadd.f32 %v2094, %v2426
  %v2428 = vpop.f32.mrb[0].mxu0
  %v2429 = vadd.f32 %v2096, %v2428
  %2430 = vmatprep.mubr.f32.mxu0 0.0
  %v2431 = vand.u32 %v170, 4294901760
  %2432 = vmatmul.mubr.f32.gmra.mrb[0].mxu0 %v2431
  %v2433 = vpop.f32.mrb[0].mxu0
  %v2434 = vadd.f32 %v2101, %v2433
  %v2435 = vpop.f32.mrb[0].mxu0
  %v2436 = vadd.f32 %v2103, %v2435
  %2437 = vmatprep.mubr.f32.mxu0 0.0
  %v2438 = vand.u32 %v173, 4294901760
  %2439 = vmatmul.mubr.f32.gmra.mrb[0].mxu0 %v2438
  %v2440 = vpop.f32.mrb[0].mxu0
  %v2441 = vadd.f32 %v2108, %v2440
  %v2442 = vpop.f32.mrb[0].mxu0
  %v2443 = vadd.f32 %v2110, %v2442
  %2444 = vmatprep.mubr.f32.mxu0 0.0
  %v2445 = vand.u32 %v176, 4294901760
  %2446 = vmatmul.mubr.f32.gmra.mrb[0].mxu0 %v2445
  %v2447 = vpop.f32.mrb[0].mxu0
  %v2448 = vadd.f32 %v2115, %v2447
  %v2449 = vpop.f32.mrb[0].mxu0
  %v2450 = vadd.f32 %v2117, %v2449
  %2451 = vmatprep.mubr.f32.mxu0 0.0
  %v2452 = vand.u32 %v179, 4294901760
  %2453 = vmatmul.mubr.f32.gmra.mrb[0].mxu0 %v2452
  %v2454 = vpop.f32.mrb[0].mxu0
  %v2455 = vadd.f32 %v2122, %v2454
  %v2456 = vpop.f32.mrb[0].mxu0
  %v2457 = vadd.f32 %v2124, %v2456
  %2458 = vdwg.mxu0
  %v2459 = vld [vmem:[%s3] sm:$0xff]
  %v2460 = vld [vmem:[%s3 + $0x8] sm:$0xff]
  %v2461 = vld [vmem:[%s3 + $0x10] sm:$0xff]
  %v2462 = vld [vmem:[%s3 + $0x18] sm:$0xff]
  %v2463 = vld [vmem:[%s3 + $0x20] sm:$0xff]
  %v2464 = vld [vmem:[%s3 + $0x28] sm:$0xff]
  %v2465 = vld [vmem:[%s3 + $0x30] sm:$0xff]
  %v2466 = vld [vmem:[%s3 + $0x38] sm:$0xff]
  %v2467 = vld [vmem:[%s3 + $0x40] sm:$0xff]
  %v2468 = vld [vmem:[%s3 + $0x48] sm:$0xff]
  %v2469 = vld [vmem:[%s3 + $0x50] sm:$0xff]
  %v2470 = vld [vmem:[%s3 + $0x58] sm:$0xff]
  %v2471 = vld [vmem:[%s3 + $0x60] sm:$0xff]
  %v2472 = vld [vmem:[%s3 + $0x68] sm:$0xff]
  %v2473 = vld [vmem:[%s3 + $0x70] sm:$0xff]
  %v2474 = vld [vmem:[%s3 + $0x78] sm:$0xff]
  %v2475 = vld [vmem:[%s3 + $0x80] sm:$0xff]
  %v2476 = vld [vmem:[%s3 + $0x88] sm:$0xff]
  %v2477 = vld [vmem:[%s3 + $0x90] sm:$0xff]
  %v2478 = vld [vmem:[%s3 + $0x98] sm:$0xff]
  %v2479 = vld [vmem:[%s3 + $0xa0] sm:$0xff]
  %v2480 = vld [vmem:[%s3 + $0xa8] sm:$0xff]
  %v2481 = vld [vmem:[%s3 + $0xb0] sm:$0xff]
  %v2482 = vld [vmem:[%s3 + $0xb8] sm:$0xff]
  %v2483 = vld [vmem:[%s3 + $0xc0] sm:$0xff]
  %v2484 = vld [vmem:[%s3 + $0xc8] sm:$0xff]
  %v2485 = vld [vmem:[%s3 + $0xd0] sm:$0xff]
  %v2486 = vld [vmem:[%s3 + $0xd8] sm:$0xff]
  %v2487 = vld [vmem:[%s3 + $0xe0] sm:$0xff]
  %v2488 = vld [vmem:[%s3 + $0xe8] sm:$0xff]
  %v2489 = vld [vmem:[%s3 + $0xf0] sm:$0xff]
  %v2490 = vld [vmem:[%s3 + $0xf8] sm:$0xff]
  %v2491 = vld [vmem:[%s3 + $0x100] sm:$0xff]
  %v2492 = vld [vmem:[%s3 + $0x108] sm:$0xff]
  %v2493 = vld [vmem:[%s3 + $0x110] sm:$0xff]
  %v2494 = vld [vmem:[%s3 + $0x118] sm:$0xff]
  %v2495 = vld [vmem:[%s3 + $0x120] sm:$0xff]
  %v2496 = vld [vmem:[%s3 + $0x128] sm:$0xff]
  %v2497 = vld [vmem:[%s4] sm:$0x3]
  %2499 = vset.pattern.permute.xlu0 0
  %2500 = vperm.xlu0 %2499, %v2459
  %v2501 = vpop.permute.xlu0 %2500
  %2504 = vset.pattern.permute.xlu0 0
  %2505 = vperm.xlu0 %2504, %v2460
  %v2506 = vpop.permute.xlu0 %2505
  %2509 = vset.pattern.permute.xlu0 0
  %2510 = vperm.xlu0 %2509, %v2461
  %v2511 = vpop.permute.xlu0 %2510
  %2514 = vset.pattern.permute.xlu0 0
  %2515 = vperm.xlu0 %2514, %v2462
  %v2516 = vpop.permute.xlu0 %2515
  %2519 = vset.pattern.permute.xlu0 0
  %2520 = vperm.xlu0 %2519, %v2463
  %v2521 = vpop.permute.xlu0 %2520
  %2524 = vset.pattern.permute.xlu0 0
  %2525 = vperm.xlu0 %2524, %v2464
  %v2526 = vpop.permute.xlu0 %2525
  %2529 = vset.pattern.permute.xlu0 0
  %2530 = vperm.xlu0 %2529, %v2465
  %v2531 = vpop.permute.xlu0 %2530
  %2534 = vset.pattern.permute.xlu0 0
  %2535 = vperm.xlu0 %2534, %v2466
  %v2536 = vpop.permute.xlu0 %2535
  %2539 = vset.pattern.permute.xlu0 0
  %2540 = vperm.xlu0 %2539, %v2467
  %v2541 = vpop.permute.xlu0 %2540
  %2544 = vset.pattern.permute.xlu0 0
  %2545 = vperm.xlu0 %2544, %v2468
  %v2546 = vpop.permute.xlu0 %2545
  %2549 = vset.pattern.permute.xlu0 0
  %2550 = vperm.xlu0 %2549, %v2469
  %v2551 = vpop.permute.xlu0 %2550
  %2554 = vset.pattern.permute.xlu0 0
  %2555 = vperm.xlu0 %2554, %v2470
  %v2556 = vpop.permute.xlu0 %2555
  %2559 = vset.pattern.permute.xlu0 0
  %2560 = vperm.xlu0 %2559, %v2471
  %v2561 = vpop.permute.xlu0 %2560
  %2564 = vset.pattern.permute.xlu0 0
  %2565 = vperm.xlu0 %2564, %v2472
  %v2566 = vpop.permute.xlu0 %2565
  %2569 = vset.pattern.permute.xlu0 0
  %2570 = vperm.xlu0 %2569, %v2473
  %v2571 = vpop.permute.xlu0 %2570
  %2574 = vset.pattern.permute.xlu0 0
  %2575 = vperm.xlu0 %2574, %v2474
  %v2576 = vpop.permute.xlu0 %2575
  %2579 = vset.pattern.permute.xlu0 0
  %2580 = vperm.xlu0 %2579, %v2475
  %v2581 = vpop.permute.xlu0 %2580
  %2584 = vset.pattern.permute.xlu0 0
  %2585 = vperm.xlu0 %2584, %v2476
  %v2586 = vpop.permute.xlu0 %2585
  %2589 = vset.pattern.permute.xlu0 0
  %2590 = vperm.xlu0 %2589, %v2477
  %v2591 = vpop.permute.xlu0 %2590
  %2594 = vset.pattern.permute.xlu0 0
  %2595 = vperm.xlu0 %2594, %v2478
  %v2596 = vpop.permute.xlu0 %2595
  %2599 = vset.pattern.permute.xlu0 0
  %2600 = vperm.xlu0 %2599, %v2479
  %v2601 = vpop.permute.xlu0 %2600
  %2604 = vset.pattern.permute.xlu0 0
  %2605 = vperm.xlu0 %2604, %v2480
  %v2606 = vpop.permute.xlu0 %2605
  %2609 = vset.pattern.permute.xlu0 0
  %2610 = vperm.xlu0 %2609, %v2481
  %v2611 = vpop.permute.xlu0 %2610
  %2614 = vset.pattern.permute.xlu0 0
  %2615 = vperm.xlu0 %2614, %v2482
  %v2616 = vpop.permute.xlu0 %2615
  %2619 = vset.pattern.permute.xlu0 0
  %2620 = vperm.xlu0 %2619, %v2483
  %v2621 = vpop.permute.xlu0 %2620
  %2624 = vset.pattern.permute.xlu0 0
  %2625 = vperm.xlu0 %2624, %v2484
  %v2626 = vpop.permute.xlu0 %2625
  %2629 = vset.pattern.permute.xlu0 0
  %2630 = vperm.xlu0 %2629, %v2485
  %v2631 = vpop.permute.xlu0 %2630
  %2634 = vset.pattern.permute.xlu0 0
  %2635 = vperm.xlu0 %2634, %v2486
  %v2636 = vpop.permute.xlu0 %2635
  %2639 = vset.pattern.permute.xlu0 0
  %2640 = vperm.xlu0 %2639, %v2487
  %v2641 = vpop.permute.xlu0 %2640
  %2644 = vset.pattern.permute.xlu0 0
  %2645 = vperm.xlu0 %2644, %v2488
  %v2646 = vpop.permute.xlu0 %2645
  %2649 = vset.pattern.permute.xlu0 0
  %2650 = vperm.xlu0 %2649, %v2489
  %v2651 = vpop.permute.xlu0 %2650
  %2654 = vset.pattern.permute.xlu0 0
  %2655 = vperm.xlu0 %2654, %v2490
  %v2656 = vpop.permute.xlu0 %2655
  %2659 = vset.pattern.permute.xlu0 0
  %2660 = vperm.xlu0 %2659, %v2491
  %v2661 = vpop.permute.xlu0 %2660
  %2664 = vset.pattern.permute.xlu0 0
  %2665 = vperm.xlu0 %2664, %v2492
  %v2666 = vpop.permute.xlu0 %2665
  %2669 = vset.pattern.permute.xlu0 0
  %2670 = vperm.xlu0 %2669, %v2493
  %v2671 = vpop.permute.xlu0 %2670
  %2674 = vset.pattern.permute.xlu0 0
  %2675 = vperm.xlu0 %2674, %v2494
  %v2676 = vpop.permute.xlu0 %2675
  %2679 = vset.pattern.permute.xlu0 0
  %2680 = vperm.xlu0 %2679, %v2495
  %v2681 = vpop.permute.xlu0 %2680
  %2684 = vset.pattern.permute.xlu0 0
  %2685 = vperm.xlu0 %2684, %v2496
  %v2686 = vpop.permute.xlu0 %2685
  %v2689 = vlaneseq
  %v2690 = vshrl.u32 %v2689, 7
  %v2691 = vsub.s32 0, %v2690
  %v2692 = vrot.slane %v2497, %v2691
  %v2693 = vlaneseq
  %v2694 = vshrl.u32 %v2693, 7
  %v2695 = vsub.s32 1, %v2694
  %v2696 = vrot.slane %v2497, %v2695
  %v2699 = vadd.f32 %v2501, %v2692
  %v2700 = vadd.f32 %v2501, %v2696
  %v2701 = vadd.f32 %v2506, %v2692
  %v2702 = vadd.f32 %v2506, %v2696
  %v2703 = vadd.f32 %v2511, %v2692
  %v2704 = vadd.f32 %v2511, %v2696
  %v2705 = vadd.f32 %v2516, %v2692
  %v2706 = vadd.f32 %v2516, %v2696
  %v2707 = vadd.f32 %v2521, %v2692
  %v2708 = vadd.f32 %v2521, %v2696
  %v2709 = vadd.f32 %v2526, %v2692
  %v2710 = vadd.f32 %v2526, %v2696
  %v2711 = vadd.f32 %v2531, %v2692
  %v2712 = vadd.f32 %v2531, %v2696
  %v2713 = vadd.f32 %v2536, %v2692
  %v2714 = vadd.f32 %v2536, %v2696
  %v2715 = vadd.f32 %v2541, %v2692
  %v2716 = vadd.f32 %v2541, %v2696
  %v2717 = vadd.f32 %v2546, %v2692
  %v2718 = vadd.f32 %v2546, %v2696
  %v2719 = vadd.f32 %v2551, %v2692
  %v2720 = vadd.f32 %v2551, %v2696
  %v2721 = vadd.f32 %v2556, %v2692
  %v2722 = vadd.f32 %v2556, %v2696
  %v2723 = vadd.f32 %v2561, %v2692
  %v2724 = vadd.f32 %v2561, %v2696
  %v2725 = vadd.f32 %v2566, %v2692
  %v2726 = vadd.f32 %v2566, %v2696
  %v2727 = vadd.f32 %v2571, %v2692
  %v2728 = vadd.f32 %v2571, %v2696
  %v2729 = vadd.f32 %v2576, %v2692
  %v2730 = vadd.f32 %v2576, %v2696
  %v2731 = vadd.f32 %v2581, %v2692
  %v2732 = vadd.f32 %v2581, %v2696
  %v2733 = vadd.f32 %v2586, %v2692
  %v2734 = vadd.f32 %v2586, %v2696
  %v2735 = vadd.f32 %v2591, %v2692
  %v2736 = vadd.f32 %v2591, %v2696
  %v2737 = vadd.f32 %v2596, %v2692
  %v2738 = vadd.f32 %v2596, %v2696
  %v2739 = vadd.f32 %v2601, %v2692
  %v2740 = vadd.f32 %v2601, %v2696
  %v2741 = vadd.f32 %v2606, %v2692
  %v2742 = vadd.f32 %v2606, %v2696
  %v2743 = vadd.f32 %v2611, %v2692
  %v2744 = vadd.f32 %v2611, %v2696
  %v2745 = vadd.f32 %v2616, %v2692
  %v2746 = vadd.f32 %v2616, %v2696
  %v2747 = vadd.f32 %v2621, %v2692
  %v2748 = vadd.f32 %v2621, %v2696
  %v2749 = vadd.f32 %v2626, %v2692
  %v2750 = vadd.f32 %v2626, %v2696
  %v2751 = vadd.f32 %v2631, %v2692
  %v2752 = vadd.f32 %v2631, %v2696
  %v2753 = vadd.f32 %v2636, %v2692
  %v2754 = vadd.f32 %v2636, %v2696
  %v2755 = vadd.f32 %v2641, %v2692
  %v2756 = vadd.f32 %v2641, %v2696
  %v2757 = vadd.f32 %v2646, %v2692
  %v2758 = vadd.f32 %v2646, %v2696
  %v2759 = vadd.f32 %v2651, %v2692
  %v2760 = vadd.f32 %v2651, %v2696
  %v2761 = vadd.f32 %v2656, %v2692
  %v2762 = vadd.f32 %v2656, %v2696
  %v2763 = vadd.f32 %v2661, %v2692
  %v2764 = vadd.f32 %v2661, %v2696
  %v2765 = vadd.f32 %v2666, %v2692
  %v2766 = vadd.f32 %v2666, %v2696
  %v2767 = vadd.f32 %v2671, %v2692
  %v2768 = vadd.f32 %v2671, %v2696
  %v2769 = vadd.f32 %v2676, %v2692
  %v2770 = vadd.f32 %v2676, %v2696
  %v2771 = vadd.f32 %v2681, %v2692
  %v2772 = vadd.f32 %v2681, %v2696
  %v2773 = vadd.f32 %v2686, %v2692
  %v2774 = vadd.f32 %v2686, %v2696
  %v2775 = vmul.f32 %v2196, 2.0
  %v2776 = vmul.f32 %v2198, 2.0
  %v2777 = vmul.f32 %v2203, 2.0
  %v2778 = vmul.f32 %v2205, 2.0
  %v2779 = vmul.f32 %v2210, 2.0
  %v2780 = vmul.f32 %v2212, 2.0
  %v2781 = vmul.f32 %v2217, 2.0
  %v2782 = vmul.f32 %v2219, 2.0
  %v2783 = vmul.f32 %v2224, 2.0
  %v2784 = vmul.f32 %v2226, 2.0
  %v2785 = vmul.f32 %v2231, 2.0
  %v2786 = vmul.f32 %v2233, 2.0
  %v2787 = vmul.f32 %v2238, 2.0
  %v2788 = vmul.f32 %v2240, 2.0
  %v2789 = vmul.f32 %v2245, 2.0
  %v2790 = vmul.f32 %v2247, 2.0
  %v2791 = vmul.f32 %v2252, 2.0
  %v2792 = vmul.f32 %v2254, 2.0
  %v2793 = vmul.f32 %v2259, 2.0
  %v2794 = vmul.f32 %v2261, 2.0
  %v2795 = vmul.f32 %v2266, 2.0
  %v2796 = vmul.f32 %v2268, 2.0
  %v2797 = vmul.f32 %v2273, 2.0
  %v2798 = vmul.f32 %v2275, 2.0
  %v2799 = vmul.f32 %v2280, 2.0
  %v2800 = vmul.f32 %v2282, 2.0
  %v2801 = vmul.f32 %v2287, 2.0
  %v2802 = vmul.f32 %v2289, 2.0
  %v2803 = vmul.f32 %v2294, 2.0
  %v2804 = vmul.f32 %v2296, 2.0
  %v2805 = vmul.f32 %v2301, 2.0
  %v2806 = vmul.f32 %v2303, 2.0
  %v2807 = vmul.f32 %v2308, 2.0
  %v2808 = vmul.f32 %v2310, 2.0
  %v2809 = vmul.f32 %v2315, 2.0
  %v2810 = vmul.f32 %v2317, 2.0
  %v2811 = vmul.f32 %v2322, 2.0
  %v2812 = vmul.f32 %v2324, 2.0
  %v2813 = vmul.f32 %v2329, 2.0
  %v2814 = vmul.f32 %v2331, 2.0
  %v2815 = vmul.f32 %v2336, 2.0
  %v2816 = vmul.f32 %v2338, 2.0
  %v2817 = vmul.f32 %v2343, 2.0
  %v2818 = vmul.f32 %v2345, 2.0
  %v2819 = vmul.f32 %v2350, 2.0
  %v2820 = vmul.f32 %v2352, 2.0
  %v2821 = vmul.f32 %v2357, 2.0
  %v2822 = vmul.f32 %v2359, 2.0
  %v2823 = vmul.f32 %v2364, 2.0
  %v2824 = vmul.f32 %v2366, 2.0
  %v2825 = vmul.f32 %v2371, 2.0
  %v2826 = vmul.f32 %v2373, 2.0
  %v2827 = vmul.f32 %v2378, 2.0
  %v2828 = vmul.f32 %v2380, 2.0
  %v2829 = vmul.f32 %v2385, 2.0
  %v2830 = vmul.f32 %v2387, 2.0
  %v2831 = vmul.f32 %v2392, 2.0
  %v2832 = vmul.f32 %v2394, 2.0
  %v2833 = vmul.f32 %v2399, 2.0
  %v2834 = vmul.f32 %v2401, 2.0
  %v2835 = vmul.f32 %v2406, 2.0
  %v2836 = vmul.f32 %v2408, 2.0
  %v2837 = vmul.f32 %v2413, 2.0
  %v2838 = vmul.f32 %v2415, 2.0
  %v2839 = vmul.f32 %v2420, 2.0
  %v2840 = vmul.f32 %v2422, 2.0
  %v2841 = vmul.f32 %v2427, 2.0
  %v2842 = vmul.f32 %v2429, 2.0
  %v2843 = vmul.f32 %v2434, 2.0
  %v2844 = vmul.f32 %v2436, 2.0
  %v2845 = vmul.f32 %v2441, 2.0
  %v2846 = vmul.f32 %v2443, 2.0
  %v2847 = vmul.f32 %v2448, 2.0
  %v2848 = vmul.f32 %v2450, 2.0
  %v2849 = vmul.f32 %v2455, 2.0
  %v2850 = vmul.f32 %v2457, 2.0
  %v2851 = vsub.f32 %v2699, %v2775
  %v2852 = vsub.f32 %v2700, %v2776
  %v2853 = vsub.f32 %v2701, %v2777
  %v2854 = vsub.f32 %v2702, %v2778
  %v2855 = vsub.f32 %v2703, %v2779
  %v2856 = vsub.f32 %v2704, %v2780
  %v2857 = vsub.f32 %v2705, %v2781
  %v2858 = vsub.f32 %v2706, %v2782
  %v2859 = vsub.f32 %v2707, %v2783
  %v2860 = vsub.f32 %v2708, %v2784
  %v2861 = vsub.f32 %v2709, %v2785
  %v2862 = vsub.f32 %v2710, %v2786
  %v2863 = vsub.f32 %v2711, %v2787
  %v2864 = vsub.f32 %v2712, %v2788
  %v2865 = vsub.f32 %v2713, %v2789
  %v2866 = vsub.f32 %v2714, %v2790
  %v2867 = vsub.f32 %v2715, %v2791
  %v2868 = vsub.f32 %v2716, %v2792
  %v2869 = vsub.f32 %v2717, %v2793
  %v2870 = vsub.f32 %v2718, %v2794
  %v2871 = vsub.f32 %v2719, %v2795
  %v2872 = vsub.f32 %v2720, %v2796
  %v2873 = vsub.f32 %v2721, %v2797
  %v2874 = vsub.f32 %v2722, %v2798
  %v2875 = vsub.f32 %v2723, %v2799
  %v2876 = vsub.f32 %v2724, %v2800
  %v2877 = vsub.f32 %v2725, %v2801
  %v2878 = vsub.f32 %v2726, %v2802
  %v2879 = vsub.f32 %v2727, %v2803
  %v2880 = vsub.f32 %v2728, %v2804
  %v2881 = vsub.f32 %v2729, %v2805
  %v2882 = vsub.f32 %v2730, %v2806
  %v2883 = vsub.f32 %v2731, %v2807
  %v2884 = vsub.f32 %v2732, %v2808
  %v2885 = vsub.f32 %v2733, %v2809
  %v2886 = vsub.f32 %v2734, %v2810
  %v2887 = vsub.f32 %v2735, %v2811
  %v2888 = vsub.f32 %v2736, %v2812
  %v2889 = vsub.f32 %v2737, %v2813
  %v2890 = vsub.f32 %v2738, %v2814
  %v2891 = vsub.f32 %v2739, %v2815
  %v2892 = vsub.f32 %v2740, %v2816
  %v2893 = vsub.f32 %v2741, %v2817
  %v2894 = vsub.f32 %v2742, %v2818
  %v2895 = vsub.f32 %v2743, %v2819
  %v2896 = vsub.f32 %v2744, %v2820
  %v2897 = vsub.f32 %v2745, %v2821
  %v2898 = vsub.f32 %v2746, %v2822
  %v2899 = vsub.f32 %v2747, %v2823
  %v2900 = vsub.f32 %v2748, %v2824
  %v2901 = vsub.f32 %v2749, %v2825
  %v2902 = vsub.f32 %v2750, %v2826
  %v2903 = vsub.f32 %v2751, %v2827
  %v2904 = vsub.f32 %v2752, %v2828
  %v2905 = vsub.f32 %v2753, %v2829
  %v2906 = vsub.f32 %v2754, %v2830
  %v2907 = vsub.f32 %v2755, %v2831
  %v2908 = vsub.f32 %v2756, %v2832
  %v2909 = vsub.f32 %v2757, %v2833
  %v2910 = vsub.f32 %v2758, %v2834
  %v2911 = vsub.f32 %v2759, %v2835
  %v2912 = vsub.f32 %v2760, %v2836
  %v2913 = vsub.f32 %v2761, %v2837
  %v2914 = vsub.f32 %v2762, %v2838
  %v2915 = vsub.f32 %v2763, %v2839
  %v2916 = vsub.f32 %v2764, %v2840
  %v2917 = vsub.f32 %v2765, %v2841
  %v2918 = vsub.f32 %v2766, %v2842
  %v2919 = vsub.f32 %v2767, %v2843
  %v2920 = vsub.f32 %v2768, %v2844
  %v2921 = vsub.f32 %v2769, %v2845
  %v2922 = vsub.f32 %v2770, %v2846
  %v2923 = vsub.f32 %v2771, %v2847
  %v2924 = vsub.f32 %v2772, %v2848
  %v2925 = vsub.f32 %v2773, %v2849
  %v2926 = vsub.f32 %v2774, %v2850
  %v2927 = vmax.f32 %v2851, 0.0
  %v2928 = vmax.f32 %v2852, 0.0
  %v2929 = vmax.f32 %v2853, 0.0
  %v2930 = vmax.f32 %v2854, 0.0
  %v2931 = vmax.f32 %v2855, 0.0
  %v2932 = vmax.f32 %v2856, 0.0
  %v2933 = vmax.f32 %v2857, 0.0
  %v2934 = vmax.f32 %v2858, 0.0
  %v2935 = vmax.f32 %v2859, 0.0
  %v2936 = vmax.f32 %v2860, 0.0
  %v2937 = vmax.f32 %v2861, 0.0
  %v2938 = vmax.f32 %v2862, 0.0
  %v2939 = vmax.f32 %v2863, 0.0
  %v2940 = vmax.f32 %v2864, 0.0
  %v2941 = vmax.f32 %v2865, 0.0
  %v2942 = vmax.f32 %v2866, 0.0
  %v2943 = vmax.f32 %v2867, 0.0
  %v2944 = vmax.f32 %v2868, 0.0
  %v2945 = vmax.f32 %v2869, 0.0
  %v2946 = vmax.f32 %v2870, 0.0
  %v2947 = vmax.f32 %v2871, 0.0
  %v2948 = vmax.f32 %v2872, 0.0
  %v2949 = vmax.f32 %v2873, 0.0
  %v2950 = vmax.f32 %v2874, 0.0
  %v2951 = vmax.f32 %v2875, 0.0
  %v2952 = vmax.f32 %v2876, 0.0
  %v2953 = vmax.f32 %v2877, 0.0
  %v2954 = vmax.f32 %v2878, 0.0
  %v2955 = vmax.f32 %v2879, 0.0
  %v2956 = vmax.f32 %v2880, 0.0
  %v2957 = vmax.f32 %v2881, 0.0
  %v2958 = vmax.f32 %v2882, 0.0
  %v2959 = vmax.f32 %v2883, 0.0
  %v2960 = vmax.f32 %v2884, 0.0
  %v2961 = vmax.f32 %v2885, 0.0
  %v2962 = vmax.f32 %v2886, 0.0
  %v2963 = vmax.f32 %v2887, 0.0
  %v2964 = vmax.f32 %v2888, 0.0
  %v2965 = vmax.f32 %v2889, 0.0
  %v2966 = vmax.f32 %v2890, 0.0
  %v2967 = vmax.f32 %v2891, 0.0
  %v2968 = vmax.f32 %v2892, 0.0
  %v2969 = vmax.f32 %v2893, 0.0
  %v2970 = vmax.f32 %v2894, 0.0
  %v2971 = vmax.f32 %v2895, 0.0
  %v2972 = vmax.f32 %v2896, 0.0
  %v2973 = vmax.f32 %v2897, 0.0
  %v2974 = vmax.f32 %v2898, 0.0
  %v2975 = vmax.f32 %v2899, 0.0
  %v2976 = vmax.f32 %v2900, 0.0
  %v2977 = vmax.f32 %v2901, 0.0
  %v2978 = vmax.f32 %v2902, 0.0
  %v2979 = vmax.f32 %v2903, 0.0
  %v2980 = vmax.f32 %v2904, 0.0
  %v2981 = vmax.f32 %v2905, 0.0
  %v2982 = vmax.f32 %v2906, 0.0
  %v2983 = vmax.f32 %v2907, 0.0
  %v2984 = vmax.f32 %v2908, 0.0
  %v2985 = vmax.f32 %v2909, 0.0
  %v2986 = vmax.f32 %v2910, 0.0
  %v2987 = vmax.f32 %v2911, 0.0
  %v2988 = vmax.f32 %v2912, 0.0
  %v2989 = vmax.f32 %v2913, 0.0
  %v2990 = vmax.f32 %v2914, 0.0
  %v2991 = vmax.f32 %v2915, 0.0
  %v2992 = vmax.f32 %v2916, 0.0
  %v2993 = vmax.f32 %v2917, 0.0
  %v2994 = vmax.f32 %v2918, 0.0
  %v2995 = vmax.f32 %v2919, 0.0
  %v2996 = vmax.f32 %v2920, 0.0
  %v2997 = vmax.f32 %v2921, 0.0
  %v2998 = vmax.f32 %v2922, 0.0
  %v2999 = vmax.f32 %v2923, 0.0
  %v3000 = vmax.f32 %v2924, 0.0
  %v3001 = vmax.f32 %v2925, 0.0
  %v3002 = vmax.f32 %v2926, 0.0
  %v3003 = vstv %s25
  %v3004 = vmul.f32 %v2927, %v3003
  %v3005 = vmul.f32 %v2928, %v3003
  %v3006 = vmul.f32 %v2929, %v3003
  %v3007 = vmul.f32 %v2930, %v3003
  %v3008 = vmul.f32 %v2931, %v3003
  %v3009 = vmul.f32 %v2932, %v3003
  %v3010 = vmul.f32 %v2933, %v3003
  %v3011 = vmul.f32 %v2934, %v3003
  %v3012 = vmul.f32 %v2935, %v3003
  %v3013 = vmul.f32 %v2936, %v3003
  %v3014 = vmul.f32 %v2937, %v3003
  %v3015 = vmul.f32 %v2938, %v3003
  %v3016 = vmul.f32 %v2939, %v3003
  %v3017 = vmul.f32 %v2940, %v3003
  %v3018 = vmul.f32 %v2941, %v3003
  %v3019 = vmul.f32 %v2942, %v3003
  %v3020 = vmul.f32 %v2943, %v3003
  %v3021 = vmul.f32 %v2944, %v3003
  %v3022 = vmul.f32 %v2945, %v3003
  %v3023 = vmul.f32 %v2946, %v3003
  %v3024 = vmul.f32 %v2947, %v3003
  %v3025 = vmul.f32 %v2948, %v3003
  %v3026 = vmul.f32 %v2949, %v3003
  %v3027 = vmul.f32 %v2950, %v3003
  %v3028 = vmul.f32 %v2951, %v3003
  %v3029 = vmul.f32 %v2952, %v3003
  %v3030 = vmul.f32 %v2953, %v3003
  %v3031 = vmul.f32 %v2954, %v3003
  %v3032 = vmul.f32 %v2955, %v3003
  %v3033 = vmul.f32 %v2956, %v3003
  %v3034 = vmul.f32 %v2957, %v3003
  %v3035 = vmul.f32 %v2958, %v3003
  %v3036 = vmul.f32 %v2959, %v3003
  %v3037 = vmul.f32 %v2960, %v3003
  %v3038 = vmul.f32 %v2961, %v3003
  %v3039 = vmul.f32 %v2962, %v3003
  %v3040 = vmul.f32 %v2963, %v3003
  %v3041 = vmul.f32 %v2964, %v3003
  %v3042 = vmul.f32 %v2965, %v3003
  %v3043 = vmul.f32 %v2966, %v3003
  %v3044 = vmul.f32 %v2967, %v3003
  %v3045 = vmul.f32 %v2968, %v3003
  %v3046 = vmul.f32 %v2969, %v3003
  %v3047 = vmul.f32 %v2970, %v3003
  %v3048 = vmul.f32 %v2971, %v3003
  %v3049 = vmul.f32 %v2972, %v3003
  %v3050 = vmul.f32 %v2973, %v3003
  %v3051 = vmul.f32 %v2974, %v3003
  %v3052 = vmul.f32 %v2975, %v3003
  %v3053 = vmul.f32 %v2976, %v3003
  %v3054 = vmul.f32 %v2977, %v3003
  %v3055 = vmul.f32 %v2978, %v3003
  %v3056 = vmul.f32 %v2979, %v3003
  %v3057 = vmul.f32 %v2980, %v3003
  %v3058 = vmul.f32 %v2981, %v3003
  %v3059 = vmul.f32 %v2982, %v3003
  %v3060 = vmul.f32 %v2983, %v3003
  %v3061 = vmul.f32 %v2984, %v3003
  %v3062 = vmul.f32 %v2985, %v3003
  %v3063 = vmul.f32 %v2986, %v3003
  %v3064 = vmul.f32 %v2987, %v3003
  %v3065 = vmul.f32 %v2988, %v3003
  %v3066 = vmul.f32 %v2989, %v3003
  %v3067 = vmul.f32 %v2990, %v3003
  %v3068 = vmul.f32 %v2991, %v3003
  %v3069 = vmul.f32 %v2992, %v3003
  %v3070 = vmul.f32 %v2993, %v3003
  %v3071 = vmul.f32 %v2994, %v3003
  %v3072 = vmul.f32 %v2995, %v3003
  %v3073 = vmul.f32 %v2996, %v3003
  %v3074 = vmul.f32 %v2997, %v3003
  %v3075 = vmul.f32 %v2998, %v3003
  %v3076 = vmul.f32 %v2999, %v3003
  %v3077 = vmul.f32 %v3000, %v3003
  %v3078 = vmul.f32 %v3001, %v3003
  %v3079 = vmul.f32 %v3002, %v3003
  %v3080 = vmul.f32 %v3004, 1.442695
  %v3081 = vpow.pop %v3080
  %v3082 = vmul.f32 %v3005, 1.442695
  %v3083 = vpow.pop %v3082
  %v3084 = vmul.f32 %v3006, 1.442695
  %v3085 = vpow.pop %v3084
  %v3086 = vmul.f32 %v3007, 1.442695
  %v3087 = vpow.pop %v3086
  %v3088 = vmul.f32 %v3008, 1.442695
  %v3089 = vpow.pop %v3088
  %v3090 = vmul.f32 %v3009, 1.442695
  %v3091 = vpow.pop %v3090
  %v3092 = vmul.f32 %v3010, 1.442695
  %v3093 = vpow.pop %v3092
  %v3094 = vmul.f32 %v3011, 1.442695
  %v3095 = vpow.pop %v3094
  %v3096 = vmul.f32 %v3012, 1.442695
  %v3097 = vpow.pop %v3096
  %v3098 = vmul.f32 %v3013, 1.442695
  %v3099 = vpow.pop %v3098
  %v3100 = vmul.f32 %v3014, 1.442695
  %v3101 = vpow.pop %v3100
  %v3102 = vmul.f32 %v3015, 1.442695
  %v3103 = vpow.pop %v3102
  %v3104 = vmul.f32 %v3016, 1.442695
  %v3105 = vpow.pop %v3104
  %v3106 = vmul.f32 %v3017, 1.442695
  %v3107 = vpow.pop %v3106
  %v3108 = vmul.f32 %v3018, 1.442695
  %v3109 = vpow.pop %v3108
  %v3110 = vmul.f32 %v3019, 1.442695
  %v3111 = vpow.pop %v3110
  %v3112 = vmul.f32 %v3020, 1.442695
  %v3113 = vpow.pop %v3112
  %v3114 = vmul.f32 %v3021, 1.442695
  %v3115 = vpow.pop %v3114
  %v3116 = vmul.f32 %v3022, 1.442695
  %v3117 = vpow.pop %v3116
  %v3118 = vmul.f32 %v3023, 1.442695
  %v3119 = vpow.pop %v3118
  %v3120 = vmul.f32 %v3024, 1.442695
  %v3121 = vpow.pop %v3120
  %v3122 = vmul.f32 %v3025, 1.442695
  %v3123 = vpow.pop %v3122
  %v3124 = vmul.f32 %v3026, 1.442695
  %v3125 = vpow.pop %v3124
  %v3126 = vmul.f32 %v3027, 1.442695
  %v3127 = vpow.pop %v3126
  %v3128 = vmul.f32 %v3028, 1.442695
  %v3129 = vpow.pop %v3128
  %v3130 = vmul.f32 %v3029, 1.442695
  %v3131 = vpow.pop %v3130
  %v3132 = vmul.f32 %v3030, 1.442695
  %v3133 = vpow.pop %v3132
  %v3134 = vmul.f32 %v3031, 1.442695
  %v3135 = vpow.pop %v3134
  %v3136 = vmul.f32 %v3032, 1.442695
  %v3137 = vpow.pop %v3136
  %v3138 = vmul.f32 %v3033, 1.442695
  %v3139 = vpow.pop %v3138
  %v3140 = vmul.f32 %v3034, 1.442695
  %v3141 = vpow.pop %v3140
  %v3142 = vmul.f32 %v3035, 1.442695
  %v3143 = vpow.pop %v3142
  %v3144 = vmul.f32 %v3036, 1.442695
  %v3145 = vpow.pop %v3144
  %v3146 = vmul.f32 %v3037, 1.442695
  %v3147 = vpow.pop %v3146
  %v3148 = vmul.f32 %v3038, 1.442695
  %v3149 = vpow.pop %v3148
  %v3150 = vmul.f32 %v3039, 1.442695
  %v3151 = vpow.pop %v3150
  %v3152 = vmul.f32 %v3040, 1.442695
  %v3153 = vpow.pop %v3152
  %v3154 = vmul.f32 %v3041, 1.442695
  %v3155 = vpow.pop %v3154
  %v3156 = vmul.f32 %v3042, 1.442695
  %v3157 = vpow.pop %v3156
  %v3158 = vmul.f32 %v3043, 1.442695
  %v3159 = vpow.pop %v3158
  %v3160 = vmul.f32 %v3044, 1.442695
  %v3161 = vpow.pop %v3160
  %v3162 = vmul.f32 %v3045, 1.442695
  %v3163 = vpow.pop %v3162
  %v3164 = vmul.f32 %v3046, 1.442695
  %v3165 = vpow.pop %v3164
  %v3166 = vmul.f32 %v3047, 1.442695
  %v3167 = vpow.pop %v3166
  %v3168 = vmul.f32 %v3048, 1.442695
  %v3169 = vpow.pop %v3168
  %v3170 = vmul.f32 %v3049, 1.442695
  %v3171 = vpow.pop %v3170
  %v3172 = vmul.f32 %v3050, 1.442695
  %v3173 = vpow.pop %v3172
  %v3174 = vmul.f32 %v3051, 1.442695
  %v3175 = vpow.pop %v3174
  %v3176 = vmul.f32 %v3052, 1.442695
  %v3177 = vpow.pop %v3176
  %v3178 = vmul.f32 %v3053, 1.442695
  %v3179 = vpow.pop %v3178
  %v3180 = vmul.f32 %v3054, 1.442695
  %v3181 = vpow.pop %v3180
  %v3182 = vmul.f32 %v3055, 1.442695
  %v3183 = vpow.pop %v3182
  %v3184 = vmul.f32 %v3056, 1.442695
  %v3185 = vpow.pop %v3184
  %v3186 = vmul.f32 %v3057, 1.442695
  %v3187 = vpow.pop %v3186
  %v3188 = vmul.f32 %v3058, 1.442695
  %v3189 = vpow.pop %v3188
  %v3190 = vmul.f32 %v3059, 1.442695
  %v3191 = vpow.pop %v3190
  %v3192 = vmul.f32 %v3060, 1.442695
  %v3193 = vpow.pop %v3192
  %v3194 = vmul.f32 %v3061, 1.442695
  %v3195 = vpow.pop %v3194
  %v3196 = vmul.f32 %v3062, 1.442695
  %v3197 = vpow.pop %v3196
  %v3198 = vmul.f32 %v3063, 1.442695
  %v3199 = vpow.pop %v3198
  %v3200 = vmul.f32 %v3064, 1.442695
  %v3201 = vpow.pop %v3200
  %v3202 = vmul.f32 %v3065, 1.442695
  %v3203 = vpow.pop %v3202
  %v3204 = vmul.f32 %v3066, 1.442695
  %v3205 = vpow.pop %v3204
  %v3206 = vmul.f32 %v3067, 1.442695
  %v3207 = vpow.pop %v3206
  %v3208 = vmul.f32 %v3068, 1.442695
  %v3209 = vpow.pop %v3208
  %v3210 = vmul.f32 %v3069, 1.442695
  %v3211 = vpow.pop %v3210
  %v3212 = vmul.f32 %v3070, 1.442695
  %v3213 = vpow.pop %v3212
  %v3214 = vmul.f32 %v3071, 1.442695
  %v3215 = vpow.pop %v3214
  %v3216 = vmul.f32 %v3072, 1.442695
  %v3217 = vpow.pop %v3216
  %v3218 = vmul.f32 %v3073, 1.442695
  %v3219 = vpow.pop %v3218
  %v3220 = vmul.f32 %v3074, 1.442695
  %v3221 = vpow.pop %v3220
  %v3222 = vmul.f32 %v3075, 1.442695
  %v3223 = vpow.pop %v3222
  %v3224 = vmul.f32 %v3076, 1.442695
  %v3225 = vpow.pop %v3224
  %v3226 = vmul.f32 %v3077, 1.442695
  %v3227 = vpow.pop %v3226
  %v3228 = vmul.f32 %v3078, 1.442695
  %v3229 = vpow.pop %v3228
  %v3230 = vmul.f32 %v3079, 1.442695
  %v3231 = vpow.pop %v3230
  %v3232 = vstv %s24
  %v3233 = vmul.f32 %v3232, %v3081
  %v3234 = vmul.f32 %v3232, %v3083
  %v3235 = vmul.f32 %v3232, %v3085
  %v3236 = vmul.f32 %v3232, %v3087
  %v3237 = vmul.f32 %v3232, %v3089
  %v3238 = vmul.f32 %v3232, %v3091
  %v3239 = vmul.f32 %v3232, %v3093
  %v3240 = vmul.f32 %v3232, %v3095
  %v3241 = vmul.f32 %v3232, %v3097
  %v3242 = vmul.f32 %v3232, %v3099
  %v3243 = vmul.f32 %v3232, %v3101
  %v3244 = vmul.f32 %v3232, %v3103
  %v3245 = vmul.f32 %v3232, %v3105
  %v3246 = vmul.f32 %v3232, %v3107
  %v3247 = vmul.f32 %v3232, %v3109
  %v3248 = vmul.f32 %v3232, %v3111
  %v3249 = vmul.f32 %v3232, %v3113
  %v3250 = vmul.f32 %v3232, %v3115
  %v3251 = vmul.f32 %v3232, %v3117
  %v3252 = vmul.f32 %v3232, %v3119
  %v3253 = vmul.f32 %v3232, %v3121
  %v3254 = vmul.f32 %v3232, %v3123
  %v3255 = vmul.f32 %v3232, %v3125
  %v3256 = vmul.f32 %v3232, %v3127
  %v3257 = vmul.f32 %v3232, %v3129
  %v3258 = vmul.f32 %v3232, %v3131
  %v3259 = vmul.f32 %v3232, %v3133
  %v3260 = vmul.f32 %v3232, %v3135
  %v3261 = vmul.f32 %v3232, %v3137
  %v3262 = vmul.f32 %v3232, %v3139
  %v3263 = vmul.f32 %v3232, %v3141
  %v3264 = vmul.f32 %v3232, %v3143
  %v3265 = vmul.f32 %v3232, %v3145
  %v3266 = vmul.f32 %v3232, %v3147
  %v3267 = vmul.f32 %v3232, %v3149
  %v3268 = vmul.f32 %v3232, %v3151
  %v3269 = vmul.f32 %v3232, %v3153
  %v3270 = vmul.f32 %v3232, %v3155
  %v3271 = vmul.f32 %v3232, %v3157
  %v3272 = vmul.f32 %v3232, %v3159
  %v3273 = vmul.f32 %v3232, %v3161
  %v3274 = vmul.f32 %v3232, %v3163
  %v3275 = vmul.f32 %v3232, %v3165
  %v3276 = vmul.f32 %v3232, %v3167
  %v3277 = vmul.f32 %v3232, %v3169
  %v3278 = vmul.f32 %v3232, %v3171
  %v3279 = vmul.f32 %v3232, %v3173
  %v3280 = vmul.f32 %v3232, %v3175
  %v3281 = vmul.f32 %v3232, %v3177
  %v3282 = vmul.f32 %v3232, %v3179
  %v3283 = vmul.f32 %v3232, %v3181
  %v3284 = vmul.f32 %v3232, %v3183
  %v3285 = vmul.f32 %v3232, %v3185
  %v3286 = vmul.f32 %v3232, %v3187
  %v3287 = vmul.f32 %v3232, %v3189
  %v3288 = vmul.f32 %v3232, %v3191
  %v3289 = vmul.f32 %v3232, %v3193
  %v3290 = vmul.f32 %v3232, %v3195
  %v3291 = vmul.f32 %v3232, %v3197
  %v3292 = vmul.f32 %v3232, %v3199
  %v3293 = vmul.f32 %v3232, %v3201
  %v3294 = vmul.f32 %v3232, %v3203
  %v3295 = vmul.f32 %v3232, %v3205
  %v3296 = vmul.f32 %v3232, %v3207
  %v3297 = vmul.f32 %v3232, %v3209
  %v3298 = vmul.f32 %v3232, %v3211
  %v3299 = vmul.f32 %v3232, %v3213
  %v3300 = vmul.f32 %v3232, %v3215
  %v3301 = vmul.f32 %v3232, %v3217
  %v3302 = vmul.f32 %v3232, %v3219
  %v3303 = vmul.f32 %v3232, %v3221
  %v3304 = vmul.f32 %v3232, %v3223
  %v3305 = vmul.f32 %v3232, %v3225
  %v3306 = vmul.f32 %v3232, %v3227
  %v3307 = vmul.f32 %v3232, %v3229
  %v3308 = vmul.f32 %v3232, %v3231
  %3309 = vst [vmem:[%s5] sm:$0xff] %v3233
  %3310 = vst [vmem:[%s5 + $0x8] sm:$0xff] %v3234
  %3311 = vst [vmem:[%s5 + $0x10] sm:$0xff] %v3235
  %3312 = vst [vmem:[%s5 + $0x18] sm:$0xff] %v3236
  %3313 = vst [vmem:[%s5 + $0x20] sm:$0xff] %v3237
  %3314 = vst [vmem:[%s5 + $0x28] sm:$0xff] %v3238
  %3315 = vst [vmem:[%s5 + $0x30] sm:$0xff] %v3239
  %3316 = vst [vmem:[%s5 + $0x38] sm:$0xff] %v3240
  %3317 = vst [vmem:[%s5 + $0x40] sm:$0xff] %v3241
  %3318 = vst [vmem:[%s5 + $0x48] sm:$0xff] %v3242
  %3319 = vst [vmem:[%s5 + $0x50] sm:$0xff] %v3243
  %3320 = vst [vmem:[%s5 + $0x58] sm:$0xff] %v3244
  %3321 = vst [vmem:[%s5 + $0x60] sm:$0xff] %v3245
  %3322 = vst [vmem:[%s5 + $0x68] sm:$0xff] %v3246
  %3323 = vst [vmem:[%s5 + $0x70] sm:$0xff] %v3247
  %3324 = vst [vmem:[%s5 + $0x78] sm:$0xff] %v3248
  %3325 = vst [vmem:[%s5 + $0x80] sm:$0xff] %v3249
  %3326 = vst [vmem:[%s5 + $0x88] sm:$0xff] %v3250
  %3327 = vst [vmem:[%s5 + $0x90] sm:$0xff] %v3251
  %3328 = vst [vmem:[%s5 + $0x98] sm:$0xff] %v3252
  %3329 = vst [vmem:[%s5 + $0xa0] sm:$0xff] %v3253
  %3330 = vst [vmem:[%s5 + $0xa8] sm:$0xff] %v3254
  %3331 = vst [vmem:[%s5 + $0xb0] sm:$0xff] %v3255
  %3332 = vst [vmem:[%s5 + $0xb8] sm:$0xff] %v3256
  %3333 = vst [vmem:[%s5 + $0xc0] sm:$0xff] %v3257
  %3334 = vst [vmem:[%s5 + $0xc8] sm:$0xff] %v3258
  %3335 = vst [vmem:[%s5 + $0xd0] sm:$0xff] %v3259
  %3336 = vst [vmem:[%s5 + $0xd8] sm:$0xff] %v3260
  %3337 = vst [vmem:[%s5 + $0xe0] sm:$0xff] %v3261
  %3338 = vst [vmem:[%s5 + $0xe8] sm:$0xff] %v3262
  %3339 = vst [vmem:[%s5 + $0xf0] sm:$0xff] %v3263
  %3340 = vst [vmem:[%s5 + $0xf8] sm:$0xff] %v3264
  %3341 = vst [vmem:[%s5 + $0x100] sm:$0xff] %v3265
  %3342 = vst [vmem:[%s5 + $0x108] sm:$0xff] %v3266
  %3343 = vst [vmem:[%s5 + $0x110] sm:$0xff] %v3267
  %3344 = vst [vmem:[%s5 + $0x118] sm:$0xff] %v3268
  %3345 = vst [vmem:[%s5 + $0x120] sm:$0xff] %v3269
  %3346 = vst [vmem:[%s5 + $0x128] sm:$0xff] %v3270
  %3347 = vst [vmem:[%s5 + $0x130] sm:$0xff] %v3271
  %3348 = vst [vmem:[%s5 + $0x138] sm:$0xff] %v3272
  %3349 = vst [vmem:[%s5 + $0x140] sm:$0xff] %v3273
  %3350 = vst [vmem:[%s5 + $0x148] sm:$0xff] %v3274
  %3351 = vst [vmem:[%s5 + $0x150] sm:$0xff] %v3275
  %3352 = vst [vmem:[%s5 + $0x158] sm:$0xff] %v3276
  %3353 = vst [vmem:[%s5 + $0x160] sm:$0xff] %v3277
  %3354 = vst [vmem:[%s5 + $0x168] sm:$0xff] %v3278
  %3355 = vst [vmem:[%s5 + $0x170] sm:$0xff] %v3279
  %3356 = vst [vmem:[%s5 + $0x178] sm:$0xff] %v3280
  %3357 = vst [vmem:[%s5 + $0x180] sm:$0xff] %v3281
  %3358 = vst [vmem:[%s5 + $0x188] sm:$0xff] %v3282
  %3359 = vst [vmem:[%s5 + $0x190] sm:$0xff] %v3283
  %3360 = vst [vmem:[%s5 + $0x198] sm:$0xff] %v3284
  %3361 = vst [vmem:[%s5 + $0x1a0] sm:$0xff] %v3285
  %3362 = vst [vmem:[%s5 + $0x1a8] sm:$0xff] %v3286
  %3363 = vst [vmem:[%s5 + $0x1b0] sm:$0xff] %v3287
  %3364 = vst [vmem:[%s5 + $0x1b8] sm:$0xff] %v3288
  %3365 = vst [vmem:[%s5 + $0x1c0] sm:$0xff] %v3289
  %3366 = vst [vmem:[%s5 + $0x1c8] sm:$0xff] %v3290
  %3367 = vst [vmem:[%s5 + $0x1d0] sm:$0xff] %v3291
  %3368 = vst [vmem:[%s5 + $0x1d8] sm:$0xff] %v3292
  %3369 = vst [vmem:[%s5 + $0x1e0] sm:$0xff] %v3293
  %3370 = vst [vmem:[%s5 + $0x1e8] sm:$0xff] %v3294
  %3371 = vst [vmem:[%s5 + $0x1f0] sm:$0xff] %v3295
  %3372 = vst [vmem:[%s5 + $0x1f8] sm:$0xff] %v3296
  %3373 = vst [vmem:[%s5 + $0x200] sm:$0xff] %v3297
  %3374 = vst [vmem:[%s5 + $0x208] sm:$0xff] %v3298
  %3375 = vst [vmem:[%s5 + $0x210] sm:$0xff] %v3299
  %3376 = vst [vmem:[%s5 + $0x218] sm:$0xff] %v3300
  %3377 = vst [vmem:[%s5 + $0x220] sm:$0xff] %v3301
  %3378 = vst [vmem:[%s5 + $0x228] sm:$0xff] %v3302
  %3379 = vst [vmem:[%s5 + $0x230] sm:$0xff] %v3303
  %3380 = vst [vmem:[%s5 + $0x238] sm:$0xff] %v3304
  %3381 = vst [vmem:[%s5 + $0x240] sm:$0xff] %v3305
  %3382 = vst [vmem:[%s5 + $0x248] sm:$0xff] %v3306
  %3383 = vst [vmem:[%s5 + $0x250] sm:$0xff] %v3307
  %3384 = vst [vmem:[%s5 + $0x258] sm:$0xff] %v3308
  // Predicated region
  $region18: #{tpu_custom_call.1} parent=0 // pred_check
    _
  $region19: #{tpu_custom_call.1} parent=0 // pred_check_branch
    %3386 = sbr.rel (0) target = $region21
  $region20: #{tpu_custom_call.1} parent=0 // pred_region
    _
  $region21: #{tpu_custom_call.1} parent=0 // pred_fallthru
    _
  // Predicated region
  $region22: #{tpu_custom_call.1} parent=0 // pred_check
    _
  $region23: #{tpu_custom_call.1} parent=0 // pred_check_branch
    %3388 = sbr.rel (0) target = $region25
  $region24: #{tpu_custom_call.1} parent=0 // pred_region
    _
  $region25: #{tpu_custom_call.1} parent=0 // pred_fallthru
    _

</llo_original>
